<compile_context>
chip_gen: v6e
topology: v6e:2x2x1
jax: 0.10.0
libtpu: 0.0.40
codegen_flags: <defaults>
</compile_context>

<pallas_src>
import functools

import jax
import jax.numpy as jnp
from jax.experimental import pallas as pl
from jax.experimental.pallas import tpu as pltpu


def _vmem_limit_bytes():
    # ~3/4 of physical VMEM: ~96 MiB on v5e/v6e (128 MiB), ~48 MiB on v7x (64 MiB).
    try:
        cap = int(pltpu.get_tpu_info().vmem_capacity_bytes)
        limit = (cap * 3) // 4
    except Exception:
        limit = 64 * 1024 * 1024
    return max(32 * 1024 * 1024, min(limit, 100 * 1024 * 1024))


def _conv_bn_act_kernel(x_ref, w_ref, bias_ref, o_ref, *scratch,
                        ksize, pad, h_out, w_out):
    # x_ref:    ksize>1: (1, C_eff, H_in, W_in)  one batch element
    #                    (stride>1: phase-decomposed + pre-padded; stride==1: raw NCHW)
    #           ksize==1: (1, C_eff, H*W)        already NCHW-flat (no in-kernel relayout)
    # w_ref:    (Cout, ksize*ksize*C_eff)        lane-dense, BN scale folded in
    # bias_ref: (Cout, 1)                        folded BN bias (f32)
    # o_ref:    (1, Cout, Ho*Wo)                 lane-dense NCHW-flat output block
    # scratch:  [xp_ref  (C_eff, Hp, Wp)]        iff pad   > 0  (padded image)
    #           [col_ref (K, Ho*Wo)]             iff ksize > 1  (one-shot im2col matrix)
    c_eff = x_ref.shape[1]
    c_out = o_ref.shape[1]
    hw = h_out * w_out

    idx = 0
    xp_ref = None
    if pad > 0:
        xp_ref = scratch[idx]
        idx += 1
    col_ref = None
    if ksize > 1:
        col_ref = scratch[idx]
        idx += 1

    if ksize == 1:
        # 1x1 conv fast path: x is already (Cin, H*W) lane-dense.
        rhs = x_ref[0]
    else:
        h_in = x_ref.shape[2]
        w_in = x_ref.shape[3]

        if pad > 0:
            # Zero only the pad border (perimeter) and rewrite the interior each step;
            # no stale data can leak across grid steps.
            hp = xp_ref.shape[1]
            wp = xp_ref.shape[2]
            zdt = xp_ref.dtype
            xp_ref[:, :pad, :] = jnp.zeros((c_eff, pad, wp), zdt)
            xp_ref[:, pad + h_in:, :] = jnp.zeros((c_eff, hp - pad - h_in, wp), zdt)
            xp_ref[:, pad:pad + h_in, :pad] = jnp.zeros((c_eff, h_in, pad), zdt)
            xp_ref[:, pad:pad + h_in, pad + w_in:] = (
                jnp.zeros((c_eff, h_in, wp - pad - w_in), zdt))
            xp_ref[:, pad:pad + h_in, pad:pad + w_in] = x_ref[0]

        def window(kh, kw):
            # (C_eff, Ho, Wo) tap window read as a ref slice: the full (padded) image
            # is never loaded as a single value.
            if pad > 0:
                return xp_ref[:, kh:kh + h_out, kw:kw + w_out]
            return x_ref[0, :, kh:kh + h_out, kw:kw + w_out]

        # One-shot im2col into a lane-dense (K, Ho*Wo) VMEM scratch; each tap's
        # sublane->lane relayout happens exactly once.
        for kh in range(ksize):
            for kw in range(ksize):
                t = kh * ksize + kw
                col_ref[t * c_eff:(t + 1) * c_eff, :] = (
                    window(kh, kw).reshape(c_eff, hw))
        rhs = col_ref[...]

    # Single MXU matmul (Cout, K) @ (K, Ho*Wo) with f32 accumulation, then the
    # folded-BN bias + ReLU epilogue on the lane-dense tile.
    acc = jnp.dot(w_ref[...], rhs, preferred_element_type=jnp.float32)
    y = jnp.maximum(acc + bias_ref[...], 0.0)
    o_ref[0] = y.astype(o_ref.dtype)


def conv_bn_act(x_nchw, conv_weight, bn_gamma, bn_beta, bn_mean, bn_var,
                *, stride=1, eps=1e-5):
    """ConvBnAct forward.  x_nchw: (N, Cin, H, W) -> (N, Cout, Ho, Wo)."""
    n, c_in, h, w = x_nchw.shape
    c_out, _, k, _ = conv_weight.shape
    pad = k // 2
    h_out = (h + 2 * pad - k) // stride + 1
    w_out = (w + 2 * pad - k) // stride + 1
    hw = h_out * w_out

    # Fold eval-mode BN into the conv (scale is per-Cout, so it distributes exactly).
    # Note: for bf16 inputs the folded weights are rounded to bf16 (MXU operands stay
    # in the input dtype, f32 accumulation) -> widen tolerances for bf16.
    scale = bn_gamma / jnp.sqrt(bn_var + eps)                    # (Cout,)
    bias = bn_beta - bn_mean * scale                             # (Cout,)
    w_folded = (conv_weight * scale[:, None, None, None]).astype(jnp.float32)

    s = stride
    kq = -(-k // s)                      # ceil(k/s): effective tap extent after phase decomp
    c_eff = c_in * s * s

    # Lane-dense flattened weights (Cout, kq*kq*c_eff); row order (qh, qw, rh, rw, cin)
    # matches the in-kernel im2col row order.  For stride==1 this reduces to
    # (Cout, k*k*Cin) with rows ordered (kh, kw, cin).
    w_pad = jnp.pad(w_folded, ((0, 0), (0, 0), (0, s * kq - k), (0, s * kq - k)))
    w6 = w_pad.reshape(c_out, c_in, kq, s, kq, s)                # (co, ci, qh, rh, qw, rw)
    w_flat = jnp.transpose(w6, (0, 2, 4, 3, 5, 1)).reshape(c_out, kq * kq * c_eff)
    w_flat = w_flat.astype(x_nchw.dtype)     # bf16 inputs -> bf16 MXU operands (v5e-friendly)
    bias2d = bias.reshape(c_out, 1).astype(jnp.float32)

    if s == 1:
        x_in = x_nchw
        k_eff, pad_eff = k, pad
        h_in, w_in = h, w
    else:
        # Phase (space-to-depth) decomposition: a stride-s conv over the padded image
        # equals a stride-1 conv with kq x kq taps over s*s*Cin phase channels.
        # Padding is baked in here (wrapper-side), so the kernel runs the pad==0 path.
        a_dim = h_out + kq - 1
        b_dim = w_out + kq - 1
        hp2, wp2 = s * a_dim, s * b_dim
        x_p = jnp.pad(x_nchw, ((0, 0), (0, 0),
                               (pad, max(0, hp2 - pad - h)),
                               (pad, max(0, wp2 - pad - w))))[:, :, :hp2, :wp2]
        x_sd = x_p.reshape(n, c_in, a_dim, s, b_dim, s)
        x_in = jnp.transpose(x_sd, (0, 3, 5, 1, 2, 4)).reshape(n, c_eff, a_dim, b_dim)
        k_eff, pad_eff = kq, 0
        h_in, w_in = a_dim, b_dim

    kdim = k_eff * k_eff * c_eff
    hp, wp = h_in + 2 * pad_eff, w_in + 2 * pad_eff

    if k_eff == 1:
        # 1x1 fast path: flatten HW in HBM (free, row-major) so the kernel never relayouts.
        x_in = x_in.reshape(n, c_eff, h_in * w_in)
        x_spec = pl.BlockSpec((1, c_eff, h_in * w_in), lambda b: (b, 0, 0))
    else:
        x_spec = pl.BlockSpec((1, c_eff, h_in, w_in), lambda b: (b, 0, 0, 0))

    scratch = []
    if pad_eff > 0:
        scratch.append(pltpu.VMEM((c_eff, hp, wp), x_in.dtype))
    if k_eff > 1:
        scratch.append(pltpu.VMEM((kdim, hw), x_in.dtype))

    kernel = functools.partial(_conv_bn_act_kernel, ksize=k_eff, pad=pad_eff,
                               h_out=h_out, w_out=w_out)
    out_flat = pl.pallas_call(
        kernel,
        out_shape=jax.ShapeDtypeStruct((n, c_out, hw), x_nchw.dtype),
        grid_spec=pltpu.PrefetchScalarGridSpec(
            num_scalar_prefetch=0,
            grid=(n,),
            in_specs=[
                x_spec,
                pl.BlockSpec((c_out, kdim), lambda b: (0, 0)),
                pl.BlockSpec((c_out, 1), lambda b: (0, 0)),
            ],
            out_specs=pl.BlockSpec((1, c_out, hw), lambda b: (b, 0, 0)),
            scratch_shapes=scratch,
        ),
        compiler_params=pltpu.CompilerParams(
            dimension_semantics=("parallel",),
            vmem_limit_bytes=_vmem_limit_bytes(),
        ),
    )(x_in, w_flat, bias2d)

    # Output block is already NCHW-flat -> this reshape is free (no transpose pass).
    return out_flat.reshape(n, c_out, h_out, w_out)


def _reference(x, w, gamma, beta, mean, var, *, stride, eps=1e-5):
    """Pure-JAX reference: conv -> eval-mode BN -> ReLU."""
    k = w.shape[2]
    pad = k // 2
    y = jax.lax.conv_general_dilated(
        x, w, window_strides=(stride, stride),
        padding=[(pad, pad), (pad, pad)],
        dimension_numbers=("NCHW", "OIHW", "NCHW"))
    scale = gamma / jnp.sqrt(var + eps)
    y = y * scale[None, :, None, None] + (beta - mean * scale)[None, :, None, None]
    return jnp.maximum(y, 0.0)


if __name__ == "__main__":
    def run_case(n, c_in, c_out, hwdim, k, stride, key):
        ks = jax.random.split(key, 6)
        x = jax.random.normal(ks[0], (n, c_in, hwdim, hwdim), jnp.float32)
        w = jax.random.normal(ks[1], (c_out, c_in, k, k), jnp.float32) * 0.2
        gamma = 1.0 + 0.1 * jax.random.normal(ks[2], (c_out,), jnp.float32)
        beta = 0.1 * jax.random.normal(ks[3], (c_out,), jnp.float32)
        mean = 0.05 * jax.random.normal(ks[4], (c_out,), jnp.float32)
        var = jnp.abs(1.0 + 0.1 * jax.random.normal(ks[5], (c_out,), jnp.float32))

        out = conv_bn_act(x, w, gamma, beta, mean, var, stride=stride)
        out = jax.block_until_ready(out)

        ref = _reference(x, w, gamma, beta, mean, var, stride=stride)
        pad = k // 2
        ho = (hwdim + 2 * pad - k) // stride + 1
        assert out.shape == (n, c_out, ho, ho), out.shape
        err = float(jnp.max(jnp.abs(out - ref)))
        assert jnp.allclose(out, ref, atol=2e-4, rtol=2e-4), err

    key = jax.random.PRNGKey(0)
    k0, k1, k2 = jax.random.split(key, 3)
    # ConvBnAct(in_chs=8, out_chs=16, kernel_size=3, stride=1) on (2, 8, 16, 16)
    run_case(2, 8, 16, 16, 3, 1, k0)
    # ConvBnAct(in_chs=8, out_chs=32, kernel_size=1, stride=1) (1x1 fast path)
    run_case(2, 8, 32, 16, 1, 1, k1)
    # ConvBnAct(in_chs=8, out_chs=16, kernel_size=3, stride=2) (phase-decomposition path)
    run_case(2, 8, 16, 16, 3, 2, k2)
    print("KERNEL_OK")
</pallas_src>

<mosaic_0001>
module attributes {stable_mosaic.version = 11 : i64} {
  func.func @_conv_bn_act_kernel(%arg0: i32, %arg1: memref<1x8x16x16xf32, #tpu.memory_space<vmem>>, %arg2: memref<16x72xf32, #tpu.memory_space<vmem>>, %arg3: memref<16x1xf32, #tpu.memory_space<vmem>>, %arg4: memref<1x16x256xf32, #tpu.memory_space<vmem>>, %arg5: memref<8x18x18xf32, #tpu.memory_space<vmem>>, %arg6: memref<72x256xf32, #tpu.memory_space<vmem>>) attributes {dimension_semantics = [#tpu.dimension_semantics<parallel>], iteration_bounds = array<i64: 2>, scalar_prefetch = 0 : i64, scratch_operands = 2 : i64, tpu.core_type = #tpu.core_type<tc>, window_params = [{transform_indices = @transform_0, window_bounds = array<i64: 1, 8, 16, 16>}, {pipeline_mode = #tpu.pipeline_mode<synchronous>, transform_indices = @transform_1, window_bounds = array<i64: 16, 72>}, {pipeline_mode = #tpu.pipeline_mode<synchronous>, transform_indices = @transform_2, window_bounds = array<i64: 16, 1>}, {transform_indices = @transform_3, window_bounds = array<i64: 1, 16, 256>}]} {
    %cst = arith.constant 0.000000e+00 : f32
    %0 = vector.broadcast %cst : f32 to vector<8x1x18xf32>
    %c0 = arith.constant 0 : index
    %c0_0 = arith.constant 0 : index
    %c0_1 = arith.constant 0 : index
    %1 = vector.load %arg5[%c0, %c0_0, %c0_1] : memref<8x18x18xf32, #tpu.memory_space<vmem>>, vector<8x1x18xf32>
    tpu.vector_store %arg5[%c0, %c0_0, %c0_1], %0 {strides = array<i32>} : memref<8x18x18xf32, #tpu.memory_space<vmem>>, vector<8x1x18xf32>,
    %cst_2 = arith.constant 0.000000e+00 : f32
    %2 = vector.broadcast %cst_2 : f32 to vector<8x1x18xf32>
    %c0_3 = arith.constant 0 : index
    %c17 = arith.constant 17 : index
    %c0_4 = arith.constant 0 : index
    %3 = vector.load %arg5[%c0_3, %c17, %c0_4] : memref<8x18x18xf32, #tpu.memory_space<vmem>>, vector<8x1x18xf32>
    tpu.vector_store %arg5[%c0_3, %c17, %c0_4], %2 {strides = array<i32>} : memref<8x18x18xf32, #tpu.memory_space<vmem>>, vector<8x1x18xf32>,
    %cst_5 = arith.constant 0.000000e+00 : f32
    %4 = vector.broadcast %cst_5 : f32 to vector<8x16x1xf32>
    %c0_6 = arith.constant 0 : index
    %c1 = arith.constant 1 : index
    %c0_7 = arith.constant 0 : index
    %5 = vector.load %arg5[%c0_6, %c1, %c0_7] : memref<8x18x18xf32, #tpu.memory_space<vmem>>, vector<8x16x1xf32>
    tpu.vector_store %arg5[%c0_6, %c1, %c0_7], %4 {strides = array<i32>} : memref<8x18x18xf32, #tpu.memory_space<vmem>>, vector<8x16x1xf32>,
    %cst_8 = arith.constant 0.000000e+00 : f32
    %6 = vector.broadcast %cst_8 : f32 to vector<8x16x1xf32>
    %c0_9 = arith.constant 0 : index
    %c1_10 = arith.constant 1 : index
    %c17_11 = arith.constant 17 : index
    %7 = vector.load %arg5[%c0_9, %c1_10, %c17_11] : memref<8x18x18xf32, #tpu.memory_space<vmem>>, vector<8x16x1xf32>
    tpu.vector_store %arg5[%c0_9, %c1_10, %c17_11], %6 {strides = array<i32>} : memref<8x18x18xf32, #tpu.memory_space<vmem>>, vector<8x16x1xf32>,
    %c0_12 = arith.constant 0 : index
    %c0_13 = arith.constant 0 : index
    %c0_14 = arith.constant 0 : index
    %c0_15 = arith.constant 0 : index
    %8 = vector.load %arg1[%c0_12, %c0_13, %c0_14, %c0_15] : memref<1x8x16x16xf32, #tpu.memory_space<vmem>>, vector<1x8x16x16xf32>
    %9 = vector.shape_cast %8 : vector<1x8x16x16xf32> to vector<8x16x16xf32>
    %c0_16 = arith.constant 0 : index
    %c1_17 = arith.constant 1 : index
    %c1_18 = arith.constant 1 : index
    %10 = vector.load %arg5[%c0_16, %c1_17, %c1_18] : memref<8x18x18xf32, #tpu.memory_space<vmem>>, vector<8x16x16xf32>
    tpu.vector_store %arg5[%c0_16, %c1_17, %c1_18], %9 {strides = array<i32>} : memref<8x18x18xf32, #tpu.memory_space<vmem>>, vector<8x16x16xf32>,
    %c0_19 = arith.constant 0 : index
    %c0_20 = arith.constant 0 : index
    %c0_21 = arith.constant 0 : index
    %11 = vector.load %arg5[%c0_19, %c0_20, %c0_21] : memref<8x18x18xf32, #tpu.memory_space<vmem>>, vector<8x16x16xf32>
    %12 = vector.shape_cast %11 : vector<8x16x16xf32> to vector<8x256xf32>
    %c0_22 = arith.constant 0 : index
    %c0_23 = arith.constant 0 : index
    %13 = vector.load %arg6[%c0_22, %c0_23] : memref<72x256xf32, #tpu.memory_space<vmem>>, vector<8x256xf32>
    tpu.vector_store %arg6[%c0_22, %c0_23], %12 {strides = array<i32>} : memref<72x256xf32, #tpu.memory_space<vmem>>, vector<8x256xf32>,
    %c0_24 = arith.constant 0 : index
    %c0_25 = arith.constant 0 : index
    %c1_26 = arith.constant 1 : index
    %14 = vector.load %arg5[%c0_24, %c0_25, %c1_26] : memref<8x18x18xf32, #tpu.memory_space<vmem>>, vector<8x16x16xf32>
    %15 = vector.shape_cast %14 : vector<8x16x16xf32> to vector<8x256xf32>
    %c8 = arith.constant 8 : index
    %c0_27 = arith.constant 0 : index
    %16 = vector.load %arg6[%c8, %c0_27] : memref<72x256xf32, #tpu.memory_space<vmem>>, vector<8x256xf32>
    tpu.vector_store %arg6[%c8, %c0_27], %15 {strides = array<i32>} : memref<72x256xf32, #tpu.memory_space<vmem>>, vector<8x256xf32>,
    %c0_28 = arith.constant 0 : index
    %c0_29 = arith.constant 0 : index
    %c2 = arith.constant 2 : index
    %17 = vector.load %arg5[%c0_28, %c0_29, %c2] : memref<8x18x18xf32, #tpu.memory_space<vmem>>, vector<8x16x16xf32>
    %18 = vector.shape_cast %17 : vector<8x16x16xf32> to vector<8x256xf32>
    %c16 = arith.constant 16 : index
    %c0_30 = arith.constant 0 : index
    %19 = vector.load %arg6[%c16, %c0_30] : memref<72x256xf32, #tpu.memory_space<vmem>>, vector<8x256xf32>
    tpu.vector_store %arg6[%c16, %c0_30], %18 {strides = array<i32>} : memref<72x256xf32, #tpu.memory_space<vmem>>, vector<8x256xf32>,
    %c0_31 = arith.constant 0 : index
    %c1_32 = arith.constant 1 : index
    %c0_33 = arith.constant 0 : index
    %20 = vector.load %arg5[%c0_31, %c1_32, %c0_33] : memref<8x18x18xf32, #tpu.memory_space<vmem>>, vector<8x16x16xf32>
    %21 = vector.shape_cast %20 : vector<8x16x16xf32> to vector<8x256xf32>
    %c24 = arith.constant 24 : index
    %c0_34 = arith.constant 0 : index
    %22 = vector.load %arg6[%c24, %c0_34] : memref<72x256xf32, #tpu.memory_space<vmem>>, vector<8x256xf32>
    tpu.vector_store %arg6[%c24, %c0_34], %21 {strides = array<i32>} : memref<72x256xf32, #tpu.memory_space<vmem>>, vector<8x256xf32>,
    %c0_35 = arith.constant 0 : index
    %c1_36 = arith.constant 1 : index
    %c1_37 = arith.constant 1 : index
    %23 = vector.load %arg5[%c0_35, %c1_36, %c1_37] : memref<8x18x18xf32, #tpu.memory_space<vmem>>, vector<8x16x16xf32>
    %24 = vector.shape_cast %23 : vector<8x16x16xf32> to vector<8x256xf32>
    %c32 = arith.constant 32 : index
    %c0_38 = arith.constant 0 : index
    %25 = vector.load %arg6[%c32, %c0_38] : memref<72x256xf32, #tpu.memory_space<vmem>>, vector<8x256xf32>
    tpu.vector_store %arg6[%c32, %c0_38], %24 {strides = array<i32>} : memref<72x256xf32, #tpu.memory_space<vmem>>, vector<8x256xf32>,
    %c0_39 = arith.constant 0 : index
    %c1_40 = arith.constant 1 : index
    %c2_41 = arith.constant 2 : index
    %26 = vector.load %arg5[%c0_39, %c1_40, %c2_41] : memref<8x18x18xf32, #tpu.memory_space<vmem>>, vector<8x16x16xf32>
    %27 = vector.shape_cast %26 : vector<8x16x16xf32> to vector<8x256xf32>
    %c40 = arith.constant 40 : index
    %c0_42 = arith.constant 0 : index
    %28 = vector.load %arg6[%c40, %c0_42] : memref<72x256xf32, #tpu.memory_space<vmem>>, vector<8x256xf32>
    tpu.vector_store %arg6[%c40, %c0_42], %27 {strides = array<i32>} : memref<72x256xf32, #tpu.memory_space<vmem>>, vector<8x256xf32>,
    %c0_43 = arith.constant 0 : index
    %c2_44 = arith.constant 2 : index
    %c0_45 = arith.constant 0 : index
    %29 = vector.load %arg5[%c0_43, %c2_44, %c0_45] : memref<8x18x18xf32, #tpu.memory_space<vmem>>, vector<8x16x16xf32>
    %30 = vector.shape_cast %29 : vector<8x16x16xf32> to vector<8x256xf32>
    %c48 = arith.constant 48 : index
    %c0_46 = arith.constant 0 : index
    %31 = vector.load %arg6[%c48, %c0_46] : memref<72x256xf32, #tpu.memory_space<vmem>>, vector<8x256xf32>
    tpu.vector_store %arg6[%c48, %c0_46], %30 {strides = array<i32>} : memref<72x256xf32, #tpu.memory_space<vmem>>, vector<8x256xf32>,
    %c0_47 = arith.constant 0 : index
    %c2_48 = arith.constant 2 : index
    %c1_49 = arith.constant 1 : index
    %32 = vector.load %arg5[%c0_47, %c2_48, %c1_49] : memref<8x18x18xf32, #tpu.memory_space<vmem>>, vector<8x16x16xf32>
    %33 = vector.shape_cast %32 : vector<8x16x16xf32> to vector<8x256xf32>
    %c56 = arith.constant 56 : index
    %c0_50 = arith.constant 0 : index
    %34 = vector.load %arg6[%c56, %c0_50] : memref<72x256xf32, #tpu.memory_space<vmem>>, vector<8x256xf32>
    tpu.vector_store %arg6[%c56, %c0_50], %33 {strides = array<i32>} : memref<72x256xf32, #tpu.memory_space<vmem>>, vector<8x256xf32>,
    %c0_51 = arith.constant 0 : index
    %c2_52 = arith.constant 2 : index
    %c2_53 = arith.constant 2 : index
    %35 = vector.load %arg5[%c0_51, %c2_52, %c2_53] : memref<8x18x18xf32, #tpu.memory_space<vmem>>, vector<8x16x16xf32>
    %36 = vector.shape_cast %35 : vector<8x16x16xf32> to vector<8x256xf32>
    %c64 = arith.constant 64 : index
    %c0_54 = arith.constant 0 : index
    %37 = vector.load %arg6[%c64, %c0_54] : memref<72x256xf32, #tpu.memory_space<vmem>>, vector<8x256xf32>
    tpu.vector_store %arg6[%c64, %c0_54], %36 {strides = array<i32>} : memref<72x256xf32, #tpu.memory_space<vmem>>, vector<8x256xf32>,
    %c0_55 = arith.constant 0 : index
    %c0_56 = arith.constant 0 : index
    %38 = vector.load %arg6[%c0_55, %c0_56] : memref<72x256xf32, #tpu.memory_space<vmem>>, vector<72x256xf32>
    %c0_57 = arith.constant 0 : index
    %c0_58 = arith.constant 0 : index
    %39 = vector.load %arg2[%c0_57, %c0_58] : memref<16x72xf32, #tpu.memory_space<vmem>>, vector<16x72xf32>
    %cst_59 = arith.constant dense<0.000000e+00> : vector<16x256xf32>
    %40 = tpu.matmul %39, %38, %cst_59 {dimension_numbers = #tpu.dot_dimension_numbers<[1], [0], [0], [1], [0, 0, 1, 1], [], []>} : vector<16x72xf32>, vector<72x256xf32>, vector<16x256xf32> -> vector<16x256xf32>
    %c0_60 = arith.constant 0 : index
    %c0_61 = arith.constant 0 : index
    %41 = vector.load %arg3[%c0_60, %c0_61] : memref<16x1xf32, #tpu.memory_space<vmem>>, vector<16x1xf32>
    %42 = vector.broadcast %41 : vector<16x1xf32> to vector<16x256xf32>
    %43 = arith.addf %40, %42 : vector<16x256xf32>
    %cst_62 = arith.constant 0.000000e+00 : f32
    %44 = vector.broadcast %cst_62 : f32 to vector<16x256xf32>
    %45 = arith.maximumf %43, %44 : vector<16x256xf32>
    %c0_63 = arith.constant 0 : index
    %c0_64 = arith.constant 0 : index
    %c0_65 = arith.constant 0 : index
    %46 = vector.load %arg4[%c0_63, %c0_64, %c0_65] : memref<1x16x256xf32, #tpu.memory_space<vmem>>, vector<1x16x256xf32>
    %47 = vector.shape_cast %46 : vector<1x16x256xf32> to vector<16x256xf32>
    %48 = vector.shape_cast %45 : vector<16x256xf32> to vector<1x16x256xf32>
    tpu.vector_store %arg4[%c0_63, %c0_64, %c0_65], %48 {strides = array<i32>} : memref<1x16x256xf32, #tpu.memory_space<vmem>>, vector<1x16x256xf32>,
    return
  }
  func.func @transform_0(%arg0: i32) -> (i32, i32, i32, i32) {
    %c0_i32 = arith.constant 0 : i32
    %c0_i32_0 = arith.constant 0 : i32
    %c0_i32_1 = arith.constant 0 : i32
    %c0_i32_2 = arith.constant 0 : i32
    return %arg0, %c0_i32, %c0_i32_0, %c0_i32_1 : i32, i32, i32, i32
  }
  func.func @transform_1(%arg0: i32) -> (i32, i32) {
    %c0_i32 = arith.constant 0 : i32
    %c0_i32_0 = arith.constant 0 : i32
    %c0_i32_1 = arith.constant 0 : i32
    return %c0_i32, %c0_i32_0 : i32, i32
  }
  func.func @transform_2(%arg0: i32) -> (i32, i32) {
    %c0_i32 = arith.constant 0 : i32
    %c0_i32_0 = arith.constant 0 : i32
    %c0_i32_1 = arith.constant 0 : i32
    return %c0_i32, %c0_i32_0 : i32, i32
  }
  func.func @transform_3(%arg0: i32) -> (i32, i32, i32) {
    %c0_i32 = arith.constant 0 : i32
    %c0_i32_0 = arith.constant 0 : i32
    %c0_i32_1 = arith.constant 0 : i32
    return %arg0, %c0_i32, %c0_i32_0 : i32, i32, i32
  }
}

</mosaic_0001>

<llo_original>
// kernel: tpu_custom_call.1
$region0: #{tpu_custom_call.1}
  #allocation0 [shape = 'u32[]', space=smem, size = 0x4, offset = 0x4, fixed_abs, tag = 'smem constant byte address 0x4 - core index']
  #allocation1 [shape = 'u32[144,128]{1,0:T(1,128)}', space=vmem, size = 0x12000, scoped, tag = 'internal scratch']
  #allocation2 [shape = 'f32[8,18,18]{2,1,0:T(8,128)}', space=vmem, size = 0x18000, scoped, tag = 'scratch operand']
  #allocation3 [shape = 'f32[72,256]{1,0:T(8,128)}', space=vmem, size = 0x12000, scoped, tag = 'scratch operand']
  %s0 = inlined_call_operand.hbm [shape: f32[2,8,16,16], index: 0, kind: input, shape index: {}]
  %s1 = inlined_call_operand.vmem [shape: f32[16,72], index: 1, kind: input, shape index: {}]
  %s2 = inlined_call_operand.vmem [shape: f32[16,1], index: 2, kind: input, shape index: {}]
  %s3 = inlined_call_operand.hbm [shape: f32[2,16,256], index: 3, kind: output, shape index: {}]
  %s4 = sld [smem:[#allocation0]]
  $region49: #{tpu_custom_call.1} parent=0
    _
  %s6 = ssub.s32 1, %s4
  %s7 = scalar_select 0, %s6, %s4
  $region1: #{tpu_custom_call.1} parent=0
    #allocation4 [shape = 'u8[131072]{0}', space=vmem, size = 0x20000, scoped, tag = 'input window, operand 0']
    #allocation5 [shape = 's32[2]{0}', space=sflag, size = 0x8, scoped, tag = 'scoped memory for tpu_custom_call.1']
    #allocation6 [shape = 's32[2]{0}', space=sflag, size = 0x8, scoped, tag = 'scoped memory for tpu_custom_call.1']
    #allocation7 [shape = 'u8[32768]{0}', space=vmem, size = 0x8000, scoped, tag = 'output window, operand 0']
    %8 = vsyncpa [#allocation5], 0
    %s9 = scalar_lea.sflag [#allocation5], 1
    %10 = vsyncpa %s9, 0
    %11 = vsyncpa [#allocation6], 0
    %s12 = scalar_lea.sflag [#allocation6], 1
    %13 = vsyncpa %s12, 0
    loop: start=0, step=1, limit=4
    $region2: #{tpu_custom_call.1} parent=1 // loop_pre_header
      _
    $region3: #{tpu_custom_call.1} parent=1 // loop_header
      %s15 = sphi 0, %s19
      %p16 = scmp.ge.s32.totalorder %s15, 4
      %s25 = sphi 0, %s27
      %s28 = sphi 0, %s25
      %s29 = sphi 0, %s28
      %s45 = sphi 0, %s29
      %s49 = sphi 0, %s49
      %s51 = sphi 0, %s49
      %s52 = sphi 0, %s51
      %s66 = sphi 0, %s52
      %s70 = sphi 0, %s70
      %s72 = sphi 0, %s70
      %s73 = sphi 0, %s72
      %s87 = sphi 0, %s73
      %s93 = sphi 0, %s95
      %s96 = sphi 0, %s93
      %s97 = sphi 0, %s96
      %s113 = sphi 0, %s97
    $region4: #{tpu_custom_call.1} parent=1 // loop_header_branch
      %18 = sbr.rel (%p16) target = $region8
    $region5: #{tpu_custom_call.1} parent=1 // loop_body
      %s20 = ssub.s32 %s15, 1
      %s21 = ssub.s32 %s15, 2
      %s22 = sadd.s32 %s15, 1
      %s23 = ssub.s32 %s15, %s22
      %p24 = scmp.eq.s32.totalorder %s23, 0
      %s26 = sadd.s32 %s25, 1
      %s27 = scalar_select %p24, %s25, %s26
      %p30 = pneg %p24
      %p31 = scmp.eq.s32.totalorder %s15, 1
      %p32 = por %p30, %p31
      %p33 = scmp.ne.s32.totalorder %s25, %s28
      %p34 = scmp.eq.s32.totalorder %s15, 0
      %p35 = por %p33, %p34
      %p36 = scmp.ne.s32.totalorder %s25, %s28
      %p37 = scmp.eq.s32.totalorder %s20, 1
      %p38 = por %p36, %p37
      %p39 = scmp.ne.s32.totalorder %s28, %s29
      %p40 = scmp.eq.s32.totalorder %s20, 0
      %p41 = por %p39, %p40
      %p42 = scmp.ne.s32.totalorder %s28, %s29
      %p43 = scmp.eq.s32.totalorder %s21, 1
      %p44 = por %p42, %p43
      %p46 = scmp.ne.s32.totalorder %s29, %s45
      %p47 = scmp.eq.s32.totalorder %s21, 0
      %p48 = por %p46, %p47
      %s50 = sadd.s32 %s49, 1
      %p53 = scmp.eq.s32.totalorder %s15, 1
      %p54 = scmp.ne.s32.totalorder %s49, %s51
      %p55 = scmp.eq.s32.totalorder %s15, 0
      %p56 = por %p54, %p55
      %p57 = scmp.ne.s32.totalorder %s49, %s51
      %p58 = scmp.eq.s32.totalorder %s20, 1
      %p59 = por %p57, %p58
      %p60 = scmp.ne.s32.totalorder %s51, %s52
      %p61 = scmp.eq.s32.totalorder %s20, 0
      %p62 = por %p60, %p61
      %p63 = scmp.ne.s32.totalorder %s51, %s52
      %p64 = scmp.eq.s32.totalorder %s21, 1
      %p65 = por %p63, %p64
      %p67 = scmp.ne.s32.totalorder %s52, %s66
      %p68 = scmp.eq.s32.totalorder %s21, 0
      %p69 = por %p67, %p68
      %s71 = sadd.s32 %s70, 1
      %p74 = scmp.eq.s32.totalorder %s15, 1
      %p75 = scmp.ne.s32.totalorder %s70, %s72
      %p76 = scmp.eq.s32.totalorder %s15, 0
      %p77 = por %p75, %p76
      %p78 = scmp.ne.s32.totalorder %s70, %s72
      %p79 = scmp.eq.s32.totalorder %s20, 1
      %p80 = por %p78, %p79
      %p81 = scmp.ne.s32.totalorder %s72, %s73
      %p82 = scmp.eq.s32.totalorder %s20, 0
      %p83 = por %p81, %p82
      %p84 = scmp.ne.s32.totalorder %s72, %s73
      %p85 = scmp.eq.s32.totalorder %s21, 1
      %p86 = por %p84, %p85
      %p88 = scmp.ne.s32.totalorder %s73, %s87
      %p89 = scmp.eq.s32.totalorder %s21, 0
      %p90 = por %p88, %p89
      %s91 = ssub.s32 %s15, %s22
      %p92 = scmp.eq.s32.totalorder %s91, 0
      %s94 = sadd.s32 %s93, 1
      %s95 = scalar_select %p92, %s93, %s94
      %p98 = pneg %p92
      %p99 = scmp.eq.s32.totalorder %s15, 1
      %p100 = por %p98, %p99
      %p101 = scmp.ne.s32.totalorder %s93, %s96
      %p102 = scmp.eq.s32.totalorder %s15, 0
      %p103 = por %p101, %p102
      %p104 = scmp.ne.s32.totalorder %s93, %s96
      %p105 = scmp.eq.s32.totalorder %s20, 1
      %p106 = por %p104, %p105
      %p107 = scmp.ne.s32.totalorder %s96, %s97
      %p108 = scmp.eq.s32.totalorder %s20, 0
      %p109 = por %p107, %p108
      %p110 = scmp.ne.s32.totalorder %s96, %s97
      %p111 = scmp.eq.s32.totalorder %s21, 1
      %p112 = por %p110, %p111
      %p114 = scmp.ne.s32.totalorder %s97, %s113
      %p115 = scmp.eq.s32.totalorder %s21, 0
      %p116 = por %p114, %p115
      %p117 = scmp.le.s32.totalorder 1, %s15
      %p118 = scmp.lt.s32.totalorder %s15, 3
      %p119 = pnand %p117, %p118
      %p120 = pneg %p119
      // Predicated region
      $region9: #{tpu_custom_call.1} parent=5 // pred_check
        _
      $region10: #{tpu_custom_call.1} parent=5 // pred_check_branch
        %122 = sbr.rel (%p119) target = $region12
      $region11: #{tpu_custom_call.1} parent=5 // pred_region
        %s123 = ssub.s32 %s15, 1
        // Predicated region
        $region13: #{tpu_custom_call.1} parent=11 // pred_check
          %p124 = pneg %p62
        $region14: #{tpu_custom_call.1} parent=11 // pred_check_branch
          %126 = sbr.rel (%p124) target = $region16
        $region15: #{tpu_custom_call.1} parent=11 // pred_region
          _
        $region16: #{tpu_custom_call.1} parent=11 // pred_fallthru
          _
        // Predicated region
        $region17: #{tpu_custom_call.1} parent=11 // pred_check
          %p127 = pneg %p83
        $region18: #{tpu_custom_call.1} parent=11 // pred_check_branch
          %129 = sbr.rel (%p127) target = $region20
        $region19: #{tpu_custom_call.1} parent=11 // pred_region
          _
        $region20: #{tpu_custom_call.1} parent=11 // pred_fallthru
          _
      $region12: #{tpu_custom_call.1} parent=5 // pred_fallthru
        _
      %p130 = scmp.lt.s32.totalorder %s15, 2
      // Predicated region
      $region21: #{tpu_custom_call.1} parent=5 // pred_check
        %p131 = pneg %p130
      $region22: #{tpu_custom_call.1} parent=5 // pred_check_branch
        %133 = sbr.rel (%p131) target = $region24
      $region23: #{tpu_custom_call.1} parent=5 // pred_region
        // Predicated region
        $region25: #{tpu_custom_call.1} parent=23 // pred_check
          %p134 = pneg %p35
        $region26: #{tpu_custom_call.1} parent=23 // pred_check_branch
          %136 = sbr.rel (%p134) target = $region28
        $region27: #{tpu_custom_call.1} parent=23 // pred_region
          %s137 = sand.u32 %s25, 1
          %s138 = scalar_lea.sflag [#allocation5], %s137
          %s139 = sand.u32 %s25, 1
          %s140 = smul.addr %s139, 128
          %s141 = scalar_lea.vmem [#allocation4], %s140
          %s143 = ssub.s32 2048, 2048
          %144 = vsyncadd %s138, %s143
          %s145 = smul.addr %s15, 16
          %s146 = smul.addr %s145, 128
          %s147 = scalar_lea.hbm %s0, %s146
          %s148 = sshll.u32 %s141, 4
          %s149 = int_to_ptr.vmem [resolvable:$true] %s148
          %154 = dma.hbm_to_vmem [thread:$0]  %s147, 2048, %s149, %s138, 128, 128, 8
        $region28: #{tpu_custom_call.1} parent=23 // pred_fallthru
          _
      $region24: #{tpu_custom_call.1} parent=5 // pred_fallthru
        _
      %p155 = scmp.le.s32.totalorder 1, %s15
      %p156 = scmp.lt.s32.totalorder %s15, 3
      %p157 = pnand %p155, %p156
      %p158 = pneg %p157
      // Predicated region
      $region29: #{tpu_custom_call.1} parent=5 // pred_check
        _
      $region30: #{tpu_custom_call.1} parent=5 // pred_check_branch
        %160 = sbr.rel (%p157) target = $region32
      $region31: #{tpu_custom_call.1} parent=5 // pred_region
        %s161 = ssub.s32 %s15, 1
        %s162 = sand.u32 %s28, 1
        %s163 = scalar_lea.sflag [#allocation5], %s162
        %s164 = sand.u32 %s28, 1
        %s165 = smul.addr %s164, 128
        %s166 = scalar_lea.vmem [#allocation4], %s165
        // Predicated region
        $region33: #{tpu_custom_call.1} parent=31 // pred_check
          %p167 = pneg %p41
        $region34: #{tpu_custom_call.1} parent=31 // pred_check_branch
          %169 = sbr.rel (%p167) target = $region36
        $region35: #{tpu_custom_call.1} parent=31 // pred_region
          %170 = dma.done %s163, 2048
        $region36: #{tpu_custom_call.1} parent=31 // pred_fallthru
          _
        %s171 = sand.u32 %s28, 1
        %s172 = scalar_lea.sflag [#allocation5], %s171
        %s173 = sand.u32 %s28, 1
        %s174 = smul.addr %s173, 128
        %s175 = scalar_lea.vmem [#allocation4], %s174
        %p176 = pneg %p41
        %p177 = pneg %p38
        %p178 = pneg %p62
        %p179 = pneg %p59
        %p180 = pneg %p83
        %p181 = pneg %p80
        %p182 = pneg %p109
        %p183 = pneg %p106
        %s184 = sand.u32 %s96, 1
        %s185 = scalar_lea.sflag [#allocation6], %s184
        %s186 = sand.u32 %s96, 1
        %s187 = smul.addr %s186, 32
        %s188 = scalar_lea.vmem [#allocation7], %s187
        %vm189 = vcmask 139264
        %190 = vst.msk [vmem:[#allocation2] sm:$0x1] %vm189, 0.0
        %191 = vst.msk [vmem:[#allocation2 + $0x18] sm:$0x1] %vm189, 0.0
        %192 = vst.msk [vmem:[#allocation2 + $0x30] sm:$0x1] %vm189, 0.0
        %193 = vst.msk [vmem:[#allocation2 + $0x48] sm:$0x1] %vm189, 0.0
        %194 = vst.msk [vmem:[#allocation2 + $0x60] sm:$0x1] %vm189, 0.0
        %195 = vst.msk [vmem:[#allocation2 + $0x78] sm:$0x1] %vm189, 0.0
        %196 = vst.msk [vmem:[#allocation2 + $0x90] sm:$0x1] %vm189, 0.0
        %197 = vst.msk [vmem:[#allocation2 + $0xa8] sm:$0x1] %vm189, 0.0
        %198 = vst.msk [vmem:[#allocation2 + $0x11] sm:$0x1] %vm189, 0.0
        %199 = vst.msk [vmem:[#allocation2 + $0x29] sm:$0x1] %vm189, 0.0
        %200 = vst.msk [vmem:[#allocation2 + $0x41] sm:$0x1] %vm189, 0.0
        %201 = vst.msk [vmem:[#allocation2 + $0x59] sm:$0x1] %vm189, 0.0
        %202 = vst.msk [vmem:[#allocation2 + $0x71] sm:$0x1] %vm189, 0.0
        %203 = vst.msk [vmem:[#allocation2 + $0x89] sm:$0x1] %vm189, 0.0
        %204 = vst.msk [vmem:[#allocation2 + $0xa1] sm:$0x1] %vm189, 0.0
        %205 = vst.msk [vmem:[#allocation2 + $0xb9] sm:$0x1] %vm189, 0.0
        %vm206 = vcmask 7168
        %207 = vst.msk [vmem:[#allocation2 + $0x1] sm:$0xff] %vm206, 0.0
        %208 = vst.msk [vmem:[#allocation2 + $0x9] sm:$0xff] %vm206, 0.0
        %209 = vst.msk [vmem:[#allocation2 + $0x19] sm:$0xff] %vm206, 0.0
        %210 = vst.msk [vmem:[#allocation2 + $0x21] sm:$0xff] %vm206, 0.0
        %211 = vst.msk [vmem:[#allocation2 + $0x31] sm:$0xff] %vm206, 0.0
        %212 = vst.msk [vmem:[#allocation2 + $0x39] sm:$0xff] %vm206, 0.0
        %213 = vst.msk [vmem:[#allocation2 + $0x49] sm:$0xff] %vm206, 0.0
        %214 = vst.msk [vmem:[#allocation2 + $0x51] sm:$0xff] %vm206, 0.0
        %215 = vst.msk [vmem:[#allocation2 + $0x61] sm:$0xff] %vm206, 0.0
        %216 = vst.msk [vmem:[#allocation2 + $0x69] sm:$0xff] %vm206, 0.0
        %217 = vst.msk [vmem:[#allocation2 + $0x79] sm:$0xff] %vm206, 0.0
        %218 = vst.msk [vmem:[#allocation2 + $0x81] sm:$0xff] %vm206, 0.0
        %219 = vst.msk [vmem:[#allocation2 + $0x91] sm:$0xff] %vm206, 0.0
        %220 = vst.msk [vmem:[#allocation2 + $0x99] sm:$0xff] %vm206, 0.0
        %221 = vst.msk [vmem:[#allocation2 + $0xa9] sm:$0xff] %vm206, 0.0
        %222 = vst.msk [vmem:[#allocation2 + $0xb1] sm:$0xff] %vm206, 0.0
        %vm223 = vcmask 146568
        %224 = vst.msk [vmem:[#allocation2 + $0x1] sm:$0xff] %vm223, 0.0
        %225 = vst.msk [vmem:[#allocation2 + $0x9] sm:$0xff] %vm223, 0.0
        %226 = vst.msk [vmem:[#allocation2 + $0x19] sm:$0xff] %vm223, 0.0
        %227 = vst.msk [vmem:[#allocation2 + $0x21] sm:$0xff] %vm223, 0.0
        %228 = vst.msk [vmem:[#allocation2 + $0x31] sm:$0xff] %vm223, 0.0
        %229 = vst.msk [vmem:[#allocation2 + $0x39] sm:$0xff] %vm223, 0.0
        %230 = vst.msk [vmem:[#allocation2 + $0x49] sm:$0xff] %vm223, 0.0
        %231 = vst.msk [vmem:[#allocation2 + $0x51] sm:$0xff] %vm223, 0.0
        %232 = vst.msk [vmem:[#allocation2 + $0x61] sm:$0xff] %vm223, 0.0
        %233 = vst.msk [vmem:[#allocation2 + $0x69] sm:$0xff] %vm223, 0.0
        %234 = vst.msk [vmem:[#allocation2 + $0x79] sm:$0xff] %vm223, 0.0
        %235 = vst.msk [vmem:[#allocation2 + $0x81] sm:$0xff] %vm223, 0.0
        %236 = vst.msk [vmem:[#allocation2 + $0x91] sm:$0xff] %vm223, 0.0
        %237 = vst.msk [vmem:[#allocation2 + $0x99] sm:$0xff] %vm223, 0.0
        %238 = vst.msk [vmem:[#allocation2 + $0xa9] sm:$0xff] %vm223, 0.0
        %239 = vst.msk [vmem:[#allocation2 + $0xb1] sm:$0xff] %vm223, 0.0
        %v240 = vld [vmem:[%s166] sm:$0xff]
        %v241 = vld [vmem:[%s166 + $0x8] sm:$0xff]
        %v242 = vld [vmem:[%s166 + $0x10] sm:$0xff]
        %v243 = vld [vmem:[%s166 + $0x18] sm:$0xff]
        %v244 = vld [vmem:[%s166 + $0x20] sm:$0xff]
        %v245 = vld [vmem:[%s166 + $0x28] sm:$0xff]
        %v246 = vld [vmem:[%s166 + $0x30] sm:$0xff]
        %v247 = vld [vmem:[%s166 + $0x38] sm:$0xff]
        %v248 = vld [vmem:[%s166 + $0x40] sm:$0xff]
        %v249 = vld [vmem:[%s166 + $0x48] sm:$0xff]
        %v250 = vld [vmem:[%s166 + $0x50] sm:$0xff]
        %v251 = vld [vmem:[%s166 + $0x58] sm:$0xff]
        %v252 = vld [vmem:[%s166 + $0x60] sm:$0xff]
        %v253 = vld [vmem:[%s166 + $0x68] sm:$0xff]
        %v254 = vld [vmem:[%s166 + $0x70] sm:$0xff]
        %v255 = vld [vmem:[%s166 + $0x78] sm:$0xff]
        %272 = vrot.lane.b32.xlu0 %v240, 1
        %v273 = vpop.permute.xlu0 %272
        %274 = vrot.lane.b32.xlu0 %v241, 1
        %v275 = vpop.permute.xlu0 %274
        %276 = vrot.lane.b32.xlu0 %v242, 1
        %v277 = vpop.permute.xlu0 %276
        %278 = vrot.lane.b32.xlu0 %v243, 1
        %v279 = vpop.permute.xlu0 %278
        %280 = vrot.lane.b32.xlu0 %v244, 1
        %v281 = vpop.permute.xlu0 %280
        %282 = vrot.lane.b32.xlu0 %v245, 1
        %v283 = vpop.permute.xlu0 %282
        %284 = vrot.lane.b32.xlu0 %v246, 1
        %v285 = vpop.permute.xlu0 %284
        %286 = vrot.lane.b32.xlu0 %v247, 1
        %v287 = vpop.permute.xlu0 %286
        %288 = vrot.lane.b32.xlu0 %v248, 1
        %v289 = vpop.permute.xlu0 %288
        %290 = vrot.lane.b32.xlu0 %v249, 1
        %v291 = vpop.permute.xlu0 %290
        %292 = vrot.lane.b32.xlu0 %v250, 1
        %v293 = vpop.permute.xlu0 %292
        %294 = vrot.lane.b32.xlu0 %v251, 1
        %v295 = vpop.permute.xlu0 %294
        %296 = vrot.lane.b32.xlu0 %v252, 1
        %v297 = vpop.permute.xlu0 %296
        %298 = vrot.lane.b32.xlu0 %v253, 1
        %v299 = vpop.permute.xlu0 %298
        %300 = vrot.lane.b32.xlu0 %v254, 1
        %v301 = vpop.permute.xlu0 %300
        %302 = vrot.lane.b32.xlu0 %v255, 1
        %v303 = vpop.permute.xlu0 %302
        %vm320 = vcmask 138248
        %321 = vst.msk [vmem:[#allocation2 + $0x1] sm:$0xff] %vm320, %v273
        %322 = vst.msk [vmem:[#allocation2 + $0x9] sm:$0xff] %vm320, %v275
        %323 = vst.msk [vmem:[#allocation2 + $0x19] sm:$0xff] %vm320, %v277
        %324 = vst.msk [vmem:[#allocation2 + $0x21] sm:$0xff] %vm320, %v279
        %325 = vst.msk [vmem:[#allocation2 + $0x31] sm:$0xff] %vm320, %v281
        %326 = vst.msk [vmem:[#allocation2 + $0x39] sm:$0xff] %vm320, %v283
        %327 = vst.msk [vmem:[#allocation2 + $0x49] sm:$0xff] %vm320, %v285
        %328 = vst.msk [vmem:[#allocation2 + $0x51] sm:$0xff] %vm320, %v287
        %329 = vst.msk [vmem:[#allocation2 + $0x61] sm:$0xff] %vm320, %v289
        %330 = vst.msk [vmem:[#allocation2 + $0x69] sm:$0xff] %vm320, %v291
        %331 = vst.msk [vmem:[#allocation2 + $0x79] sm:$0xff] %vm320, %v293
        %332 = vst.msk [vmem:[#allocation2 + $0x81] sm:$0xff] %vm320, %v295
        %333 = vst.msk [vmem:[#allocation2 + $0x91] sm:$0xff] %vm320, %v297
        %334 = vst.msk [vmem:[#allocation2 + $0x99] sm:$0xff] %vm320, %v299
        %335 = vst.msk [vmem:[#allocation2 + $0xa9] sm:$0xff] %vm320, %v301
        %336 = vst.msk [vmem:[#allocation2 + $0xb1] sm:$0xff] %vm320, %v303
        %v337 = vld [vmem:[#allocation2] sm:$0xff]
        %v338 = vld [vmem:[#allocation2 + $0x8] sm:$0xff]
        %v339 = vld [vmem:[#allocation2 + $0x18] sm:$0xff]
        %v340 = vld [vmem:[#allocation2 + $0x20] sm:$0xff]
        %v341 = vld [vmem:[#allocation2 + $0x30] sm:$0xff]
        %v342 = vld [vmem:[#allocation2 + $0x38] sm:$0xff]
        %v343 = vld [vmem:[#allocation2 + $0x48] sm:$0xff]
        %v344 = vld [vmem:[#allocation2 + $0x50] sm:$0xff]
        %v345 = vld [vmem:[#allocation2 + $0x60] sm:$0xff]
        %v346 = vld [vmem:[#allocation2 + $0x68] sm:$0xff]
        %v347 = vld [vmem:[#allocation2 + $0x78] sm:$0xff]
        %v348 = vld [vmem:[#allocation2 + $0x80] sm:$0xff]
        %v349 = vld [vmem:[#allocation2 + $0x90] sm:$0xff]
        %v350 = vld [vmem:[#allocation2 + $0x98] sm:$0xff]
        %v351 = vld [vmem:[#allocation2 + $0xa8] sm:$0xff]
        %v352 = vld [vmem:[#allocation2 + $0xb0] sm:$0xff]
        %v353 = vcombine.low %v337, %v341
        %v354 = vcombine.high %v337, %v341
        %v356 = vunpack.c.l.s4 1983009808
        %v357 = vunpack.c.0.s8 %v356
        %v358 = vlaneseq
        %v359 = vshrl.u32 %v358, 7
        %v360 = vsub.s32 %v357, %v359
        %v361 = vrot.slane %v353, %v360
        %v363 = vunpack.c.l.s4 1983009808
        %v364 = vunpack.c.0.s8 %v363
        %v365 = vlaneseq
        %v366 = vshrl.u32 %v365, 7
        %v367 = vsub.s32 %v364, %v366
        %v368 = vrot.slane %v354, %v367
        %v369 = vcombine.low %v339, %v343
        %v370 = vcombine.high %v339, %v343
        %v372 = vunpack.c.l.s4 1983009808
        %v373 = vunpack.c.0.s8 %v372
        %v374 = vlaneseq
        %v375 = vshrl.u32 %v374, 7
        %v376 = vsub.s32 %v373, %v375
        %v377 = vrot.slane %v369, %v376
        %v379 = vunpack.c.l.s4 1983009808
        %v380 = vunpack.c.0.s8 %v379
        %v381 = vlaneseq
        %v382 = vshrl.u32 %v381, 7
        %v383 = vsub.s32 %v380, %v382
        %v384 = vrot.slane %v370, %v383
        %v385 = vcombine.low %v345, %v349
        %v386 = vcombine.high %v345, %v349
        %v388 = vunpack.c.l.s4 1983009808
        %v389 = vunpack.c.0.s8 %v388
        %v390 = vlaneseq
        %v391 = vshrl.u32 %v390, 7
        %v392 = vsub.s32 %v389, %v391
        %v393 = vrot.slane %v385, %v392
        %v395 = vunpack.c.l.s4 1983009808
        %v396 = vunpack.c.0.s8 %v395
        %v397 = vlaneseq
        %v398 = vshrl.u32 %v397, 7
        %v399 = vsub.s32 %v396, %v398
        %v400 = vrot.slane %v386, %v399
        %v401 = vcombine.low %v347, %v351
        %v402 = vcombine.high %v347, %v351
        %v404 = vunpack.c.l.s4 1983009808
        %v405 = vunpack.c.0.s8 %v404
        %v406 = vlaneseq
        %v407 = vshrl.u32 %v406, 7
        %v408 = vsub.s32 %v405, %v407
        %v409 = vrot.slane %v401, %v408
        %v411 = vunpack.c.l.s4 1983009808
        %v412 = vunpack.c.0.s8 %v411
        %v413 = vlaneseq
        %v414 = vshrl.u32 %v413, 7
        %v415 = vsub.s32 %v412, %v414
        %v416 = vrot.slane %v402, %v415
        %v417 = vcombine.low %v361, %v377
        %v418 = vcombine.high %v361, %v377
        %v420 = vunpack.c.l.s4 1934713408
        %v421 = vunpack.c.0.s8 %v420
        %v422 = vlaneseq
        %v423 = vshrl.u32 %v422, 7
        %v424 = vsub.s32 %v421, %v423
        %v425 = vrot.slane %v417, %v424
        %v427 = vunpack.c.l.s4 1934713408
        %v428 = vunpack.c.0.s8 %v427
        %v429 = vlaneseq
        %v430 = vshrl.u32 %v429, 7
        %v431 = vsub.s32 %v428, %v430
        %v432 = vrot.slane %v418, %v431
        %v433 = vcombine.low %v368, %v384
        %v434 = vcombine.high %v368, %v384
        %v436 = vunpack.c.l.s4 1934713408
        %v437 = vunpack.c.0.s8 %v436
        %v438 = vlaneseq
        %v439 = vshrl.u32 %v438, 7
        %v440 = vsub.s32 %v437, %v439
        %v441 = vrot.slane %v433, %v440
        %v443 = vunpack.c.l.s4 1934713408
        %v444 = vunpack.c.0.s8 %v443
        %v445 = vlaneseq
        %v446 = vshrl.u32 %v445, 7
        %v447 = vsub.s32 %v444, %v446
        %v448 = vrot.slane %v434, %v447
        %v449 = vcombine.low %v393, %v409
        %v450 = vcombine.high %v393, %v409
        %v452 = vunpack.c.l.s4 1934713408
        %v453 = vunpack.c.0.s8 %v452
        %v454 = vlaneseq
        %v455 = vshrl.u32 %v454, 7
        %v456 = vsub.s32 %v453, %v455
        %v457 = vrot.slane %v449, %v456
        %v459 = vunpack.c.l.s4 1934713408
        %v460 = vunpack.c.0.s8 %v459
        %v461 = vlaneseq
        %v462 = vshrl.u32 %v461, 7
        %v463 = vsub.s32 %v460, %v462
        %v464 = vrot.slane %v450, %v463
        %v465 = vcombine.low %v400, %v416
        %v466 = vcombine.high %v400, %v416
        %v468 = vunpack.c.l.s4 1934713408
        %v469 = vunpack.c.0.s8 %v468
        %v470 = vlaneseq
        %v471 = vshrl.u32 %v470, 7
        %v472 = vsub.s32 %v469, %v471
        %v473 = vrot.slane %v465, %v472
        %v475 = vunpack.c.l.s4 1934713408
        %v476 = vunpack.c.0.s8 %v475
        %v477 = vlaneseq
        %v478 = vshrl.u32 %v477, 7
        %v479 = vsub.s32 %v476, %v478
        %v480 = vrot.slane %v466, %v479
        %v481 = vcombine.low %v425, %v457
        %v482 = vcombine.high %v425, %v457
        %v483 = vcombine.low %v432, %v464
        %v484 = vcombine.high %v432, %v464
        %v485 = vcombine.low %v441, %v473
        %v486 = vcombine.high %v441, %v473
        %v487 = vcombine.low %v448, %v480
        %v488 = vcombine.high %v448, %v480
        %v489 = vcombine.low %v338, %v342
        %v490 = vcombine.high %v338, %v342
        %v492 = vunpack.c.l.s4 1983009808
        %v493 = vunpack.c.0.s8 %v492
        %v494 = vlaneseq
        %v495 = vshrl.u32 %v494, 7
        %v496 = vsub.s32 %v493, %v495
        %v497 = vrot.slane %v489, %v496
        %v499 = vunpack.c.l.s4 1983009808
        %v500 = vunpack.c.0.s8 %v499
        %v501 = vlaneseq
        %v502 = vshrl.u32 %v501, 7
        %v503 = vsub.s32 %v500, %v502
        %v504 = vrot.slane %v490, %v503
        %v505 = vcombine.low %v340, %v344
        %v506 = vcombine.high %v340, %v344
        %v508 = vunpack.c.l.s4 1983009808
        %v509 = vunpack.c.0.s8 %v508
        %v510 = vlaneseq
        %v511 = vshrl.u32 %v510, 7
        %v512 = vsub.s32 %v509, %v511
        %v513 = vrot.slane %v505, %v512
        %v515 = vunpack.c.l.s4 1983009808
        %v516 = vunpack.c.0.s8 %v515
        %v517 = vlaneseq
        %v518 = vshrl.u32 %v517, 7
        %v519 = vsub.s32 %v516, %v518
        %v520 = vrot.slane %v506, %v519
        %v521 = vcombine.low %v346, %v350
        %v522 = vcombine.high %v346, %v350
        %v524 = vunpack.c.l.s4 1983009808
        %v525 = vunpack.c.0.s8 %v524
        %v526 = vlaneseq
        %v527 = vshrl.u32 %v526, 7
        %v528 = vsub.s32 %v525, %v527
        %v529 = vrot.slane %v521, %v528
        %v531 = vunpack.c.l.s4 1983009808
        %v532 = vunpack.c.0.s8 %v531
        %v533 = vlaneseq
        %v534 = vshrl.u32 %v533, 7
        %v535 = vsub.s32 %v532, %v534
        %v536 = vrot.slane %v522, %v535
        %v537 = vcombine.low %v348, %v352
        %v538 = vcombine.high %v348, %v352
        %v540 = vunpack.c.l.s4 1983009808
        %v541 = vunpack.c.0.s8 %v540
        %v542 = vlaneseq
        %v543 = vshrl.u32 %v542, 7
        %v544 = vsub.s32 %v541, %v543
        %v545 = vrot.slane %v537, %v544
        %v547 = vunpack.c.l.s4 1983009808
        %v548 = vunpack.c.0.s8 %v547
        %v549 = vlaneseq
        %v550 = vshrl.u32 %v549, 7
        %v551 = vsub.s32 %v548, %v550
        %v552 = vrot.slane %v538, %v551
        %v553 = vcombine.low %v497, %v513
        %v554 = vcombine.high %v497, %v513
        %v556 = vunpack.c.l.s4 1934713408
        %v557 = vunpack.c.0.s8 %v556
        %v558 = vlaneseq
        %v559 = vshrl.u32 %v558, 7
        %v560 = vsub.s32 %v557, %v559
        %v561 = vrot.slane %v553, %v560
        %v563 = vunpack.c.l.s4 1934713408
        %v564 = vunpack.c.0.s8 %v563
        %v565 = vlaneseq
        %v566 = vshrl.u32 %v565, 7
        %v567 = vsub.s32 %v564, %v566
        %v568 = vrot.slane %v554, %v567
        %v569 = vcombine.low %v504, %v520
        %v570 = vcombine.high %v504, %v520
        %v572 = vunpack.c.l.s4 1934713408
        %v573 = vunpack.c.0.s8 %v572
        %v574 = vlaneseq
        %v575 = vshrl.u32 %v574, 7
        %v576 = vsub.s32 %v573, %v575
        %v577 = vrot.slane %v569, %v576
        %v579 = vunpack.c.l.s4 1934713408
        %v580 = vunpack.c.0.s8 %v579
        %v581 = vlaneseq
        %v582 = vshrl.u32 %v581, 7
        %v583 = vsub.s32 %v580, %v582
        %v584 = vrot.slane %v570, %v583
        %v585 = vcombine.low %v529, %v545
        %v586 = vcombine.high %v529, %v545
        %v588 = vunpack.c.l.s4 1934713408
        %v589 = vunpack.c.0.s8 %v588
        %v590 = vlaneseq
        %v591 = vshrl.u32 %v590, 7
        %v592 = vsub.s32 %v589, %v591
        %v593 = vrot.slane %v585, %v592
        %v595 = vunpack.c.l.s4 1934713408
        %v596 = vunpack.c.0.s8 %v595
        %v597 = vlaneseq
        %v598 = vshrl.u32 %v597, 7
        %v599 = vsub.s32 %v596, %v598
        %v600 = vrot.slane %v586, %v599
        %v601 = vcombine.low %v536, %v552
        %v602 = vcombine.high %v536, %v552
        %v604 = vunpack.c.l.s4 1934713408
        %v605 = vunpack.c.0.s8 %v604
        %v606 = vlaneseq
        %v607 = vshrl.u32 %v606, 7
        %v608 = vsub.s32 %v605, %v607
        %v609 = vrot.slane %v601, %v608
        %v611 = vunpack.c.l.s4 1934713408
        %v612 = vunpack.c.0.s8 %v611
        %v613 = vlaneseq
        %v614 = vshrl.u32 %v613, 7
        %v615 = vsub.s32 %v612, %v614
        %v616 = vrot.slane %v602, %v615
        %v617 = vcombine.low %v561, %v593
        %v618 = vcombine.high %v561, %v593
        %v619 = vcombine.low %v568, %v600
        %v620 = vcombine.high %v568, %v600
        %v621 = vcombine.low %v577, %v609
        %v622 = vcombine.high %v577, %v609
        %v623 = vcombine.low %v584, %v616
        %v624 = vcombine.high %v584, %v616
        %626 = vrot.lane.b32.xlu0 %v482, 16
        %v627 = vpop.permute.xlu0 %626
        %630 = vrot.lane.b32.xlu0 %v483, 32
        %v631 = vpop.permute.xlu0 %630
        %634 = vrot.lane.b32.xlu0 %v484, 48
        %v635 = vpop.permute.xlu0 %634
        %638 = vrot.lane.b32.xlu0 %v485, 64
        %v639 = vpop.permute.xlu0 %638
        %642 = vrot.lane.b32.xlu0 %v486, 80
        %v643 = vpop.permute.xlu0 %642
        %646 = vrot.lane.b32.xlu0 %v487, 96
        %v647 = vpop.permute.xlu0 %646
        %650 = vrot.lane.b32.xlu0 %v488, 112
        %v651 = vpop.permute.xlu0 %650
        %654 = vrot.lane.b32.xlu0 %v618, 16
        %v655 = vpop.permute.xlu0 %654
        %658 = vrot.lane.b32.xlu0 %v619, 32
        %v659 = vpop.permute.xlu0 %658
        %662 = vrot.lane.b32.xlu0 %v620, 48
        %v663 = vpop.permute.xlu0 %662
        %666 = vrot.lane.b32.xlu0 %v621, 64
        %v667 = vpop.permute.xlu0 %666
        %670 = vrot.lane.b32.xlu0 %v622, 80
        %v671 = vpop.permute.xlu0 %670
        %674 = vrot.lane.b32.xlu0 %v623, 96
        %v675 = vpop.permute.xlu0 %674
        %678 = vrot.lane.b32.xlu0 %v624, 112
        %v679 = vpop.permute.xlu0 %678
        %vm681 = vcmask 130048
        %v682 = vsel %vm681, %v481, %v627
        %vm683 = vcmask 261120
        %v684 = vsel %vm683, %v682, %v631
        %vm685 = vcmask 392192
        %v686 = vsel %vm685, %v684, %v635
        %vm687 = vcmask 523264
        %v688 = vsel %vm687, %v686, %v639
        %vm689 = vcmask 654336
        %v690 = vsel %vm689, %v688, %v643
        %vm691 = vcmask 785408
        %v692 = vsel %vm691, %v690, %v647
        %vm693 = vcmask 916480
        %v694 = vsel %vm693, %v692, %v651
        %v695 = vsel %vm681, %v617, %v655
        %v696 = vsel %vm683, %v695, %v659
        %v697 = vsel %vm685, %v696, %v663
        %v698 = vsel %vm687, %v697, %v667
        %v699 = vsel %vm689, %v698, %v671
        %v700 = vsel %vm691, %v699, %v675
        %v701 = vsel %vm693, %v700, %v679
        %702 = vst [vmem:[#allocation3] sm:$0xff] %v694
        %703 = vst [vmem:[#allocation3 + $0x8] sm:$0xff] %v701
        %v704 = vld [vmem:[#allocation2] sm:$0xff]
        %v705 = vld [vmem:[#allocation2 + $0x8] sm:$0xff]
        %v706 = vld [vmem:[#allocation2 + $0x18] sm:$0xff]
        %v707 = vld [vmem:[#allocation2 + $0x20] sm:$0xff]
        %v708 = vld [vmem:[#allocation2 + $0x30] sm:$0xff]
        %v709 = vld [vmem:[#allocation2 + $0x38] sm:$0xff]
        %v710 = vld [vmem:[#allocation2 + $0x48] sm:$0xff]
        %v711 = vld [vmem:[#allocation2 + $0x50] sm:$0xff]
        %v712 = vld [vmem:[#allocation2 + $0x60] sm:$0xff]
        %v713 = vld [vmem:[#allocation2 + $0x68] sm:$0xff]
        %v714 = vld [vmem:[#allocation2 + $0x78] sm:$0xff]
        %v715 = vld [vmem:[#allocation2 + $0x80] sm:$0xff]
        %v716 = vld [vmem:[#allocation2 + $0x90] sm:$0xff]
        %v717 = vld [vmem:[#allocation2 + $0x98] sm:$0xff]
        %v718 = vld [vmem:[#allocation2 + $0xa8] sm:$0xff]
        %v719 = vld [vmem:[#allocation2 + $0xb0] sm:$0xff]
        %736 = vrot.lane.b32.xlu0 %v704, 127
        %v737 = vpop.permute.xlu0 %736
        %738 = vrot.lane.b32.xlu0 %v705, 127
        %v739 = vpop.permute.xlu0 %738
        %740 = vrot.lane.b32.xlu0 %v706, 127
        %v741 = vpop.permute.xlu0 %740
        %742 = vrot.lane.b32.xlu0 %v707, 127
        %v743 = vpop.permute.xlu0 %742
        %744 = vrot.lane.b32.xlu0 %v708, 127
        %v745 = vpop.permute.xlu0 %744
        %746 = vrot.lane.b32.xlu0 %v709, 127
        %v747 = vpop.permute.xlu0 %746
        %748 = vrot.lane.b32.xlu0 %v710, 127
        %v749 = vpop.permute.xlu0 %748
        %750 = vrot.lane.b32.xlu0 %v711, 127
        %v751 = vpop.permute.xlu0 %750
        %752 = vrot.lane.b32.xlu0 %v712, 127
        %v753 = vpop.permute.xlu0 %752
        %754 = vrot.lane.b32.xlu0 %v713, 127
        %v755 = vpop.permute.xlu0 %754
        %756 = vrot.lane.b32.xlu0 %v714, 127
        %v757 = vpop.permute.xlu0 %756
        %758 = vrot.lane.b32.xlu0 %v715, 127
        %v759 = vpop.permute.xlu0 %758
        %760 = vrot.lane.b32.xlu0 %v716, 127
        %v761 = vpop.permute.xlu0 %760
        %762 = vrot.lane.b32.xlu0 %v717, 127
        %v763 = vpop.permute.xlu0 %762
        %764 = vrot.lane.b32.xlu0 %v718, 127
        %v765 = vpop.permute.xlu0 %764
        %766 = vrot.lane.b32.xlu0 %v719, 127
        %v767 = vpop.permute.xlu0 %766
        %v784 = vcombine.low %v737, %v745
        %v785 = vcombine.high %v737, %v745
        %v787 = vunpack.c.l.s4 1983009808
        %v788 = vunpack.c.0.s8 %v787
        %v789 = vlaneseq
        %v790 = vshrl.u32 %v789, 7
        %v791 = vsub.s32 %v788, %v790
        %v792 = vrot.slane %v784, %v791
        %v794 = vunpack.c.l.s4 1983009808
        %v795 = vunpack.c.0.s8 %v794
        %v796 = vlaneseq
        %v797 = vshrl.u32 %v796, 7
        %v798 = vsub.s32 %v795, %v797
        %v799 = vrot.slane %v785, %v798
        %v800 = vcombine.low %v741, %v749
        %v801 = vcombine.high %v741, %v749
        %v803 = vunpack.c.l.s4 1983009808
        %v804 = vunpack.c.0.s8 %v803
        %v805 = vlaneseq
        %v806 = vshrl.u32 %v805, 7
        %v807 = vsub.s32 %v804, %v806
        %v808 = vrot.slane %v800, %v807
        %v810 = vunpack.c.l.s4 1983009808
        %v811 = vunpack.c.0.s8 %v810
        %v812 = vlaneseq
        %v813 = vshrl.u32 %v812, 7
        %v814 = vsub.s32 %v811, %v813
        %v815 = vrot.slane %v801, %v814
        %v816 = vcombine.low %v753, %v761
        %v817 = vcombine.high %v753, %v761
        %v819 = vunpack.c.l.s4 1983009808
        %v820 = vunpack.c.0.s8 %v819
        %v821 = vlaneseq
        %v822 = vshrl.u32 %v821, 7
        %v823 = vsub.s32 %v820, %v822
        %v824 = vrot.slane %v816, %v823
        %v826 = vunpack.c.l.s4 1983009808
        %v827 = vunpack.c.0.s8 %v826
        %v828 = vlaneseq
        %v829 = vshrl.u32 %v828, 7
        %v830 = vsub.s32 %v827, %v829
        %v831 = vrot.slane %v817, %v830
        %v832 = vcombine.low %v757, %v765
        %v833 = vcombine.high %v757, %v765
        %v835 = vunpack.c.l.s4 1983009808
        %v836 = vunpack.c.0.s8 %v835
        %v837 = vlaneseq
        %v838 = vshrl.u32 %v837, 7
        %v839 = vsub.s32 %v836, %v838
        %v840 = vrot.slane %v832, %v839
        %v842 = vunpack.c.l.s4 1983009808
        %v843 = vunpack.c.0.s8 %v842
        %v844 = vlaneseq
        %v845 = vshrl.u32 %v844, 7
        %v846 = vsub.s32 %v843, %v845
        %v847 = vrot.slane %v833, %v846
        %v848 = vcombine.low %v792, %v808
        %v849 = vcombine.high %v792, %v808
        %v851 = vunpack.c.l.s4 1934713408
        %v852 = vunpack.c.0.s8 %v851
        %v853 = vlaneseq
        %v854 = vshrl.u32 %v853, 7
        %v855 = vsub.s32 %v852, %v854
        %v856 = vrot.slane %v848, %v855
        %v858 = vunpack.c.l.s4 1934713408
        %v859 = vunpack.c.0.s8 %v858
        %v860 = vlaneseq
        %v861 = vshrl.u32 %v860, 7
        %v862 = vsub.s32 %v859, %v861
        %v863 = vrot.slane %v849, %v862
        %v864 = vcombine.low %v799, %v815
        %v865 = vcombine.high %v799, %v815
        %v867 = vunpack.c.l.s4 1934713408
        %v868 = vunpack.c.0.s8 %v867
        %v869 = vlaneseq
        %v870 = vshrl.u32 %v869, 7
        %v871 = vsub.s32 %v868, %v870
        %v872 = vrot.slane %v864, %v871
        %v874 = vunpack.c.l.s4 1934713408
        %v875 = vunpack.c.0.s8 %v874
        %v876 = vlaneseq
        %v877 = vshrl.u32 %v876, 7
        %v878 = vsub.s32 %v875, %v877
        %v879 = vrot.slane %v865, %v878
        %v880 = vcombine.low %v824, %v840
        %v881 = vcombine.high %v824, %v840
        %v883 = vunpack.c.l.s4 1934713408
        %v884 = vunpack.c.0.s8 %v883
        %v885 = vlaneseq
        %v886 = vshrl.u32 %v885, 7
        %v887 = vsub.s32 %v884, %v886
        %v888 = vrot.slane %v880, %v887
        %v890 = vunpack.c.l.s4 1934713408
        %v891 = vunpack.c.0.s8 %v890
        %v892 = vlaneseq
        %v893 = vshrl.u32 %v892, 7
        %v894 = vsub.s32 %v891, %v893
        %v895 = vrot.slane %v881, %v894
        %v896 = vcombine.low %v831, %v847
        %v897 = vcombine.high %v831, %v847
        %v899 = vunpack.c.l.s4 1934713408
        %v900 = vunpack.c.0.s8 %v899
        %v901 = vlaneseq
        %v902 = vshrl.u32 %v901, 7
        %v903 = vsub.s32 %v900, %v902
        %v904 = vrot.slane %v896, %v903
        %v906 = vunpack.c.l.s4 1934713408
        %v907 = vunpack.c.0.s8 %v906
        %v908 = vlaneseq
        %v909 = vshrl.u32 %v908, 7
        %v910 = vsub.s32 %v907, %v909
        %v911 = vrot.slane %v897, %v910
        %v912 = vcombine.low %v856, %v888
        %v913 = vcombine.high %v856, %v888
        %v914 = vcombine.low %v863, %v895
        %v915 = vcombine.high %v863, %v895
        %v916 = vcombine.low %v872, %v904
        %v917 = vcombine.high %v872, %v904
        %v918 = vcombine.low %v879, %v911
        %v919 = vcombine.high %v879, %v911
        %v920 = vcombine.low %v739, %v747
        %v921 = vcombine.high %v739, %v747
        %v923 = vunpack.c.l.s4 1983009808
        %v924 = vunpack.c.0.s8 %v923
        %v925 = vlaneseq
        %v926 = vshrl.u32 %v925, 7
        %v927 = vsub.s32 %v924, %v926
        %v928 = vrot.slane %v920, %v927
        %v930 = vunpack.c.l.s4 1983009808
        %v931 = vunpack.c.0.s8 %v930
        %v932 = vlaneseq
        %v933 = vshrl.u32 %v932, 7
        %v934 = vsub.s32 %v931, %v933
        %v935 = vrot.slane %v921, %v934
        %v936 = vcombine.low %v743, %v751
        %v937 = vcombine.high %v743, %v751
        %v939 = vunpack.c.l.s4 1983009808
        %v940 = vunpack.c.0.s8 %v939
        %v941 = vlaneseq
        %v942 = vshrl.u32 %v941, 7
        %v943 = vsub.s32 %v940, %v942
        %v944 = vrot.slane %v936, %v943
        %v946 = vunpack.c.l.s4 1983009808
        %v947 = vunpack.c.0.s8 %v946
        %v948 = vlaneseq
        %v949 = vshrl.u32 %v948, 7
        %v950 = vsub.s32 %v947, %v949
        %v951 = vrot.slane %v937, %v950
        %v952 = vcombine.low %v755, %v763
        %v953 = vcombine.high %v755, %v763
        %v955 = vunpack.c.l.s4 1983009808
        %v956 = vunpack.c.0.s8 %v955
        %v957 = vlaneseq
        %v958 = vshrl.u32 %v957, 7
        %v959 = vsub.s32 %v956, %v958
        %v960 = vrot.slane %v952, %v959
        %v962 = vunpack.c.l.s4 1983009808
        %v963 = vunpack.c.0.s8 %v962
        %v964 = vlaneseq
        %v965 = vshrl.u32 %v964, 7
        %v966 = vsub.s32 %v963, %v965
        %v967 = vrot.slane %v953, %v966
        %v968 = vcombine.low %v759, %v767
        %v969 = vcombine.high %v759, %v767
        %v971 = vunpack.c.l.s4 1983009808
        %v972 = vunpack.c.0.s8 %v971
        %v973 = vlaneseq
        %v974 = vshrl.u32 %v973, 7
        %v975 = vsub.s32 %v972, %v974
        %v976 = vrot.slane %v968, %v975
        %v978 = vunpack.c.l.s4 1983009808
        %v979 = vunpack.c.0.s8 %v978
        %v980 = vlaneseq
        %v981 = vshrl.u32 %v980, 7
        %v982 = vsub.s32 %v979, %v981
        %v983 = vrot.slane %v969, %v982
        %v984 = vcombine.low %v928, %v944
        %v985 = vcombine.high %v928, %v944
        %v987 = vunpack.c.l.s4 1934713408
        %v988 = vunpack.c.0.s8 %v987
        %v989 = vlaneseq
        %v990 = vshrl.u32 %v989, 7
        %v991 = vsub.s32 %v988, %v990
        %v992 = vrot.slane %v984, %v991
        %v994 = vunpack.c.l.s4 1934713408
        %v995 = vunpack.c.0.s8 %v994
        %v996 = vlaneseq
        %v997 = vshrl.u32 %v996, 7
        %v998 = vsub.s32 %v995, %v997
        %v999 = vrot.slane %v985, %v998
        %v1000 = vcombine.low %v935, %v951
        %v1001 = vcombine.high %v935, %v951
        %v1003 = vunpack.c.l.s4 1934713408
        %v1004 = vunpack.c.0.s8 %v1003
        %v1005 = vlaneseq
        %v1006 = vshrl.u32 %v1005, 7
        %v1007 = vsub.s32 %v1004, %v1006
        %v1008 = vrot.slane %v1000, %v1007
        %v1010 = vunpack.c.l.s4 1934713408
        %v1011 = vunpack.c.0.s8 %v1010
        %v1012 = vlaneseq
        %v1013 = vshrl.u32 %v1012, 7
        %v1014 = vsub.s32 %v1011, %v1013
        %v1015 = vrot.slane %v1001, %v1014
        %v1016 = vcombine.low %v960, %v976
        %v1017 = vcombine.high %v960, %v976
        %v1019 = vunpack.c.l.s4 1934713408
        %v1020 = vunpack.c.0.s8 %v1019
        %v1021 = vlaneseq
        %v1022 = vshrl.u32 %v1021, 7
        %v1023 = vsub.s32 %v1020, %v1022
        %v1024 = vrot.slane %v1016, %v1023
        %v1026 = vunpack.c.l.s4 1934713408
        %v1027 = vunpack.c.0.s8 %v1026
        %v1028 = vlaneseq
        %v1029 = vshrl.u32 %v1028, 7
        %v1030 = vsub.s32 %v1027, %v1029
        %v1031 = vrot.slane %v1017, %v1030
        %v1032 = vcombine.low %v967, %v983
        %v1033 = vcombine.high %v967, %v983
        %v1035 = vunpack.c.l.s4 1934713408
        %v1036 = vunpack.c.0.s8 %v1035
        %v1037 = vlaneseq
        %v1038 = vshrl.u32 %v1037, 7
        %v1039 = vsub.s32 %v1036, %v1038
        %v1040 = vrot.slane %v1032, %v1039
        %v1042 = vunpack.c.l.s4 1934713408
        %v1043 = vunpack.c.0.s8 %v1042
        %v1044 = vlaneseq
        %v1045 = vshrl.u32 %v1044, 7
        %v1046 = vsub.s32 %v1043, %v1045
        %v1047 = vrot.slane %v1033, %v1046
        %v1048 = vcombine.low %v992, %v1024
        %v1049 = vcombine.high %v992, %v1024
        %v1050 = vcombine.low %v999, %v1031
        %v1051 = vcombine.high %v999, %v1031
        %v1052 = vcombine.low %v1008, %v1040
        %v1053 = vcombine.high %v1008, %v1040
        %v1054 = vcombine.low %v1015, %v1047
        %v1055 = vcombine.high %v1015, %v1047
        %1057 = vrot.lane.b32.xlu0 %v913, 16
        %v1058 = vpop.permute.xlu0 %1057
        %1061 = vrot.lane.b32.xlu0 %v914, 32
        %v1062 = vpop.permute.xlu0 %1061
        %1065 = vrot.lane.b32.xlu0 %v915, 48
        %v1066 = vpop.permute.xlu0 %1065
        %1069 = vrot.lane.b32.xlu0 %v916, 64
        %v1070 = vpop.permute.xlu0 %1069
        %1073 = vrot.lane.b32.xlu0 %v917, 80
        %v1074 = vpop.permute.xlu0 %1073
        %1077 = vrot.lane.b32.xlu0 %v918, 96
        %v1078 = vpop.permute.xlu0 %1077
        %1081 = vrot.lane.b32.xlu0 %v919, 112
        %v1082 = vpop.permute.xlu0 %1081
        %1085 = vrot.lane.b32.xlu0 %v1049, 16
        %v1086 = vpop.permute.xlu0 %1085
        %1089 = vrot.lane.b32.xlu0 %v1050, 32
        %v1090 = vpop.permute.xlu0 %1089
        %1093 = vrot.lane.b32.xlu0 %v1051, 48
        %v1094 = vpop.permute.xlu0 %1093
        %1097 = vrot.lane.b32.xlu0 %v1052, 64
        %v1098 = vpop.permute.xlu0 %1097
        %1101 = vrot.lane.b32.xlu0 %v1053, 80
        %v1102 = vpop.permute.xlu0 %1101
        %1105 = vrot.lane.b32.xlu0 %v1054, 96
        %v1106 = vpop.permute.xlu0 %1105
        %1109 = vrot.lane.b32.xlu0 %v1055, 112
        %v1110 = vpop.permute.xlu0 %1109
        %v1112 = vsel %vm681, %v912, %v1058
        %v1113 = vsel %vm683, %v1112, %v1062
        %v1114 = vsel %vm685, %v1113, %v1066
        %v1115 = vsel %vm687, %v1114, %v1070
        %v1116 = vsel %vm689, %v1115, %v1074
        %v1117 = vsel %vm691, %v1116, %v1078
        %v1118 = vsel %vm693, %v1117, %v1082
        %v1119 = vsel %vm681, %v1048, %v1086
        %v1120 = vsel %vm683, %v1119, %v1090
        %v1121 = vsel %vm685, %v1120, %v1094
        %v1122 = vsel %vm687, %v1121, %v1098
        %v1123 = vsel %vm689, %v1122, %v1102
        %v1124 = vsel %vm691, %v1123, %v1106
        %v1125 = vsel %vm693, %v1124, %v1110
        %1126 = vst [vmem:[#allocation3 + $0x10] sm:$0xff] %v1118
        %1127 = vst [vmem:[#allocation3 + $0x18] sm:$0xff] %v1125
        %v1128 = vld [vmem:[#allocation2] sm:$0xff]
        %v1129 = vld [vmem:[#allocation2 + $0x8] sm:$0xff]
        %v1130 = vld [vmem:[#allocation2 + $0x18] sm:$0xff]
        %v1131 = vld [vmem:[#allocation2 + $0x20] sm:$0xff]
        %v1132 = vld [vmem:[#allocation2 + $0x30] sm:$0xff]
        %v1133 = vld [vmem:[#allocation2 + $0x38] sm:$0xff]
        %v1134 = vld [vmem:[#allocation2 + $0x48] sm:$0xff]
        %v1135 = vld [vmem:[#allocation2 + $0x50] sm:$0xff]
        %v1136 = vld [vmem:[#allocation2 + $0x60] sm:$0xff]
        %v1137 = vld [vmem:[#allocation2 + $0x68] sm:$0xff]
        %v1138 = vld [vmem:[#allocation2 + $0x78] sm:$0xff]
        %v1139 = vld [vmem:[#allocation2 + $0x80] sm:$0xff]
        %v1140 = vld [vmem:[#allocation2 + $0x90] sm:$0xff]
        %v1141 = vld [vmem:[#allocation2 + $0x98] sm:$0xff]
        %v1142 = vld [vmem:[#allocation2 + $0xa8] sm:$0xff]
        %v1143 = vld [vmem:[#allocation2 + $0xb0] sm:$0xff]
        %1160 = vrot.lane.b32.xlu0 %v1128, 126
        %v1161 = vpop.permute.xlu0 %1160
        %1162 = vrot.lane.b32.xlu0 %v1129, 126
        %v1163 = vpop.permute.xlu0 %1162
        %1164 = vrot.lane.b32.xlu0 %v1130, 126
        %v1165 = vpop.permute.xlu0 %1164
        %1166 = vrot.lane.b32.xlu0 %v1131, 126
        %v1167 = vpop.permute.xlu0 %1166
        %1168 = vrot.lane.b32.xlu0 %v1132, 126
        %v1169 = vpop.permute.xlu0 %1168
        %1170 = vrot.lane.b32.xlu0 %v1133, 126
        %v1171 = vpop.permute.xlu0 %1170
        %1172 = vrot.lane.b32.xlu0 %v1134, 126
        %v1173 = vpop.permute.xlu0 %1172
        %1174 = vrot.lane.b32.xlu0 %v1135, 126
        %v1175 = vpop.permute.xlu0 %1174
        %1176 = vrot.lane.b32.xlu0 %v1136, 126
        %v1177 = vpop.permute.xlu0 %1176
        %1178 = vrot.lane.b32.xlu0 %v1137, 126
        %v1179 = vpop.permute.xlu0 %1178
        %1180 = vrot.lane.b32.xlu0 %v1138, 126
        %v1181 = vpop.permute.xlu0 %1180
        %1182 = vrot.lane.b32.xlu0 %v1139, 126
        %v1183 = vpop.permute.xlu0 %1182
        %1184 = vrot.lane.b32.xlu0 %v1140, 126
        %v1185 = vpop.permute.xlu0 %1184
        %1186 = vrot.lane.b32.xlu0 %v1141, 126
        %v1187 = vpop.permute.xlu0 %1186
        %1188 = vrot.lane.b32.xlu0 %v1142, 126
        %v1189 = vpop.permute.xlu0 %1188
        %1190 = vrot.lane.b32.xlu0 %v1143, 126
        %v1191 = vpop.permute.xlu0 %1190
        %v1208 = vcombine.low %v1161, %v1169
        %v1209 = vcombine.high %v1161, %v1169
        %v1211 = vunpack.c.l.s4 1983009808
        %v1212 = vunpack.c.0.s8 %v1211
        %v1213 = vlaneseq
        %v1214 = vshrl.u32 %v1213, 7
        %v1215 = vsub.s32 %v1212, %v1214
        %v1216 = vrot.slane %v1208, %v1215
        %v1218 = vunpack.c.l.s4 1983009808
        %v1219 = vunpack.c.0.s8 %v1218
        %v1220 = vlaneseq
        %v1221 = vshrl.u32 %v1220, 7
        %v1222 = vsub.s32 %v1219, %v1221
        %v1223 = vrot.slane %v1209, %v1222
        %v1224 = vcombine.low %v1165, %v1173
        %v1225 = vcombine.high %v1165, %v1173
        %v1227 = vunpack.c.l.s4 1983009808
        %v1228 = vunpack.c.0.s8 %v1227
        %v1229 = vlaneseq
        %v1230 = vshrl.u32 %v1229, 7
        %v1231 = vsub.s32 %v1228, %v1230
        %v1232 = vrot.slane %v1224, %v1231
        %v1234 = vunpack.c.l.s4 1983009808
        %v1235 = vunpack.c.0.s8 %v1234
        %v1236 = vlaneseq
        %v1237 = vshrl.u32 %v1236, 7
        %v1238 = vsub.s32 %v1235, %v1237
        %v1239 = vrot.slane %v1225, %v1238
        %v1240 = vcombine.low %v1177, %v1185
        %v1241 = vcombine.high %v1177, %v1185
        %v1243 = vunpack.c.l.s4 1983009808
        %v1244 = vunpack.c.0.s8 %v1243
        %v1245 = vlaneseq
        %v1246 = vshrl.u32 %v1245, 7
        %v1247 = vsub.s32 %v1244, %v1246
        %v1248 = vrot.slane %v1240, %v1247
        %v1250 = vunpack.c.l.s4 1983009808
        %v1251 = vunpack.c.0.s8 %v1250
        %v1252 = vlaneseq
        %v1253 = vshrl.u32 %v1252, 7
        %v1254 = vsub.s32 %v1251, %v1253
        %v1255 = vrot.slane %v1241, %v1254
        %v1256 = vcombine.low %v1181, %v1189
        %v1257 = vcombine.high %v1181, %v1189
        %v1259 = vunpack.c.l.s4 1983009808
        %v1260 = vunpack.c.0.s8 %v1259
        %v1261 = vlaneseq
        %v1262 = vshrl.u32 %v1261, 7
        %v1263 = vsub.s32 %v1260, %v1262
        %v1264 = vrot.slane %v1256, %v1263
        %v1266 = vunpack.c.l.s4 1983009808
        %v1267 = vunpack.c.0.s8 %v1266
        %v1268 = vlaneseq
        %v1269 = vshrl.u32 %v1268, 7
        %v1270 = vsub.s32 %v1267, %v1269
        %v1271 = vrot.slane %v1257, %v1270
        %v1272 = vcombine.low %v1216, %v1232
        %v1273 = vcombine.high %v1216, %v1232
        %v1275 = vunpack.c.l.s4 1934713408
        %v1276 = vunpack.c.0.s8 %v1275
        %v1277 = vlaneseq
        %v1278 = vshrl.u32 %v1277, 7
        %v1279 = vsub.s32 %v1276, %v1278
        %v1280 = vrot.slane %v1272, %v1279
        %v1282 = vunpack.c.l.s4 1934713408
        %v1283 = vunpack.c.0.s8 %v1282
        %v1284 = vlaneseq
        %v1285 = vshrl.u32 %v1284, 7
        %v1286 = vsub.s32 %v1283, %v1285
        %v1287 = vrot.slane %v1273, %v1286
        %v1288 = vcombine.low %v1223, %v1239
        %v1289 = vcombine.high %v1223, %v1239
        %v1291 = vunpack.c.l.s4 1934713408
        %v1292 = vunpack.c.0.s8 %v1291
        %v1293 = vlaneseq
        %v1294 = vshrl.u32 %v1293, 7
        %v1295 = vsub.s32 %v1292, %v1294
        %v1296 = vrot.slane %v1288, %v1295
        %v1298 = vunpack.c.l.s4 1934713408
        %v1299 = vunpack.c.0.s8 %v1298
        %v1300 = vlaneseq
        %v1301 = vshrl.u32 %v1300, 7
        %v1302 = vsub.s32 %v1299, %v1301
        %v1303 = vrot.slane %v1289, %v1302
        %v1304 = vcombine.low %v1248, %v1264
        %v1305 = vcombine.high %v1248, %v1264
        %v1307 = vunpack.c.l.s4 1934713408
        %v1308 = vunpack.c.0.s8 %v1307
        %v1309 = vlaneseq
        %v1310 = vshrl.u32 %v1309, 7
        %v1311 = vsub.s32 %v1308, %v1310
        %v1312 = vrot.slane %v1304, %v1311
        %v1314 = vunpack.c.l.s4 1934713408
        %v1315 = vunpack.c.0.s8 %v1314
        %v1316 = vlaneseq
        %v1317 = vshrl.u32 %v1316, 7
        %v1318 = vsub.s32 %v1315, %v1317
        %v1319 = vrot.slane %v1305, %v1318
        %v1320 = vcombine.low %v1255, %v1271
        %v1321 = vcombine.high %v1255, %v1271
        %v1323 = vunpack.c.l.s4 1934713408
        %v1324 = vunpack.c.0.s8 %v1323
        %v1325 = vlaneseq
        %v1326 = vshrl.u32 %v1325, 7
        %v1327 = vsub.s32 %v1324, %v1326
        %v1328 = vrot.slane %v1320, %v1327
        %v1330 = vunpack.c.l.s4 1934713408
        %v1331 = vunpack.c.0.s8 %v1330
        %v1332 = vlaneseq
        %v1333 = vshrl.u32 %v1332, 7
        %v1334 = vsub.s32 %v1331, %v1333
        %v1335 = vrot.slane %v1321, %v1334
        %v1336 = vcombine.low %v1280, %v1312
        %v1337 = vcombine.high %v1280, %v1312
        %v1338 = vcombine.low %v1287, %v1319
        %v1339 = vcombine.high %v1287, %v1319
        %v1340 = vcombine.low %v1296, %v1328
        %v1341 = vcombine.high %v1296, %v1328
        %v1342 = vcombine.low %v1303, %v1335
        %v1343 = vcombine.high %v1303, %v1335
        %v1344 = vcombine.low %v1163, %v1171
        %v1345 = vcombine.high %v1163, %v1171
        %v1347 = vunpack.c.l.s4 1983009808
        %v1348 = vunpack.c.0.s8 %v1347
        %v1349 = vlaneseq
        %v1350 = vshrl.u32 %v1349, 7
        %v1351 = vsub.s32 %v1348, %v1350
        %v1352 = vrot.slane %v1344, %v1351
        %v1354 = vunpack.c.l.s4 1983009808
        %v1355 = vunpack.c.0.s8 %v1354
        %v1356 = vlaneseq
        %v1357 = vshrl.u32 %v1356, 7
        %v1358 = vsub.s32 %v1355, %v1357
        %v1359 = vrot.slane %v1345, %v1358
        %v1360 = vcombine.low %v1167, %v1175
        %v1361 = vcombine.high %v1167, %v1175
        %v1363 = vunpack.c.l.s4 1983009808
        %v1364 = vunpack.c.0.s8 %v1363
        %v1365 = vlaneseq
        %v1366 = vshrl.u32 %v1365, 7
        %v1367 = vsub.s32 %v1364, %v1366
        %v1368 = vrot.slane %v1360, %v1367
        %v1370 = vunpack.c.l.s4 1983009808
        %v1371 = vunpack.c.0.s8 %v1370
        %v1372 = vlaneseq
        %v1373 = vshrl.u32 %v1372, 7
        %v1374 = vsub.s32 %v1371, %v1373
        %v1375 = vrot.slane %v1361, %v1374
        %v1376 = vcombine.low %v1179, %v1187
        %v1377 = vcombine.high %v1179, %v1187
        %v1379 = vunpack.c.l.s4 1983009808
        %v1380 = vunpack.c.0.s8 %v1379
        %v1381 = vlaneseq
        %v1382 = vshrl.u32 %v1381, 7
        %v1383 = vsub.s32 %v1380, %v1382
        %v1384 = vrot.slane %v1376, %v1383
        %v1386 = vunpack.c.l.s4 1983009808
        %v1387 = vunpack.c.0.s8 %v1386
        %v1388 = vlaneseq
        %v1389 = vshrl.u32 %v1388, 7
        %v1390 = vsub.s32 %v1387, %v1389
        %v1391 = vrot.slane %v1377, %v1390
        %v1392 = vcombine.low %v1183, %v1191
        %v1393 = vcombine.high %v1183, %v1191
        %v1395 = vunpack.c.l.s4 1983009808
        %v1396 = vunpack.c.0.s8 %v1395
        %v1397 = vlaneseq
        %v1398 = vshrl.u32 %v1397, 7
        %v1399 = vsub.s32 %v1396, %v1398
        %v1400 = vrot.slane %v1392, %v1399
        %v1402 = vunpack.c.l.s4 1983009808
        %v1403 = vunpack.c.0.s8 %v1402
        %v1404 = vlaneseq
        %v1405 = vshrl.u32 %v1404, 7
        %v1406 = vsub.s32 %v1403, %v1405
        %v1407 = vrot.slane %v1393, %v1406
        %v1408 = vcombine.low %v1352, %v1368
        %v1409 = vcombine.high %v1352, %v1368
        %v1411 = vunpack.c.l.s4 1934713408
        %v1412 = vunpack.c.0.s8 %v1411
        %v1413 = vlaneseq
        %v1414 = vshrl.u32 %v1413, 7
        %v1415 = vsub.s32 %v1412, %v1414
        %v1416 = vrot.slane %v1408, %v1415
        %v1418 = vunpack.c.l.s4 1934713408
        %v1419 = vunpack.c.0.s8 %v1418
        %v1420 = vlaneseq
        %v1421 = vshrl.u32 %v1420, 7
        %v1422 = vsub.s32 %v1419, %v1421
        %v1423 = vrot.slane %v1409, %v1422
        %v1424 = vcombine.low %v1359, %v1375
        %v1425 = vcombine.high %v1359, %v1375
        %v1427 = vunpack.c.l.s4 1934713408
        %v1428 = vunpack.c.0.s8 %v1427
        %v1429 = vlaneseq
        %v1430 = vshrl.u32 %v1429, 7
        %v1431 = vsub.s32 %v1428, %v1430
        %v1432 = vrot.slane %v1424, %v1431
        %v1434 = vunpack.c.l.s4 1934713408
        %v1435 = vunpack.c.0.s8 %v1434
        %v1436 = vlaneseq
        %v1437 = vshrl.u32 %v1436, 7
        %v1438 = vsub.s32 %v1435, %v1437
        %v1439 = vrot.slane %v1425, %v1438
        %v1440 = vcombine.low %v1384, %v1400
        %v1441 = vcombine.high %v1384, %v1400
        %v1443 = vunpack.c.l.s4 1934713408
        %v1444 = vunpack.c.0.s8 %v1443
        %v1445 = vlaneseq
        %v1446 = vshrl.u32 %v1445, 7
        %v1447 = vsub.s32 %v1444, %v1446
        %v1448 = vrot.slane %v1440, %v1447
        %v1450 = vunpack.c.l.s4 1934713408
        %v1451 = vunpack.c.0.s8 %v1450
        %v1452 = vlaneseq
        %v1453 = vshrl.u32 %v1452, 7
        %v1454 = vsub.s32 %v1451, %v1453
        %v1455 = vrot.slane %v1441, %v1454
        %v1456 = vcombine.low %v1391, %v1407
        %v1457 = vcombine.high %v1391, %v1407
        %v1459 = vunpack.c.l.s4 1934713408
        %v1460 = vunpack.c.0.s8 %v1459
        %v1461 = vlaneseq
        %v1462 = vshrl.u32 %v1461, 7
        %v1463 = vsub.s32 %v1460, %v1462
        %v1464 = vrot.slane %v1456, %v1463
        %v1466 = vunpack.c.l.s4 1934713408
        %v1467 = vunpack.c.0.s8 %v1466
        %v1468 = vlaneseq
        %v1469 = vshrl.u32 %v1468, 7
        %v1470 = vsub.s32 %v1467, %v1469
        %v1471 = vrot.slane %v1457, %v1470
        %v1472 = vcombine.low %v1416, %v1448
        %v1473 = vcombine.high %v1416, %v1448
        %v1474 = vcombine.low %v1423, %v1455
        %v1475 = vcombine.high %v1423, %v1455
        %v1476 = vcombine.low %v1432, %v1464
        %v1477 = vcombine.high %v1432, %v1464
        %v1478 = vcombine.low %v1439, %v1471
        %v1479 = vcombine.high %v1439, %v1471
        %1481 = vrot.lane.b32.xlu0 %v1337, 16
        %v1482 = vpop.permute.xlu0 %1481
        %1485 = vrot.lane.b32.xlu0 %v1338, 32
        %v1486 = vpop.permute.xlu0 %1485
        %1489 = vrot.lane.b32.xlu0 %v1339, 48
        %v1490 = vpop.permute.xlu0 %1489
        %1493 = vrot.lane.b32.xlu0 %v1340, 64
        %v1494 = vpop.permute.xlu0 %1493
        %1497 = vrot.lane.b32.xlu0 %v1341, 80
        %v1498 = vpop.permute.xlu0 %1497
        %1501 = vrot.lane.b32.xlu0 %v1342, 96
        %v1502 = vpop.permute.xlu0 %1501
        %1505 = vrot.lane.b32.xlu0 %v1343, 112
        %v1506 = vpop.permute.xlu0 %1505
        %1509 = vrot.lane.b32.xlu0 %v1473, 16
        %v1510 = vpop.permute.xlu0 %1509
        %1513 = vrot.lane.b32.xlu0 %v1474, 32
        %v1514 = vpop.permute.xlu0 %1513
        %1517 = vrot.lane.b32.xlu0 %v1475, 48
        %v1518 = vpop.permute.xlu0 %1517
        %1521 = vrot.lane.b32.xlu0 %v1476, 64
        %v1522 = vpop.permute.xlu0 %1521
        %1525 = vrot.lane.b32.xlu0 %v1477, 80
        %v1526 = vpop.permute.xlu0 %1525
        %1529 = vrot.lane.b32.xlu0 %v1478, 96
        %v1530 = vpop.permute.xlu0 %1529
        %1533 = vrot.lane.b32.xlu0 %v1479, 112
        %v1534 = vpop.permute.xlu0 %1533
        %v1536 = vsel %vm681, %v1336, %v1482
        %v1537 = vsel %vm683, %v1536, %v1486
        %v1538 = vsel %vm685, %v1537, %v1490
        %v1539 = vsel %vm687, %v1538, %v1494
        %v1540 = vsel %vm689, %v1539, %v1498
        %v1541 = vsel %vm691, %v1540, %v1502
        %v1542 = vsel %vm693, %v1541, %v1506
        %v1543 = vsel %vm681, %v1472, %v1510
        %v1544 = vsel %vm683, %v1543, %v1514
        %v1545 = vsel %vm685, %v1544, %v1518
        %v1546 = vsel %vm687, %v1545, %v1522
        %v1547 = vsel %vm689, %v1546, %v1526
        %v1548 = vsel %vm691, %v1547, %v1530
        %v1549 = vsel %vm693, %v1548, %v1534
        %1550 = vst [vmem:[#allocation3 + $0x20] sm:$0xff] %v1542
        %1551 = vst [vmem:[#allocation3 + $0x28] sm:$0xff] %v1549
        %v1552 = vld [vmem:[#allocation2 + $0x1] sm:$0xff]
        %v1553 = vld [vmem:[#allocation2 + $0x9] sm:$0xff]
        %v1554 = vld [vmem:[#allocation2 + $0x19] sm:$0xff]
        %v1555 = vld [vmem:[#allocation2 + $0x21] sm:$0xff]
        %v1556 = vld [vmem:[#allocation2 + $0x31] sm:$0xff]
        %v1557 = vld [vmem:[#allocation2 + $0x39] sm:$0xff]
        %v1558 = vld [vmem:[#allocation2 + $0x49] sm:$0xff]
        %v1559 = vld [vmem:[#allocation2 + $0x51] sm:$0xff]
        %v1560 = vld [vmem:[#allocation2 + $0x61] sm:$0xff]
        %v1561 = vld [vmem:[#allocation2 + $0x69] sm:$0xff]
        %v1562 = vld [vmem:[#allocation2 + $0x79] sm:$0xff]
        %v1563 = vld [vmem:[#allocation2 + $0x81] sm:$0xff]
        %v1564 = vld [vmem:[#allocation2 + $0x91] sm:$0xff]
        %v1565 = vld [vmem:[#allocation2 + $0x99] sm:$0xff]
        %v1566 = vld [vmem:[#allocation2 + $0xa9] sm:$0xff]
        %v1567 = vld [vmem:[#allocation2 + $0xb1] sm:$0xff]
        %v1568 = vcombine.low %v1552, %v1556
        %v1569 = vcombine.high %v1552, %v1556
        %v1571 = vunpack.c.l.s4 1983009808
        %v1572 = vunpack.c.0.s8 %v1571
        %v1573 = vlaneseq
        %v1574 = vshrl.u32 %v1573, 7
        %v1575 = vsub.s32 %v1572, %v1574
        %v1576 = vrot.slane %v1568, %v1575
        %v1578 = vunpack.c.l.s4 1983009808
        %v1579 = vunpack.c.0.s8 %v1578
        %v1580 = vlaneseq
        %v1581 = vshrl.u32 %v1580, 7
        %v1582 = vsub.s32 %v1579, %v1581
        %v1583 = vrot.slane %v1569, %v1582
        %v1584 = vcombine.low %v1554, %v1558
        %v1585 = vcombine.high %v1554, %v1558
        %v1587 = vunpack.c.l.s4 1983009808
        %v1588 = vunpack.c.0.s8 %v1587
        %v1589 = vlaneseq
        %v1590 = vshrl.u32 %v1589, 7
        %v1591 = vsub.s32 %v1588, %v1590
        %v1592 = vrot.slane %v1584, %v1591
        %v1594 = vunpack.c.l.s4 1983009808
        %v1595 = vunpack.c.0.s8 %v1594
        %v1596 = vlaneseq
        %v1597 = vshrl.u32 %v1596, 7
        %v1598 = vsub.s32 %v1595, %v1597
        %v1599 = vrot.slane %v1585, %v1598
        %v1600 = vcombine.low %v1560, %v1564
        %v1601 = vcombine.high %v1560, %v1564
        %v1603 = vunpack.c.l.s4 1983009808
        %v1604 = vunpack.c.0.s8 %v1603
        %v1605 = vlaneseq
        %v1606 = vshrl.u32 %v1605, 7
        %v1607 = vsub.s32 %v1604, %v1606
        %v1608 = vrot.slane %v1600, %v1607
        %v1610 = vunpack.c.l.s4 1983009808
        %v1611 = vunpack.c.0.s8 %v1610
        %v1612 = vlaneseq
        %v1613 = vshrl.u32 %v1612, 7
        %v1614 = vsub.s32 %v1611, %v1613
        %v1615 = vrot.slane %v1601, %v1614
        %v1616 = vcombine.low %v1562, %v1566
        %v1617 = vcombine.high %v1562, %v1566
        %v1619 = vunpack.c.l.s4 1983009808
        %v1620 = vunpack.c.0.s8 %v1619
        %v1621 = vlaneseq
        %v1622 = vshrl.u32 %v1621, 7
        %v1623 = vsub.s32 %v1620, %v1622
        %v1624 = vrot.slane %v1616, %v1623
        %v1626 = vunpack.c.l.s4 1983009808
        %v1627 = vunpack.c.0.s8 %v1626
        %v1628 = vlaneseq
        %v1629 = vshrl.u32 %v1628, 7
        %v1630 = vsub.s32 %v1627, %v1629
        %v1631 = vrot.slane %v1617, %v1630
        %v1632 = vcombine.low %v1576, %v1592
        %v1633 = vcombine.high %v1576, %v1592
        %v1635 = vunpack.c.l.s4 1934713408
        %v1636 = vunpack.c.0.s8 %v1635
        %v1637 = vlaneseq
        %v1638 = vshrl.u32 %v1637, 7
        %v1639 = vsub.s32 %v1636, %v1638
        %v1640 = vrot.slane %v1632, %v1639
        %v1642 = vunpack.c.l.s4 1934713408
        %v1643 = vunpack.c.0.s8 %v1642
        %v1644 = vlaneseq
        %v1645 = vshrl.u32 %v1644, 7
        %v1646 = vsub.s32 %v1643, %v1645
        %v1647 = vrot.slane %v1633, %v1646
        %v1648 = vcombine.low %v1583, %v1599
        %v1649 = vcombine.high %v1583, %v1599
        %v1651 = vunpack.c.l.s4 1934713408
        %v1652 = vunpack.c.0.s8 %v1651
        %v1653 = vlaneseq
        %v1654 = vshrl.u32 %v1653, 7
        %v1655 = vsub.s32 %v1652, %v1654
        %v1656 = vrot.slane %v1648, %v1655
        %v1658 = vunpack.c.l.s4 1934713408
        %v1659 = vunpack.c.0.s8 %v1658
        %v1660 = vlaneseq
        %v1661 = vshrl.u32 %v1660, 7
        %v1662 = vsub.s32 %v1659, %v1661
        %v1663 = vrot.slane %v1649, %v1662
        %v1664 = vcombine.low %v1608, %v1624
        %v1665 = vcombine.high %v1608, %v1624
        %v1667 = vunpack.c.l.s4 1934713408
        %v1668 = vunpack.c.0.s8 %v1667
        %v1669 = vlaneseq
        %v1670 = vshrl.u32 %v1669, 7
        %v1671 = vsub.s32 %v1668, %v1670
        %v1672 = vrot.slane %v1664, %v1671
        %v1674 = vunpack.c.l.s4 1934713408
        %v1675 = vunpack.c.0.s8 %v1674
        %v1676 = vlaneseq
        %v1677 = vshrl.u32 %v1676, 7
        %v1678 = vsub.s32 %v1675, %v1677
        %v1679 = vrot.slane %v1665, %v1678
        %v1680 = vcombine.low %v1615, %v1631
        %v1681 = vcombine.high %v1615, %v1631
        %v1683 = vunpack.c.l.s4 1934713408
        %v1684 = vunpack.c.0.s8 %v1683
        %v1685 = vlaneseq
        %v1686 = vshrl.u32 %v1685, 7
        %v1687 = vsub.s32 %v1684, %v1686
        %v1688 = vrot.slane %v1680, %v1687
        %v1690 = vunpack.c.l.s4 1934713408
        %v1691 = vunpack.c.0.s8 %v1690
        %v1692 = vlaneseq
        %v1693 = vshrl.u32 %v1692, 7
        %v1694 = vsub.s32 %v1691, %v1693
        %v1695 = vrot.slane %v1681, %v1694
        %v1696 = vcombine.low %v1640, %v1672
        %v1697 = vcombine.high %v1640, %v1672
        %v1698 = vcombine.low %v1647, %v1679
        %v1699 = vcombine.high %v1647, %v1679
        %v1700 = vcombine.low %v1656, %v1688
        %v1701 = vcombine.high %v1656, %v1688
        %v1702 = vcombine.low %v1663, %v1695
        %v1703 = vcombine.high %v1663, %v1695
        %v1704 = vcombine.low %v1553, %v1557
        %v1705 = vcombine.high %v1553, %v1557
        %v1707 = vunpack.c.l.s4 1983009808
        %v1708 = vunpack.c.0.s8 %v1707
        %v1709 = vlaneseq
        %v1710 = vshrl.u32 %v1709, 7
        %v1711 = vsub.s32 %v1708, %v1710
        %v1712 = vrot.slane %v1704, %v1711
        %v1714 = vunpack.c.l.s4 1983009808
        %v1715 = vunpack.c.0.s8 %v1714
        %v1716 = vlaneseq
        %v1717 = vshrl.u32 %v1716, 7
        %v1718 = vsub.s32 %v1715, %v1717
        %v1719 = vrot.slane %v1705, %v1718
        %v1720 = vcombine.low %v1555, %v1559
        %v1721 = vcombine.high %v1555, %v1559
        %v1723 = vunpack.c.l.s4 1983009808
        %v1724 = vunpack.c.0.s8 %v1723
        %v1725 = vlaneseq
        %v1726 = vshrl.u32 %v1725, 7
        %v1727 = vsub.s32 %v1724, %v1726
        %v1728 = vrot.slane %v1720, %v1727
        %v1730 = vunpack.c.l.s4 1983009808
        %v1731 = vunpack.c.0.s8 %v1730
        %v1732 = vlaneseq
        %v1733 = vshrl.u32 %v1732, 7
        %v1734 = vsub.s32 %v1731, %v1733
        %v1735 = vrot.slane %v1721, %v1734
        %v1736 = vcombine.low %v1561, %v1565
        %v1737 = vcombine.high %v1561, %v1565
        %v1739 = vunpack.c.l.s4 1983009808
        %v1740 = vunpack.c.0.s8 %v1739
        %v1741 = vlaneseq
        %v1742 = vshrl.u32 %v1741, 7
        %v1743 = vsub.s32 %v1740, %v1742
        %v1744 = vrot.slane %v1736, %v1743
        %v1746 = vunpack.c.l.s4 1983009808
        %v1747 = vunpack.c.0.s8 %v1746
        %v1748 = vlaneseq
        %v1749 = vshrl.u32 %v1748, 7
        %v1750 = vsub.s32 %v1747, %v1749
        %v1751 = vrot.slane %v1737, %v1750
        %v1752 = vcombine.low %v1563, %v1567
        %v1753 = vcombine.high %v1563, %v1567
        %v1755 = vunpack.c.l.s4 1983009808
        %v1756 = vunpack.c.0.s8 %v1755
        %v1757 = vlaneseq
        %v1758 = vshrl.u32 %v1757, 7
        %v1759 = vsub.s32 %v1756, %v1758
        %v1760 = vrot.slane %v1752, %v1759
        %v1762 = vunpack.c.l.s4 1983009808
        %v1763 = vunpack.c.0.s8 %v1762
        %v1764 = vlaneseq
        %v1765 = vshrl.u32 %v1764, 7
        %v1766 = vsub.s32 %v1763, %v1765
        %v1767 = vrot.slane %v1753, %v1766
        %v1768 = vcombine.low %v1712, %v1728
        %v1769 = vcombine.high %v1712, %v1728
        %v1771 = vunpack.c.l.s4 1934713408
        %v1772 = vunpack.c.0.s8 %v1771
        %v1773 = vlaneseq
        %v1774 = vshrl.u32 %v1773, 7
        %v1775 = vsub.s32 %v1772, %v1774
        %v1776 = vrot.slane %v1768, %v1775
        %v1778 = vunpack.c.l.s4 1934713408
        %v1779 = vunpack.c.0.s8 %v1778
        %v1780 = vlaneseq
        %v1781 = vshrl.u32 %v1780, 7
        %v1782 = vsub.s32 %v1779, %v1781
        %v1783 = vrot.slane %v1769, %v1782
        %v1784 = vcombine.low %v1719, %v1735
        %v1785 = vcombine.high %v1719, %v1735
        %v1787 = vunpack.c.l.s4 1934713408
        %v1788 = vunpack.c.0.s8 %v1787
        %v1789 = vlaneseq
        %v1790 = vshrl.u32 %v1789, 7
        %v1791 = vsub.s32 %v1788, %v1790
        %v1792 = vrot.slane %v1784, %v1791
        %v1794 = vunpack.c.l.s4 1934713408
        %v1795 = vunpack.c.0.s8 %v1794
        %v1796 = vlaneseq
        %v1797 = vshrl.u32 %v1796, 7
        %v1798 = vsub.s32 %v1795, %v1797
        %v1799 = vrot.slane %v1785, %v1798
        %v1800 = vcombine.low %v1744, %v1760
        %v1801 = vcombine.high %v1744, %v1760
        %v1803 = vunpack.c.l.s4 1934713408
        %v1804 = vunpack.c.0.s8 %v1803
        %v1805 = vlaneseq
        %v1806 = vshrl.u32 %v1805, 7
        %v1807 = vsub.s32 %v1804, %v1806
        %v1808 = vrot.slane %v1800, %v1807
        %v1810 = vunpack.c.l.s4 1934713408
        %v1811 = vunpack.c.0.s8 %v1810
        %v1812 = vlaneseq
        %v1813 = vshrl.u32 %v1812, 7
        %v1814 = vsub.s32 %v1811, %v1813
        %v1815 = vrot.slane %v1801, %v1814
        %v1816 = vcombine.low %v1751, %v1767
        %v1817 = vcombine.high %v1751, %v1767
        %v1819 = vunpack.c.l.s4 1934713408
        %v1820 = vunpack.c.0.s8 %v1819
        %v1821 = vlaneseq
        %v1822 = vshrl.u32 %v1821, 7
        %v1823 = vsub.s32 %v1820, %v1822
        %v1824 = vrot.slane %v1816, %v1823
        %v1826 = vunpack.c.l.s4 1934713408
        %v1827 = vunpack.c.0.s8 %v1826
        %v1828 = vlaneseq
        %v1829 = vshrl.u32 %v1828, 7
        %v1830 = vsub.s32 %v1827, %v1829
        %v1831 = vrot.slane %v1817, %v1830
        %v1832 = vcombine.low %v1776, %v1808
        %v1833 = vcombine.high %v1776, %v1808
        %v1834 = vcombine.low %v1783, %v1815
        %v1835 = vcombine.high %v1783, %v1815
        %v1836 = vcombine.low %v1792, %v1824
        %v1837 = vcombine.high %v1792, %v1824
        %v1838 = vcombine.low %v1799, %v1831
        %v1839 = vcombine.high %v1799, %v1831
        %1841 = vrot.lane.b32.xlu0 %v1697, 16
        %v1842 = vpop.permute.xlu0 %1841
        %1845 = vrot.lane.b32.xlu0 %v1698, 32
        %v1846 = vpop.permute.xlu0 %1845
        %1849 = vrot.lane.b32.xlu0 %v1699, 48
        %v1850 = vpop.permute.xlu0 %1849
        %1853 = vrot.lane.b32.xlu0 %v1700, 64
        %v1854 = vpop.permute.xlu0 %1853
        %1857 = vrot.lane.b32.xlu0 %v1701, 80
        %v1858 = vpop.permute.xlu0 %1857
        %1861 = vrot.lane.b32.xlu0 %v1702, 96
        %v1862 = vpop.permute.xlu0 %1861
        %1865 = vrot.lane.b32.xlu0 %v1703, 112
        %v1866 = vpop.permute.xlu0 %1865
        %1869 = vrot.lane.b32.xlu0 %v1833, 16
        %v1870 = vpop.permute.xlu0 %1869
        %1873 = vrot.lane.b32.xlu0 %v1834, 32
        %v1874 = vpop.permute.xlu0 %1873
        %1877 = vrot.lane.b32.xlu0 %v1835, 48
        %v1878 = vpop.permute.xlu0 %1877
        %1881 = vrot.lane.b32.xlu0 %v1836, 64
        %v1882 = vpop.permute.xlu0 %1881
        %1885 = vrot.lane.b32.xlu0 %v1837, 80
        %v1886 = vpop.permute.xlu0 %1885
        %1889 = vrot.lane.b32.xlu0 %v1838, 96
        %v1890 = vpop.permute.xlu0 %1889
        %1893 = vrot.lane.b32.xlu0 %v1839, 112
        %v1894 = vpop.permute.xlu0 %1893
        %v1896 = vsel %vm681, %v1696, %v1842
        %v1897 = vsel %vm683, %v1896, %v1846
        %v1898 = vsel %vm685, %v1897, %v1850
        %v1899 = vsel %vm687, %v1898, %v1854
        %v1900 = vsel %vm689, %v1899, %v1858
        %v1901 = vsel %vm691, %v1900, %v1862
        %v1902 = vsel %vm693, %v1901, %v1866
        %v1903 = vsel %vm681, %v1832, %v1870
        %v1904 = vsel %vm683, %v1903, %v1874
        %v1905 = vsel %vm685, %v1904, %v1878
        %v1906 = vsel %vm687, %v1905, %v1882
        %v1907 = vsel %vm689, %v1906, %v1886
        %v1908 = vsel %vm691, %v1907, %v1890
        %v1909 = vsel %vm693, %v1908, %v1894
        %1910 = vst [vmem:[#allocation3 + $0x30] sm:$0xff] %v1902
        %1911 = vst [vmem:[#allocation3 + $0x38] sm:$0xff] %v1909
        %v1912 = vld [vmem:[#allocation2 + $0x1] sm:$0xff]
        %v1913 = vld [vmem:[#allocation2 + $0x9] sm:$0xff]
        %v1914 = vld [vmem:[#allocation2 + $0x19] sm:$0xff]
        %v1915 = vld [vmem:[#allocation2 + $0x21] sm:$0xff]
        %v1916 = vld [vmem:[#allocation2 + $0x31] sm:$0xff]
        %v1917 = vld [vmem:[#allocation2 + $0x39] sm:$0xff]
        %v1918 = vld [vmem:[#allocation2 + $0x49] sm:$0xff]
        %v1919 = vld [vmem:[#allocation2 + $0x51] sm:$0xff]
        %v1920 = vld [vmem:[#allocation2 + $0x61] sm:$0xff]
        %v1921 = vld [vmem:[#allocation2 + $0x69] sm:$0xff]
        %v1922 = vld [vmem:[#allocation2 + $0x79] sm:$0xff]
        %v1923 = vld [vmem:[#allocation2 + $0x81] sm:$0xff]
        %v1924 = vld [vmem:[#allocation2 + $0x91] sm:$0xff]
        %v1925 = vld [vmem:[#allocation2 + $0x99] sm:$0xff]
        %v1926 = vld [vmem:[#allocation2 + $0xa9] sm:$0xff]
        %v1927 = vld [vmem:[#allocation2 + $0xb1] sm:$0xff]
        %1944 = vrot.lane.b32.xlu0 %v1912, 127
        %v1945 = vpop.permute.xlu0 %1944
        %1946 = vrot.lane.b32.xlu0 %v1913, 127
        %v1947 = vpop.permute.xlu0 %1946
        %1948 = vrot.lane.b32.xlu0 %v1914, 127
        %v1949 = vpop.permute.xlu0 %1948
        %1950 = vrot.lane.b32.xlu0 %v1915, 127
        %v1951 = vpop.permute.xlu0 %1950
        %1952 = vrot.lane.b32.xlu0 %v1916, 127
        %v1953 = vpop.permute.xlu0 %1952
        %1954 = vrot.lane.b32.xlu0 %v1917, 127
        %v1955 = vpop.permute.xlu0 %1954
        %1956 = vrot.lane.b32.xlu0 %v1918, 127
        %v1957 = vpop.permute.xlu0 %1956
        %1958 = vrot.lane.b32.xlu0 %v1919, 127
        %v1959 = vpop.permute.xlu0 %1958
        %1960 = vrot.lane.b32.xlu0 %v1920, 127
        %v1961 = vpop.permute.xlu0 %1960
        %1962 = vrot.lane.b32.xlu0 %v1921, 127
        %v1963 = vpop.permute.xlu0 %1962
        %1964 = vrot.lane.b32.xlu0 %v1922, 127
        %v1965 = vpop.permute.xlu0 %1964
        %1966 = vrot.lane.b32.xlu0 %v1923, 127
        %v1967 = vpop.permute.xlu0 %1966
        %1968 = vrot.lane.b32.xlu0 %v1924, 127
        %v1969 = vpop.permute.xlu0 %1968
        %1970 = vrot.lane.b32.xlu0 %v1925, 127
        %v1971 = vpop.permute.xlu0 %1970
        %1972 = vrot.lane.b32.xlu0 %v1926, 127
        %v1973 = vpop.permute.xlu0 %1972
        %1974 = vrot.lane.b32.xlu0 %v1927, 127
        %v1975 = vpop.permute.xlu0 %1974
        %v1992 = vcombine.low %v1945, %v1953
        %v1993 = vcombine.high %v1945, %v1953
        %v1995 = vunpack.c.l.s4 1983009808
        %v1996 = vunpack.c.0.s8 %v1995
        %v1997 = vlaneseq
        %v1998 = vshrl.u32 %v1997, 7
        %v1999 = vsub.s32 %v1996, %v1998
        %v2000 = vrot.slane %v1992, %v1999
        %v2002 = vunpack.c.l.s4 1983009808
        %v2003 = vunpack.c.0.s8 %v2002
        %v2004 = vlaneseq
        %v2005 = vshrl.u32 %v2004, 7
        %v2006 = vsub.s32 %v2003, %v2005
        %v2007 = vrot.slane %v1993, %v2006
        %v2008 = vcombine.low %v1949, %v1957
        %v2009 = vcombine.high %v1949, %v1957
        %v2011 = vunpack.c.l.s4 1983009808
        %v2012 = vunpack.c.0.s8 %v2011
        %v2013 = vlaneseq
        %v2014 = vshrl.u32 %v2013, 7
        %v2015 = vsub.s32 %v2012, %v2014
        %v2016 = vrot.slane %v2008, %v2015
        %v2018 = vunpack.c.l.s4 1983009808
        %v2019 = vunpack.c.0.s8 %v2018
        %v2020 = vlaneseq
        %v2021 = vshrl.u32 %v2020, 7
        %v2022 = vsub.s32 %v2019, %v2021
        %v2023 = vrot.slane %v2009, %v2022
        %v2024 = vcombine.low %v1961, %v1969
        %v2025 = vcombine.high %v1961, %v1969
        %v2027 = vunpack.c.l.s4 1983009808
        %v2028 = vunpack.c.0.s8 %v2027
        %v2029 = vlaneseq
        %v2030 = vshrl.u32 %v2029, 7
        %v2031 = vsub.s32 %v2028, %v2030
        %v2032 = vrot.slane %v2024, %v2031
        %v2034 = vunpack.c.l.s4 1983009808
        %v2035 = vunpack.c.0.s8 %v2034
        %v2036 = vlaneseq
        %v2037 = vshrl.u32 %v2036, 7
        %v2038 = vsub.s32 %v2035, %v2037
        %v2039 = vrot.slane %v2025, %v2038
        %v2040 = vcombine.low %v1965, %v1973
        %v2041 = vcombine.high %v1965, %v1973
        %v2043 = vunpack.c.l.s4 1983009808
        %v2044 = vunpack.c.0.s8 %v2043
        %v2045 = vlaneseq
        %v2046 = vshrl.u32 %v2045, 7
        %v2047 = vsub.s32 %v2044, %v2046
        %v2048 = vrot.slane %v2040, %v2047
        %v2050 = vunpack.c.l.s4 1983009808
        %v2051 = vunpack.c.0.s8 %v2050
        %v2052 = vlaneseq
        %v2053 = vshrl.u32 %v2052, 7
        %v2054 = vsub.s32 %v2051, %v2053
        %v2055 = vrot.slane %v2041, %v2054
        %v2056 = vcombine.low %v2000, %v2016
        %v2057 = vcombine.high %v2000, %v2016
        %v2059 = vunpack.c.l.s4 1934713408
        %v2060 = vunpack.c.0.s8 %v2059
        %v2061 = vlaneseq
        %v2062 = vshrl.u32 %v2061, 7
        %v2063 = vsub.s32 %v2060, %v2062
        %v2064 = vrot.slane %v2056, %v2063
        %v2066 = vunpack.c.l.s4 1934713408
        %v2067 = vunpack.c.0.s8 %v2066
        %v2068 = vlaneseq
        %v2069 = vshrl.u32 %v2068, 7
        %v2070 = vsub.s32 %v2067, %v2069
        %v2071 = vrot.slane %v2057, %v2070
        %v2072 = vcombine.low %v2007, %v2023
        %v2073 = vcombine.high %v2007, %v2023
        %v2075 = vunpack.c.l.s4 1934713408
        %v2076 = vunpack.c.0.s8 %v2075
        %v2077 = vlaneseq
        %v2078 = vshrl.u32 %v2077, 7
        %v2079 = vsub.s32 %v2076, %v2078
        %v2080 = vrot.slane %v2072, %v2079
        %v2082 = vunpack.c.l.s4 1934713408
        %v2083 = vunpack.c.0.s8 %v2082
        %v2084 = vlaneseq
        %v2085 = vshrl.u32 %v2084, 7
        %v2086 = vsub.s32 %v2083, %v2085
        %v2087 = vrot.slane %v2073, %v2086
        %v2088 = vcombine.low %v2032, %v2048
        %v2089 = vcombine.high %v2032, %v2048
        %v2091 = vunpack.c.l.s4 1934713408
        %v2092 = vunpack.c.0.s8 %v2091
        %v2093 = vlaneseq
        %v2094 = vshrl.u32 %v2093, 7
        %v2095 = vsub.s32 %v2092, %v2094
        %v2096 = vrot.slane %v2088, %v2095
        %v2098 = vunpack.c.l.s4 1934713408
        %v2099 = vunpack.c.0.s8 %v2098
        %v2100 = vlaneseq
        %v2101 = vshrl.u32 %v2100, 7
        %v2102 = vsub.s32 %v2099, %v2101
        %v2103 = vrot.slane %v2089, %v2102
        %v2104 = vcombine.low %v2039, %v2055
        %v2105 = vcombine.high %v2039, %v2055
        %v2107 = vunpack.c.l.s4 1934713408
        %v2108 = vunpack.c.0.s8 %v2107
        %v2109 = vlaneseq
        %v2110 = vshrl.u32 %v2109, 7
        %v2111 = vsub.s32 %v2108, %v2110
        %v2112 = vrot.slane %v2104, %v2111
        %v2114 = vunpack.c.l.s4 1934713408
        %v2115 = vunpack.c.0.s8 %v2114
        %v2116 = vlaneseq
        %v2117 = vshrl.u32 %v2116, 7
        %v2118 = vsub.s32 %v2115, %v2117
        %v2119 = vrot.slane %v2105, %v2118
        %v2120 = vcombine.low %v2064, %v2096
        %v2121 = vcombine.high %v2064, %v2096
        %v2122 = vcombine.low %v2071, %v2103
        %v2123 = vcombine.high %v2071, %v2103
        %v2124 = vcombine.low %v2080, %v2112
        %v2125 = vcombine.high %v2080, %v2112
        %v2126 = vcombine.low %v2087, %v2119
        %v2127 = vcombine.high %v2087, %v2119
        %v2128 = vcombine.low %v1947, %v1955
        %v2129 = vcombine.high %v1947, %v1955
        %v2131 = vunpack.c.l.s4 1983009808
        %v2132 = vunpack.c.0.s8 %v2131
        %v2133 = vlaneseq
        %v2134 = vshrl.u32 %v2133, 7
        %v2135 = vsub.s32 %v2132, %v2134
        %v2136 = vrot.slane %v2128, %v2135
        %v2138 = vunpack.c.l.s4 1983009808
        %v2139 = vunpack.c.0.s8 %v2138
        %v2140 = vlaneseq
        %v2141 = vshrl.u32 %v2140, 7
        %v2142 = vsub.s32 %v2139, %v2141
        %v2143 = vrot.slane %v2129, %v2142
        %v2144 = vcombine.low %v1951, %v1959
        %v2145 = vcombine.high %v1951, %v1959
        %v2147 = vunpack.c.l.s4 1983009808
        %v2148 = vunpack.c.0.s8 %v2147
        %v2149 = vlaneseq
        %v2150 = vshrl.u32 %v2149, 7
        %v2151 = vsub.s32 %v2148, %v2150
        %v2152 = vrot.slane %v2144, %v2151
        %v2154 = vunpack.c.l.s4 1983009808
        %v2155 = vunpack.c.0.s8 %v2154
        %v2156 = vlaneseq
        %v2157 = vshrl.u32 %v2156, 7
        %v2158 = vsub.s32 %v2155, %v2157
        %v2159 = vrot.slane %v2145, %v2158
        %v2160 = vcombine.low %v1963, %v1971
        %v2161 = vcombine.high %v1963, %v1971
        %v2163 = vunpack.c.l.s4 1983009808
        %v2164 = vunpack.c.0.s8 %v2163
        %v2165 = vlaneseq
        %v2166 = vshrl.u32 %v2165, 7
        %v2167 = vsub.s32 %v2164, %v2166
        %v2168 = vrot.slane %v2160, %v2167
        %v2170 = vunpack.c.l.s4 1983009808
        %v2171 = vunpack.c.0.s8 %v2170
        %v2172 = vlaneseq
        %v2173 = vshrl.u32 %v2172, 7
        %v2174 = vsub.s32 %v2171, %v2173
        %v2175 = vrot.slane %v2161, %v2174
        %v2176 = vcombine.low %v1967, %v1975
        %v2177 = vcombine.high %v1967, %v1975
        %v2179 = vunpack.c.l.s4 1983009808
        %v2180 = vunpack.c.0.s8 %v2179
        %v2181 = vlaneseq
        %v2182 = vshrl.u32 %v2181, 7
        %v2183 = vsub.s32 %v2180, %v2182
        %v2184 = vrot.slane %v2176, %v2183
        %v2186 = vunpack.c.l.s4 1983009808
        %v2187 = vunpack.c.0.s8 %v2186
        %v2188 = vlaneseq
        %v2189 = vshrl.u32 %v2188, 7
        %v2190 = vsub.s32 %v2187, %v2189
        %v2191 = vrot.slane %v2177, %v2190
        %v2192 = vcombine.low %v2136, %v2152
        %v2193 = vcombine.high %v2136, %v2152
        %v2195 = vunpack.c.l.s4 1934713408
        %v2196 = vunpack.c.0.s8 %v2195
        %v2197 = vlaneseq
        %v2198 = vshrl.u32 %v2197, 7
        %v2199 = vsub.s32 %v2196, %v2198
        %v2200 = vrot.slane %v2192, %v2199
        %v2202 = vunpack.c.l.s4 1934713408
        %v2203 = vunpack.c.0.s8 %v2202
        %v2204 = vlaneseq
        %v2205 = vshrl.u32 %v2204, 7
        %v2206 = vsub.s32 %v2203, %v2205
        %v2207 = vrot.slane %v2193, %v2206
        %v2208 = vcombine.low %v2143, %v2159
        %v2209 = vcombine.high %v2143, %v2159
        %v2211 = vunpack.c.l.s4 1934713408
        %v2212 = vunpack.c.0.s8 %v2211
        %v2213 = vlaneseq
        %v2214 = vshrl.u32 %v2213, 7
        %v2215 = vsub.s32 %v2212, %v2214
        %v2216 = vrot.slane %v2208, %v2215
        %v2218 = vunpack.c.l.s4 1934713408
        %v2219 = vunpack.c.0.s8 %v2218
        %v2220 = vlaneseq
        %v2221 = vshrl.u32 %v2220, 7
        %v2222 = vsub.s32 %v2219, %v2221
        %v2223 = vrot.slane %v2209, %v2222
        %v2224 = vcombine.low %v2168, %v2184
        %v2225 = vcombine.high %v2168, %v2184
        %v2227 = vunpack.c.l.s4 1934713408
        %v2228 = vunpack.c.0.s8 %v2227
        %v2229 = vlaneseq
        %v2230 = vshrl.u32 %v2229, 7
        %v2231 = vsub.s32 %v2228, %v2230
        %v2232 = vrot.slane %v2224, %v2231
        %v2234 = vunpack.c.l.s4 1934713408
        %v2235 = vunpack.c.0.s8 %v2234
        %v2236 = vlaneseq
        %v2237 = vshrl.u32 %v2236, 7
        %v2238 = vsub.s32 %v2235, %v2237
        %v2239 = vrot.slane %v2225, %v2238
        %v2240 = vcombine.low %v2175, %v2191
        %v2241 = vcombine.high %v2175, %v2191
        %v2243 = vunpack.c.l.s4 1934713408
        %v2244 = vunpack.c.0.s8 %v2243
        %v2245 = vlaneseq
        %v2246 = vshrl.u32 %v2245, 7
        %v2247 = vsub.s32 %v2244, %v2246
        %v2248 = vrot.slane %v2240, %v2247
        %v2250 = vunpack.c.l.s4 1934713408
        %v2251 = vunpack.c.0.s8 %v2250
        %v2252 = vlaneseq
        %v2253 = vshrl.u32 %v2252, 7
        %v2254 = vsub.s32 %v2251, %v2253
        %v2255 = vrot.slane %v2241, %v2254
        %v2256 = vcombine.low %v2200, %v2232
        %v2257 = vcombine.high %v2200, %v2232
        %v2258 = vcombine.low %v2207, %v2239
        %v2259 = vcombine.high %v2207, %v2239
        %v2260 = vcombine.low %v2216, %v2248
        %v2261 = vcombine.high %v2216, %v2248
        %v2262 = vcombine.low %v2223, %v2255
        %v2263 = vcombine.high %v2223, %v2255
        %2265 = vrot.lane.b32.xlu0 %v2121, 16
        %v2266 = vpop.permute.xlu0 %2265
        %2269 = vrot.lane.b32.xlu0 %v2122, 32
        %v2270 = vpop.permute.xlu0 %2269
        %2273 = vrot.lane.b32.xlu0 %v2123, 48
        %v2274 = vpop.permute.xlu0 %2273
        %2277 = vrot.lane.b32.xlu0 %v2124, 64
        %v2278 = vpop.permute.xlu0 %2277
        %2281 = vrot.lane.b32.xlu0 %v2125, 80
        %v2282 = vpop.permute.xlu0 %2281
        %2285 = vrot.lane.b32.xlu0 %v2126, 96
        %v2286 = vpop.permute.xlu0 %2285
        %2289 = vrot.lane.b32.xlu0 %v2127, 112
        %v2290 = vpop.permute.xlu0 %2289
        %2293 = vrot.lane.b32.xlu0 %v2257, 16
        %v2294 = vpop.permute.xlu0 %2293
        %2297 = vrot.lane.b32.xlu0 %v2258, 32
        %v2298 = vpop.permute.xlu0 %2297
        %2301 = vrot.lane.b32.xlu0 %v2259, 48
        %v2302 = vpop.permute.xlu0 %2301
        %2305 = vrot.lane.b32.xlu0 %v2260, 64
        %v2306 = vpop.permute.xlu0 %2305
        %2309 = vrot.lane.b32.xlu0 %v2261, 80
        %v2310 = vpop.permute.xlu0 %2309
        %2313 = vrot.lane.b32.xlu0 %v2262, 96
        %v2314 = vpop.permute.xlu0 %2313
        %2317 = vrot.lane.b32.xlu0 %v2263, 112
        %v2318 = vpop.permute.xlu0 %2317
        %v2320 = vsel %vm681, %v2120, %v2266
        %v2321 = vsel %vm683, %v2320, %v2270
        %v2322 = vsel %vm685, %v2321, %v2274
        %v2323 = vsel %vm687, %v2322, %v2278
        %v2324 = vsel %vm689, %v2323, %v2282
        %v2325 = vsel %vm691, %v2324, %v2286
        %v2326 = vsel %vm693, %v2325, %v2290
        %v2327 = vsel %vm681, %v2256, %v2294
        %v2328 = vsel %vm683, %v2327, %v2298
        %v2329 = vsel %vm685, %v2328, %v2302
        %v2330 = vsel %vm687, %v2329, %v2306
        %v2331 = vsel %vm689, %v2330, %v2310
        %v2332 = vsel %vm691, %v2331, %v2314
        %v2333 = vsel %vm693, %v2332, %v2318
        %2334 = vst [vmem:[#allocation3 + $0x40] sm:$0xff] %v2326
        %2335 = vst [vmem:[#allocation3 + $0x48] sm:$0xff] %v2333
        %v2336 = vld [vmem:[#allocation2 + $0x1] sm:$0xff]
        %v2337 = vld [vmem:[#allocation2 + $0x9] sm:$0xff]
        %v2338 = vld [vmem:[#allocation2 + $0x19] sm:$0xff]
        %v2339 = vld [vmem:[#allocation2 + $0x21] sm:$0xff]
        %v2340 = vld [vmem:[#allocation2 + $0x31] sm:$0xff]
        %v2341 = vld [vmem:[#allocation2 + $0x39] sm:$0xff]
        %v2342 = vld [vmem:[#allocation2 + $0x49] sm:$0xff]
        %v2343 = vld [vmem:[#allocation2 + $0x51] sm:$0xff]
        %v2344 = vld [vmem:[#allocation2 + $0x61] sm:$0xff]
        %v2345 = vld [vmem:[#allocation2 + $0x69] sm:$0xff]
        %v2346 = vld [vmem:[#allocation2 + $0x79] sm:$0xff]
        %v2347 = vld [vmem:[#allocation2 + $0x81] sm:$0xff]
        %v2348 = vld [vmem:[#allocation2 + $0x91] sm:$0xff]
        %v2349 = vld [vmem:[#allocation2 + $0x99] sm:$0xff]
        %v2350 = vld [vmem:[#allocation2 + $0xa9] sm:$0xff]
        %v2351 = vld [vmem:[#allocation2 + $0xb1] sm:$0xff]
        %2368 = vrot.lane.b32.xlu0 %v2336, 126
        %v2369 = vpop.permute.xlu0 %2368
        %2370 = vrot.lane.b32.xlu0 %v2337, 126
        %v2371 = vpop.permute.xlu0 %2370
        %2372 = vrot.lane.b32.xlu0 %v2338, 126
        %v2373 = vpop.permute.xlu0 %2372
        %2374 = vrot.lane.b32.xlu0 %v2339, 126
        %v2375 = vpop.permute.xlu0 %2374
        %2376 = vrot.lane.b32.xlu0 %v2340, 126
        %v2377 = vpop.permute.xlu0 %2376
        %2378 = vrot.lane.b32.xlu0 %v2341, 126
        %v2379 = vpop.permute.xlu0 %2378
        %2380 = vrot.lane.b32.xlu0 %v2342, 126
        %v2381 = vpop.permute.xlu0 %2380
        %2382 = vrot.lane.b32.xlu0 %v2343, 126
        %v2383 = vpop.permute.xlu0 %2382
        %2384 = vrot.lane.b32.xlu0 %v2344, 126
        %v2385 = vpop.permute.xlu0 %2384
        %2386 = vrot.lane.b32.xlu0 %v2345, 126
        %v2387 = vpop.permute.xlu0 %2386
        %2388 = vrot.lane.b32.xlu0 %v2346, 126
        %v2389 = vpop.permute.xlu0 %2388
        %2390 = vrot.lane.b32.xlu0 %v2347, 126
        %v2391 = vpop.permute.xlu0 %2390
        %2392 = vrot.lane.b32.xlu0 %v2348, 126
        %v2393 = vpop.permute.xlu0 %2392
        %2394 = vrot.lane.b32.xlu0 %v2349, 126
        %v2395 = vpop.permute.xlu0 %2394
        %2396 = vrot.lane.b32.xlu0 %v2350, 126
        %v2397 = vpop.permute.xlu0 %2396
        %2398 = vrot.lane.b32.xlu0 %v2351, 126
        %v2399 = vpop.permute.xlu0 %2398
        %v2416 = vcombine.low %v2369, %v2377
        %v2417 = vcombine.high %v2369, %v2377
        %v2419 = vunpack.c.l.s4 1983009808
        %v2420 = vunpack.c.0.s8 %v2419
        %v2421 = vlaneseq
        %v2422 = vshrl.u32 %v2421, 7
        %v2423 = vsub.s32 %v2420, %v2422
        %v2424 = vrot.slane %v2416, %v2423
        %v2426 = vunpack.c.l.s4 1983009808
        %v2427 = vunpack.c.0.s8 %v2426
        %v2428 = vlaneseq
        %v2429 = vshrl.u32 %v2428, 7
        %v2430 = vsub.s32 %v2427, %v2429
        %v2431 = vrot.slane %v2417, %v2430
        %v2432 = vcombine.low %v2373, %v2381
        %v2433 = vcombine.high %v2373, %v2381
        %v2435 = vunpack.c.l.s4 1983009808
        %v2436 = vunpack.c.0.s8 %v2435
        %v2437 = vlaneseq
        %v2438 = vshrl.u32 %v2437, 7
        %v2439 = vsub.s32 %v2436, %v2438
        %v2440 = vrot.slane %v2432, %v2439
        %v2442 = vunpack.c.l.s4 1983009808
        %v2443 = vunpack.c.0.s8 %v2442
        %v2444 = vlaneseq
        %v2445 = vshrl.u32 %v2444, 7
        %v2446 = vsub.s32 %v2443, %v2445
        %v2447 = vrot.slane %v2433, %v2446
        %v2448 = vcombine.low %v2385, %v2393
        %v2449 = vcombine.high %v2385, %v2393
        %v2451 = vunpack.c.l.s4 1983009808
        %v2452 = vunpack.c.0.s8 %v2451
        %v2453 = vlaneseq
        %v2454 = vshrl.u32 %v2453, 7
        %v2455 = vsub.s32 %v2452, %v2454
        %v2456 = vrot.slane %v2448, %v2455
        %v2458 = vunpack.c.l.s4 1983009808
        %v2459 = vunpack.c.0.s8 %v2458
        %v2460 = vlaneseq
        %v2461 = vshrl.u32 %v2460, 7
        %v2462 = vsub.s32 %v2459, %v2461
        %v2463 = vrot.slane %v2449, %v2462
        %v2464 = vcombine.low %v2389, %v2397
        %v2465 = vcombine.high %v2389, %v2397
        %v2467 = vunpack.c.l.s4 1983009808
        %v2468 = vunpack.c.0.s8 %v2467
        %v2469 = vlaneseq
        %v2470 = vshrl.u32 %v2469, 7
        %v2471 = vsub.s32 %v2468, %v2470
        %v2472 = vrot.slane %v2464, %v2471
        %v2474 = vunpack.c.l.s4 1983009808
        %v2475 = vunpack.c.0.s8 %v2474
        %v2476 = vlaneseq
        %v2477 = vshrl.u32 %v2476, 7
        %v2478 = vsub.s32 %v2475, %v2477
        %v2479 = vrot.slane %v2465, %v2478
        %v2480 = vcombine.low %v2424, %v2440
        %v2481 = vcombine.high %v2424, %v2440
        %v2483 = vunpack.c.l.s4 1934713408
        %v2484 = vunpack.c.0.s8 %v2483
        %v2485 = vlaneseq
        %v2486 = vshrl.u32 %v2485, 7
        %v2487 = vsub.s32 %v2484, %v2486
        %v2488 = vrot.slane %v2480, %v2487
        %v2490 = vunpack.c.l.s4 1934713408
        %v2491 = vunpack.c.0.s8 %v2490
        %v2492 = vlaneseq
        %v2493 = vshrl.u32 %v2492, 7
        %v2494 = vsub.s32 %v2491, %v2493
        %v2495 = vrot.slane %v2481, %v2494
        %v2496 = vcombine.low %v2431, %v2447
        %v2497 = vcombine.high %v2431, %v2447
        %v2499 = vunpack.c.l.s4 1934713408
        %v2500 = vunpack.c.0.s8 %v2499
        %v2501 = vlaneseq
        %v2502 = vshrl.u32 %v2501, 7
        %v2503 = vsub.s32 %v2500, %v2502
        %v2504 = vrot.slane %v2496, %v2503
        %v2506 = vunpack.c.l.s4 1934713408
        %v2507 = vunpack.c.0.s8 %v2506
        %v2508 = vlaneseq
        %v2509 = vshrl.u32 %v2508, 7
        %v2510 = vsub.s32 %v2507, %v2509
        %v2511 = vrot.slane %v2497, %v2510
        %v2512 = vcombine.low %v2456, %v2472
        %v2513 = vcombine.high %v2456, %v2472
        %v2515 = vunpack.c.l.s4 1934713408
        %v2516 = vunpack.c.0.s8 %v2515
        %v2517 = vlaneseq
        %v2518 = vshrl.u32 %v2517, 7
        %v2519 = vsub.s32 %v2516, %v2518
        %v2520 = vrot.slane %v2512, %v2519
        %v2522 = vunpack.c.l.s4 1934713408
        %v2523 = vunpack.c.0.s8 %v2522
        %v2524 = vlaneseq
        %v2525 = vshrl.u32 %v2524, 7
        %v2526 = vsub.s32 %v2523, %v2525
        %v2527 = vrot.slane %v2513, %v2526
        %v2528 = vcombine.low %v2463, %v2479
        %v2529 = vcombine.high %v2463, %v2479
        %v2531 = vunpack.c.l.s4 1934713408
        %v2532 = vunpack.c.0.s8 %v2531
        %v2533 = vlaneseq
        %v2534 = vshrl.u32 %v2533, 7
        %v2535 = vsub.s32 %v2532, %v2534
        %v2536 = vrot.slane %v2528, %v2535
        %v2538 = vunpack.c.l.s4 1934713408
        %v2539 = vunpack.c.0.s8 %v2538
        %v2540 = vlaneseq
        %v2541 = vshrl.u32 %v2540, 7
        %v2542 = vsub.s32 %v2539, %v2541
        %v2543 = vrot.slane %v2529, %v2542
        %v2544 = vcombine.low %v2488, %v2520
        %v2545 = vcombine.high %v2488, %v2520
        %v2546 = vcombine.low %v2495, %v2527
        %v2547 = vcombine.high %v2495, %v2527
        %v2548 = vcombine.low %v2504, %v2536
        %v2549 = vcombine.high %v2504, %v2536
        %v2550 = vcombine.low %v2511, %v2543
        %v2551 = vcombine.high %v2511, %v2543
        %v2552 = vcombine.low %v2371, %v2379
        %v2553 = vcombine.high %v2371, %v2379
        %v2555 = vunpack.c.l.s4 1983009808
        %v2556 = vunpack.c.0.s8 %v2555
        %v2557 = vlaneseq
        %v2558 = vshrl.u32 %v2557, 7
        %v2559 = vsub.s32 %v2556, %v2558
        %v2560 = vrot.slane %v2552, %v2559
        %v2562 = vunpack.c.l.s4 1983009808
        %v2563 = vunpack.c.0.s8 %v2562
        %v2564 = vlaneseq
        %v2565 = vshrl.u32 %v2564, 7
        %v2566 = vsub.s32 %v2563, %v2565
        %v2567 = vrot.slane %v2553, %v2566
        %v2568 = vcombine.low %v2375, %v2383
        %v2569 = vcombine.high %v2375, %v2383
        %v2571 = vunpack.c.l.s4 1983009808
        %v2572 = vunpack.c.0.s8 %v2571
        %v2573 = vlaneseq
        %v2574 = vshrl.u32 %v2573, 7
        %v2575 = vsub.s32 %v2572, %v2574
        %v2576 = vrot.slane %v2568, %v2575
        %v2578 = vunpack.c.l.s4 1983009808
        %v2579 = vunpack.c.0.s8 %v2578
        %v2580 = vlaneseq
        %v2581 = vshrl.u32 %v2580, 7
        %v2582 = vsub.s32 %v2579, %v2581
        %v2583 = vrot.slane %v2569, %v2582
        %v2584 = vcombine.low %v2387, %v2395
        %v2585 = vcombine.high %v2387, %v2395
        %v2587 = vunpack.c.l.s4 1983009808
        %v2588 = vunpack.c.0.s8 %v2587
        %v2589 = vlaneseq
        %v2590 = vshrl.u32 %v2589, 7
        %v2591 = vsub.s32 %v2588, %v2590
        %v2592 = vrot.slane %v2584, %v2591
        %v2594 = vunpack.c.l.s4 1983009808
        %v2595 = vunpack.c.0.s8 %v2594
        %v2596 = vlaneseq
        %v2597 = vshrl.u32 %v2596, 7
        %v2598 = vsub.s32 %v2595, %v2597
        %v2599 = vrot.slane %v2585, %v2598
        %v2600 = vcombine.low %v2391, %v2399
        %v2601 = vcombine.high %v2391, %v2399
        %v2603 = vunpack.c.l.s4 1983009808
        %v2604 = vunpack.c.0.s8 %v2603
        %v2605 = vlaneseq
        %v2606 = vshrl.u32 %v2605, 7
        %v2607 = vsub.s32 %v2604, %v2606
        %v2608 = vrot.slane %v2600, %v2607
        %v2610 = vunpack.c.l.s4 1983009808
        %v2611 = vunpack.c.0.s8 %v2610
        %v2612 = vlaneseq
        %v2613 = vshrl.u32 %v2612, 7
        %v2614 = vsub.s32 %v2611, %v2613
        %v2615 = vrot.slane %v2601, %v2614
        %v2616 = vcombine.low %v2560, %v2576
        %v2617 = vcombine.high %v2560, %v2576
        %v2619 = vunpack.c.l.s4 1934713408
        %v2620 = vunpack.c.0.s8 %v2619
        %v2621 = vlaneseq
        %v2622 = vshrl.u32 %v2621, 7
        %v2623 = vsub.s32 %v2620, %v2622
        %v2624 = vrot.slane %v2616, %v2623
        %v2626 = vunpack.c.l.s4 1934713408
        %v2627 = vunpack.c.0.s8 %v2626
        %v2628 = vlaneseq
        %v2629 = vshrl.u32 %v2628, 7
        %v2630 = vsub.s32 %v2627, %v2629
        %v2631 = vrot.slane %v2617, %v2630
        %v2632 = vcombine.low %v2567, %v2583
        %v2633 = vcombine.high %v2567, %v2583
        %v2635 = vunpack.c.l.s4 1934713408
        %v2636 = vunpack.c.0.s8 %v2635
        %v2637 = vlaneseq
        %v2638 = vshrl.u32 %v2637, 7
        %v2639 = vsub.s32 %v2636, %v2638
        %v2640 = vrot.slane %v2632, %v2639
        %v2642 = vunpack.c.l.s4 1934713408
        %v2643 = vunpack.c.0.s8 %v2642
        %v2644 = vlaneseq
        %v2645 = vshrl.u32 %v2644, 7
        %v2646 = vsub.s32 %v2643, %v2645
        %v2647 = vrot.slane %v2633, %v2646
        %v2648 = vcombine.low %v2592, %v2608
        %v2649 = vcombine.high %v2592, %v2608
        %v2651 = vunpack.c.l.s4 1934713408
        %v2652 = vunpack.c.0.s8 %v2651
        %v2653 = vlaneseq
        %v2654 = vshrl.u32 %v2653, 7
        %v2655 = vsub.s32 %v2652, %v2654
        %v2656 = vrot.slane %v2648, %v2655
        %v2658 = vunpack.c.l.s4 1934713408
        %v2659 = vunpack.c.0.s8 %v2658
        %v2660 = vlaneseq
        %v2661 = vshrl.u32 %v2660, 7
        %v2662 = vsub.s32 %v2659, %v2661
        %v2663 = vrot.slane %v2649, %v2662
        %v2664 = vcombine.low %v2599, %v2615
        %v2665 = vcombine.high %v2599, %v2615
        %v2667 = vunpack.c.l.s4 1934713408
        %v2668 = vunpack.c.0.s8 %v2667
        %v2669 = vlaneseq
        %v2670 = vshrl.u32 %v2669, 7
        %v2671 = vsub.s32 %v2668, %v2670
        %v2672 = vrot.slane %v2664, %v2671
        %v2674 = vunpack.c.l.s4 1934713408
        %v2675 = vunpack.c.0.s8 %v2674
        %v2676 = vlaneseq
        %v2677 = vshrl.u32 %v2676, 7
        %v2678 = vsub.s32 %v2675, %v2677
        %v2679 = vrot.slane %v2665, %v2678
        %v2680 = vcombine.low %v2624, %v2656
        %v2681 = vcombine.high %v2624, %v2656
        %v2682 = vcombine.low %v2631, %v2663
        %v2683 = vcombine.high %v2631, %v2663
        %v2684 = vcombine.low %v2640, %v2672
        %v2685 = vcombine.high %v2640, %v2672
        %v2686 = vcombine.low %v2647, %v2679
        %v2687 = vcombine.high %v2647, %v2679
        %2689 = vrot.lane.b32.xlu0 %v2545, 16
        %v2690 = vpop.permute.xlu0 %2689
        %2693 = vrot.lane.b32.xlu0 %v2546, 32
        %v2694 = vpop.permute.xlu0 %2693
        %2697 = vrot.lane.b32.xlu0 %v2547, 48
        %v2698 = vpop.permute.xlu0 %2697
        %2701 = vrot.lane.b32.xlu0 %v2548, 64
        %v2702 = vpop.permute.xlu0 %2701
        %2705 = vrot.lane.b32.xlu0 %v2549, 80
        %v2706 = vpop.permute.xlu0 %2705
        %2709 = vrot.lane.b32.xlu0 %v2550, 96
        %v2710 = vpop.permute.xlu0 %2709
        %2713 = vrot.lane.b32.xlu0 %v2551, 112
        %v2714 = vpop.permute.xlu0 %2713
        %2717 = vrot.lane.b32.xlu0 %v2681, 16
        %v2718 = vpop.permute.xlu0 %2717
        %2721 = vrot.lane.b32.xlu0 %v2682, 32
        %v2722 = vpop.permute.xlu0 %2721
        %2725 = vrot.lane.b32.xlu0 %v2683, 48
        %v2726 = vpop.permute.xlu0 %2725
        %2729 = vrot.lane.b32.xlu0 %v2684, 64
        %v2730 = vpop.permute.xlu0 %2729
        %2733 = vrot.lane.b32.xlu0 %v2685, 80
        %v2734 = vpop.permute.xlu0 %2733
        %2737 = vrot.lane.b32.xlu0 %v2686, 96
        %v2738 = vpop.permute.xlu0 %2737
        %2741 = vrot.lane.b32.xlu0 %v2687, 112
        %v2742 = vpop.permute.xlu0 %2741
        %v2744 = vsel %vm681, %v2544, %v2690
        %v2745 = vsel %vm683, %v2744, %v2694
        %v2746 = vsel %vm685, %v2745, %v2698
        %v2747 = vsel %vm687, %v2746, %v2702
        %v2748 = vsel %vm689, %v2747, %v2706
        %v2749 = vsel %vm691, %v2748, %v2710
        %v2750 = vsel %vm693, %v2749, %v2714
        %v2751 = vsel %vm681, %v2680, %v2718
        %v2752 = vsel %vm683, %v2751, %v2722
        %v2753 = vsel %vm685, %v2752, %v2726
        %v2754 = vsel %vm687, %v2753, %v2730
        %v2755 = vsel %vm689, %v2754, %v2734
        %v2756 = vsel %vm691, %v2755, %v2738
        %v2757 = vsel %vm693, %v2756, %v2742
        %2758 = vst [vmem:[#allocation3 + $0x50] sm:$0xff] %v2750
        %2759 = vst [vmem:[#allocation3 + $0x58] sm:$0xff] %v2757
        %v2760 = vld [vmem:[#allocation2 + $0x2] sm:$0xff]
        %v2761 = vld [vmem:[#allocation2 + $0xa] sm:$0xff]
        %v2762 = vld [vmem:[#allocation2 + $0x1a] sm:$0xff]
        %v2763 = vld [vmem:[#allocation2 + $0x22] sm:$0xff]
        %v2764 = vld [vmem:[#allocation2 + $0x32] sm:$0xff]
        %v2765 = vld [vmem:[#allocation2 + $0x3a] sm:$0xff]
        %v2766 = vld [vmem:[#allocation2 + $0x4a] sm:$0xff]
        %v2767 = vld [vmem:[#allocation2 + $0x52] sm:$0xff]
        %v2768 = vld [vmem:[#allocation2 + $0x62] sm:$0xff]
        %v2769 = vld [vmem:[#allocation2 + $0x6a] sm:$0xff]
        %v2770 = vld [vmem:[#allocation2 + $0x7a] sm:$0xff]
        %v2771 = vld [vmem:[#allocation2 + $0x82] sm:$0xff]
        %v2772 = vld [vmem:[#allocation2 + $0x92] sm:$0xff]
        %v2773 = vld [vmem:[#allocation2 + $0x9a] sm:$0xff]
        %v2774 = vld [vmem:[#allocation2 + $0xaa] sm:$0xff]
        %v2775 = vld [vmem:[#allocation2 + $0xb2] sm:$0xff]
        %v2776 = vcombine.low %v2760, %v2764
        %v2777 = vcombine.high %v2760, %v2764
        %v2779 = vunpack.c.l.s4 1983009808
        %v2780 = vunpack.c.0.s8 %v2779
        %v2781 = vlaneseq
        %v2782 = vshrl.u32 %v2781, 7
        %v2783 = vsub.s32 %v2780, %v2782
        %v2784 = vrot.slane %v2776, %v2783
        %v2786 = vunpack.c.l.s4 1983009808
        %v2787 = vunpack.c.0.s8 %v2786
        %v2788 = vlaneseq
        %v2789 = vshrl.u32 %v2788, 7
        %v2790 = vsub.s32 %v2787, %v2789
        %v2791 = vrot.slane %v2777, %v2790
        %v2792 = vcombine.low %v2762, %v2766
        %v2793 = vcombine.high %v2762, %v2766
        %v2795 = vunpack.c.l.s4 1983009808
        %v2796 = vunpack.c.0.s8 %v2795
        %v2797 = vlaneseq
        %v2798 = vshrl.u32 %v2797, 7
        %v2799 = vsub.s32 %v2796, %v2798
        %v2800 = vrot.slane %v2792, %v2799
        %v2802 = vunpack.c.l.s4 1983009808
        %v2803 = vunpack.c.0.s8 %v2802
        %v2804 = vlaneseq
        %v2805 = vshrl.u32 %v2804, 7
        %v2806 = vsub.s32 %v2803, %v2805
        %v2807 = vrot.slane %v2793, %v2806
        %v2808 = vcombine.low %v2768, %v2772
        %v2809 = vcombine.high %v2768, %v2772
        %v2811 = vunpack.c.l.s4 1983009808
        %v2812 = vunpack.c.0.s8 %v2811
        %v2813 = vlaneseq
        %v2814 = vshrl.u32 %v2813, 7
        %v2815 = vsub.s32 %v2812, %v2814
        %v2816 = vrot.slane %v2808, %v2815
        %v2818 = vunpack.c.l.s4 1983009808
        %v2819 = vunpack.c.0.s8 %v2818
        %v2820 = vlaneseq
        %v2821 = vshrl.u32 %v2820, 7
        %v2822 = vsub.s32 %v2819, %v2821
        %v2823 = vrot.slane %v2809, %v2822
        %v2824 = vcombine.low %v2770, %v2774
        %v2825 = vcombine.high %v2770, %v2774
        %v2827 = vunpack.c.l.s4 1983009808
        %v2828 = vunpack.c.0.s8 %v2827
        %v2829 = vlaneseq
        %v2830 = vshrl.u32 %v2829, 7
        %v2831 = vsub.s32 %v2828, %v2830
        %v2832 = vrot.slane %v2824, %v2831
        %v2834 = vunpack.c.l.s4 1983009808
        %v2835 = vunpack.c.0.s8 %v2834
        %v2836 = vlaneseq
        %v2837 = vshrl.u32 %v2836, 7
        %v2838 = vsub.s32 %v2835, %v2837
        %v2839 = vrot.slane %v2825, %v2838
        %v2840 = vcombine.low %v2784, %v2800
        %v2841 = vcombine.high %v2784, %v2800
        %v2843 = vunpack.c.l.s4 1934713408
        %v2844 = vunpack.c.0.s8 %v2843
        %v2845 = vlaneseq
        %v2846 = vshrl.u32 %v2845, 7
        %v2847 = vsub.s32 %v2844, %v2846
        %v2848 = vrot.slane %v2840, %v2847
        %v2850 = vunpack.c.l.s4 1934713408
        %v2851 = vunpack.c.0.s8 %v2850
        %v2852 = vlaneseq
        %v2853 = vshrl.u32 %v2852, 7
        %v2854 = vsub.s32 %v2851, %v2853
        %v2855 = vrot.slane %v2841, %v2854
        %v2856 = vcombine.low %v2791, %v2807
        %v2857 = vcombine.high %v2791, %v2807
        %v2859 = vunpack.c.l.s4 1934713408
        %v2860 = vunpack.c.0.s8 %v2859
        %v2861 = vlaneseq
        %v2862 = vshrl.u32 %v2861, 7
        %v2863 = vsub.s32 %v2860, %v2862
        %v2864 = vrot.slane %v2856, %v2863
        %v2866 = vunpack.c.l.s4 1934713408
        %v2867 = vunpack.c.0.s8 %v2866
        %v2868 = vlaneseq
        %v2869 = vshrl.u32 %v2868, 7
        %v2870 = vsub.s32 %v2867, %v2869
        %v2871 = vrot.slane %v2857, %v2870
        %v2872 = vcombine.low %v2816, %v2832
        %v2873 = vcombine.high %v2816, %v2832
        %v2875 = vunpack.c.l.s4 1934713408
        %v2876 = vunpack.c.0.s8 %v2875
        %v2877 = vlaneseq
        %v2878 = vshrl.u32 %v2877, 7
        %v2879 = vsub.s32 %v2876, %v2878
        %v2880 = vrot.slane %v2872, %v2879
        %v2882 = vunpack.c.l.s4 1934713408
        %v2883 = vunpack.c.0.s8 %v2882
        %v2884 = vlaneseq
        %v2885 = vshrl.u32 %v2884, 7
        %v2886 = vsub.s32 %v2883, %v2885
        %v2887 = vrot.slane %v2873, %v2886
        %v2888 = vcombine.low %v2823, %v2839
        %v2889 = vcombine.high %v2823, %v2839
        %v2891 = vunpack.c.l.s4 1934713408
        %v2892 = vunpack.c.0.s8 %v2891
        %v2893 = vlaneseq
        %v2894 = vshrl.u32 %v2893, 7
        %v2895 = vsub.s32 %v2892, %v2894
        %v2896 = vrot.slane %v2888, %v2895
        %v2898 = vunpack.c.l.s4 1934713408
        %v2899 = vunpack.c.0.s8 %v2898
        %v2900 = vlaneseq
        %v2901 = vshrl.u32 %v2900, 7
        %v2902 = vsub.s32 %v2899, %v2901
        %v2903 = vrot.slane %v2889, %v2902
        %v2904 = vcombine.low %v2848, %v2880
        %v2905 = vcombine.high %v2848, %v2880
        %v2906 = vcombine.low %v2855, %v2887
        %v2907 = vcombine.high %v2855, %v2887
        %v2908 = vcombine.low %v2864, %v2896
        %v2909 = vcombine.high %v2864, %v2896
        %v2910 = vcombine.low %v2871, %v2903
        %v2911 = vcombine.high %v2871, %v2903
        %v2912 = vcombine.low %v2761, %v2765
        %v2913 = vcombine.high %v2761, %v2765
        %v2915 = vunpack.c.l.s4 1983009808
        %v2916 = vunpack.c.0.s8 %v2915
        %v2917 = vlaneseq
        %v2918 = vshrl.u32 %v2917, 7
        %v2919 = vsub.s32 %v2916, %v2918
        %v2920 = vrot.slane %v2912, %v2919
        %v2922 = vunpack.c.l.s4 1983009808
        %v2923 = vunpack.c.0.s8 %v2922
        %v2924 = vlaneseq
        %v2925 = vshrl.u32 %v2924, 7
        %v2926 = vsub.s32 %v2923, %v2925
        %v2927 = vrot.slane %v2913, %v2926
        %v2928 = vcombine.low %v2763, %v2767
        %v2929 = vcombine.high %v2763, %v2767
        %v2931 = vunpack.c.l.s4 1983009808
        %v2932 = vunpack.c.0.s8 %v2931
        %v2933 = vlaneseq
        %v2934 = vshrl.u32 %v2933, 7
        %v2935 = vsub.s32 %v2932, %v2934
        %v2936 = vrot.slane %v2928, %v2935
        %v2938 = vunpack.c.l.s4 1983009808
        %v2939 = vunpack.c.0.s8 %v2938
        %v2940 = vlaneseq
        %v2941 = vshrl.u32 %v2940, 7
        %v2942 = vsub.s32 %v2939, %v2941
        %v2943 = vrot.slane %v2929, %v2942
        %v2944 = vcombine.low %v2769, %v2773
        %v2945 = vcombine.high %v2769, %v2773
        %v2947 = vunpack.c.l.s4 1983009808
        %v2948 = vunpack.c.0.s8 %v2947
        %v2949 = vlaneseq
        %v2950 = vshrl.u32 %v2949, 7
        %v2951 = vsub.s32 %v2948, %v2950
        %v2952 = vrot.slane %v2944, %v2951
        %v2954 = vunpack.c.l.s4 1983009808
        %v2955 = vunpack.c.0.s8 %v2954
        %v2956 = vlaneseq
        %v2957 = vshrl.u32 %v2956, 7
        %v2958 = vsub.s32 %v2955, %v2957
        %v2959 = vrot.slane %v2945, %v2958
        %v2960 = vcombine.low %v2771, %v2775
        %v2961 = vcombine.high %v2771, %v2775
        %v2963 = vunpack.c.l.s4 1983009808
        %v2964 = vunpack.c.0.s8 %v2963
        %v2965 = vlaneseq
        %v2966 = vshrl.u32 %v2965, 7
        %v2967 = vsub.s32 %v2964, %v2966
        %v2968 = vrot.slane %v2960, %v2967
        %v2970 = vunpack.c.l.s4 1983009808
        %v2971 = vunpack.c.0.s8 %v2970
        %v2972 = vlaneseq
        %v2973 = vshrl.u32 %v2972, 7
        %v2974 = vsub.s32 %v2971, %v2973
        %v2975 = vrot.slane %v2961, %v2974
        %v2976 = vcombine.low %v2920, %v2936
        %v2977 = vcombine.high %v2920, %v2936
        %v2979 = vunpack.c.l.s4 1934713408
        %v2980 = vunpack.c.0.s8 %v2979
        %v2981 = vlaneseq
        %v2982 = vshrl.u32 %v2981, 7
        %v2983 = vsub.s32 %v2980, %v2982
        %v2984 = vrot.slane %v2976, %v2983
        %v2986 = vunpack.c.l.s4 1934713408
        %v2987 = vunpack.c.0.s8 %v2986
        %v2988 = vlaneseq
        %v2989 = vshrl.u32 %v2988, 7
        %v2990 = vsub.s32 %v2987, %v2989
        %v2991 = vrot.slane %v2977, %v2990
        %v2992 = vcombine.low %v2927, %v2943
        %v2993 = vcombine.high %v2927, %v2943
        %v2995 = vunpack.c.l.s4 1934713408
        %v2996 = vunpack.c.0.s8 %v2995
        %v2997 = vlaneseq
        %v2998 = vshrl.u32 %v2997, 7
        %v2999 = vsub.s32 %v2996, %v2998
        %v3000 = vrot.slane %v2992, %v2999
        %v3002 = vunpack.c.l.s4 1934713408
        %v3003 = vunpack.c.0.s8 %v3002
        %v3004 = vlaneseq
        %v3005 = vshrl.u32 %v3004, 7
        %v3006 = vsub.s32 %v3003, %v3005
        %v3007 = vrot.slane %v2993, %v3006
        %v3008 = vcombine.low %v2952, %v2968
        %v3009 = vcombine.high %v2952, %v2968
        %v3011 = vunpack.c.l.s4 1934713408
        %v3012 = vunpack.c.0.s8 %v3011
        %v3013 = vlaneseq
        %v3014 = vshrl.u32 %v3013, 7
        %v3015 = vsub.s32 %v3012, %v3014
        %v3016 = vrot.slane %v3008, %v3015
        %v3018 = vunpack.c.l.s4 1934713408
        %v3019 = vunpack.c.0.s8 %v3018
        %v3020 = vlaneseq
        %v3021 = vshrl.u32 %v3020, 7
        %v3022 = vsub.s32 %v3019, %v3021
        %v3023 = vrot.slane %v3009, %v3022
        %v3024 = vcombine.low %v2959, %v2975
        %v3025 = vcombine.high %v2959, %v2975
        %v3027 = vunpack.c.l.s4 1934713408
        %v3028 = vunpack.c.0.s8 %v3027
        %v3029 = vlaneseq
        %v3030 = vshrl.u32 %v3029, 7
        %v3031 = vsub.s32 %v3028, %v3030
        %v3032 = vrot.slane %v3024, %v3031
        %v3034 = vunpack.c.l.s4 1934713408
        %v3035 = vunpack.c.0.s8 %v3034
        %v3036 = vlaneseq
        %v3037 = vshrl.u32 %v3036, 7
        %v3038 = vsub.s32 %v3035, %v3037
        %v3039 = vrot.slane %v3025, %v3038
        %v3040 = vcombine.low %v2984, %v3016
        %v3041 = vcombine.high %v2984, %v3016
        %v3042 = vcombine.low %v2991, %v3023
        %v3043 = vcombine.high %v2991, %v3023
        %v3044 = vcombine.low %v3000, %v3032
        %v3045 = vcombine.high %v3000, %v3032
        %v3046 = vcombine.low %v3007, %v3039
        %v3047 = vcombine.high %v3007, %v3039
        %3049 = vrot.lane.b32.xlu0 %v2905, 16
        %v3050 = vpop.permute.xlu0 %3049
        %3053 = vrot.lane.b32.xlu0 %v2906, 32
        %v3054 = vpop.permute.xlu0 %3053
        %3057 = vrot.lane.b32.xlu0 %v2907, 48
        %v3058 = vpop.permute.xlu0 %3057
        %3061 = vrot.lane.b32.xlu0 %v2908, 64
        %v3062 = vpop.permute.xlu0 %3061
        %3065 = vrot.lane.b32.xlu0 %v2909, 80
        %v3066 = vpop.permute.xlu0 %3065
        %3069 = vrot.lane.b32.xlu0 %v2910, 96
        %v3070 = vpop.permute.xlu0 %3069
        %3073 = vrot.lane.b32.xlu0 %v2911, 112
        %v3074 = vpop.permute.xlu0 %3073
        %3077 = vrot.lane.b32.xlu0 %v3041, 16
        %v3078 = vpop.permute.xlu0 %3077
        %3081 = vrot.lane.b32.xlu0 %v3042, 32
        %v3082 = vpop.permute.xlu0 %3081
        %3085 = vrot.lane.b32.xlu0 %v3043, 48
        %v3086 = vpop.permute.xlu0 %3085
        %3089 = vrot.lane.b32.xlu0 %v3044, 64
        %v3090 = vpop.permute.xlu0 %3089
        %3093 = vrot.lane.b32.xlu0 %v3045, 80
        %v3094 = vpop.permute.xlu0 %3093
        %3097 = vrot.lane.b32.xlu0 %v3046, 96
        %v3098 = vpop.permute.xlu0 %3097
        %3101 = vrot.lane.b32.xlu0 %v3047, 112
        %v3102 = vpop.permute.xlu0 %3101
        %v3104 = vsel %vm681, %v2904, %v3050
        %v3105 = vsel %vm683, %v3104, %v3054
        %v3106 = vsel %vm685, %v3105, %v3058
        %v3107 = vsel %vm687, %v3106, %v3062
        %v3108 = vsel %vm689, %v3107, %v3066
        %v3109 = vsel %vm691, %v3108, %v3070
        %v3110 = vsel %vm693, %v3109, %v3074
        %v3111 = vsel %vm681, %v3040, %v3078
        %v3112 = vsel %vm683, %v3111, %v3082
        %v3113 = vsel %vm685, %v3112, %v3086
        %v3114 = vsel %vm687, %v3113, %v3090
        %v3115 = vsel %vm689, %v3114, %v3094
        %v3116 = vsel %vm691, %v3115, %v3098
        %v3117 = vsel %vm693, %v3116, %v3102
        %3118 = vst [vmem:[#allocation3 + $0x60] sm:$0xff] %v3110
        %3119 = vst [vmem:[#allocation3 + $0x68] sm:$0xff] %v3117
        %v3120 = vld [vmem:[#allocation2 + $0x2] sm:$0xff]
        %v3121 = vld [vmem:[#allocation2 + $0xa] sm:$0xff]
        %v3122 = vld [vmem:[#allocation2 + $0x1a] sm:$0xff]
        %v3123 = vld [vmem:[#allocation2 + $0x22] sm:$0xff]
        %v3124 = vld [vmem:[#allocation2 + $0x32] sm:$0xff]
        %v3125 = vld [vmem:[#allocation2 + $0x3a] sm:$0xff]
        %v3126 = vld [vmem:[#allocation2 + $0x4a] sm:$0xff]
        %v3127 = vld [vmem:[#allocation2 + $0x52] sm:$0xff]
        %v3128 = vld [vmem:[#allocation2 + $0x62] sm:$0xff]
        %v3129 = vld [vmem:[#allocation2 + $0x6a] sm:$0xff]
        %v3130 = vld [vmem:[#allocation2 + $0x7a] sm:$0xff]
        %v3131 = vld [vmem:[#allocation2 + $0x82] sm:$0xff]
        %v3132 = vld [vmem:[#allocation2 + $0x92] sm:$0xff]
        %v3133 = vld [vmem:[#allocation2 + $0x9a] sm:$0xff]
        %v3134 = vld [vmem:[#allocation2 + $0xaa] sm:$0xff]
        %v3135 = vld [vmem:[#allocation2 + $0xb2] sm:$0xff]
        %3152 = vrot.lane.b32.xlu0 %v3120, 127
        %v3153 = vpop.permute.xlu0 %3152
        %3154 = vrot.lane.b32.xlu0 %v3121, 127
        %v3155 = vpop.permute.xlu0 %3154
        %3156 = vrot.lane.b32.xlu0 %v3122, 127
        %v3157 = vpop.permute.xlu0 %3156
        %3158 = vrot.lane.b32.xlu0 %v3123, 127
        %v3159 = vpop.permute.xlu0 %3158
        %3160 = vrot.lane.b32.xlu0 %v3124, 127
        %v3161 = vpop.permute.xlu0 %3160
        %3162 = vrot.lane.b32.xlu0 %v3125, 127
        %v3163 = vpop.permute.xlu0 %3162
        %3164 = vrot.lane.b32.xlu0 %v3126, 127
        %v3165 = vpop.permute.xlu0 %3164
        %3166 = vrot.lane.b32.xlu0 %v3127, 127
        %v3167 = vpop.permute.xlu0 %3166
        %3168 = vrot.lane.b32.xlu0 %v3128, 127
        %v3169 = vpop.permute.xlu0 %3168
        %3170 = vrot.lane.b32.xlu0 %v3129, 127
        %v3171 = vpop.permute.xlu0 %3170
        %3172 = vrot.lane.b32.xlu0 %v3130, 127
        %v3173 = vpop.permute.xlu0 %3172
        %3174 = vrot.lane.b32.xlu0 %v3131, 127
        %v3175 = vpop.permute.xlu0 %3174
        %3176 = vrot.lane.b32.xlu0 %v3132, 127
        %v3177 = vpop.permute.xlu0 %3176
        %3178 = vrot.lane.b32.xlu0 %v3133, 127
        %v3179 = vpop.permute.xlu0 %3178
        %3180 = vrot.lane.b32.xlu0 %v3134, 127
        %v3181 = vpop.permute.xlu0 %3180
        %3182 = vrot.lane.b32.xlu0 %v3135, 127
        %v3183 = vpop.permute.xlu0 %3182
        %v3200 = vcombine.low %v3153, %v3161
        %v3201 = vcombine.high %v3153, %v3161
        %v3203 = vunpack.c.l.s4 1983009808
        %v3204 = vunpack.c.0.s8 %v3203
        %v3205 = vlaneseq
        %v3206 = vshrl.u32 %v3205, 7
        %v3207 = vsub.s32 %v3204, %v3206
        %v3208 = vrot.slane %v3200, %v3207
        %v3210 = vunpack.c.l.s4 1983009808
        %v3211 = vunpack.c.0.s8 %v3210
        %v3212 = vlaneseq
        %v3213 = vshrl.u32 %v3212, 7
        %v3214 = vsub.s32 %v3211, %v3213
        %v3215 = vrot.slane %v3201, %v3214
        %v3216 = vcombine.low %v3157, %v3165
        %v3217 = vcombine.high %v3157, %v3165
        %v3219 = vunpack.c.l.s4 1983009808
        %v3220 = vunpack.c.0.s8 %v3219
        %v3221 = vlaneseq
        %v3222 = vshrl.u32 %v3221, 7
        %v3223 = vsub.s32 %v3220, %v3222
        %v3224 = vrot.slane %v3216, %v3223
        %v3226 = vunpack.c.l.s4 1983009808
        %v3227 = vunpack.c.0.s8 %v3226
        %v3228 = vlaneseq
        %v3229 = vshrl.u32 %v3228, 7
        %v3230 = vsub.s32 %v3227, %v3229
        %v3231 = vrot.slane %v3217, %v3230
        %v3232 = vcombine.low %v3169, %v3177
        %v3233 = vcombine.high %v3169, %v3177
        %v3235 = vunpack.c.l.s4 1983009808
        %v3236 = vunpack.c.0.s8 %v3235
        %v3237 = vlaneseq
        %v3238 = vshrl.u32 %v3237, 7
        %v3239 = vsub.s32 %v3236, %v3238
        %v3240 = vrot.slane %v3232, %v3239
        %v3242 = vunpack.c.l.s4 1983009808
        %v3243 = vunpack.c.0.s8 %v3242
        %v3244 = vlaneseq
        %v3245 = vshrl.u32 %v3244, 7
        %v3246 = vsub.s32 %v3243, %v3245
        %v3247 = vrot.slane %v3233, %v3246
        %v3248 = vcombine.low %v3173, %v3181
        %v3249 = vcombine.high %v3173, %v3181
        %v3251 = vunpack.c.l.s4 1983009808
        %v3252 = vunpack.c.0.s8 %v3251
        %v3253 = vlaneseq
        %v3254 = vshrl.u32 %v3253, 7
        %v3255 = vsub.s32 %v3252, %v3254
        %v3256 = vrot.slane %v3248, %v3255
        %v3258 = vunpack.c.l.s4 1983009808
        %v3259 = vunpack.c.0.s8 %v3258
        %v3260 = vlaneseq
        %v3261 = vshrl.u32 %v3260, 7
        %v3262 = vsub.s32 %v3259, %v3261
        %v3263 = vrot.slane %v3249, %v3262
        %v3264 = vcombine.low %v3208, %v3224
        %v3265 = vcombine.high %v3208, %v3224
        %v3267 = vunpack.c.l.s4 1934713408
        %v3268 = vunpack.c.0.s8 %v3267
        %v3269 = vlaneseq
        %v3270 = vshrl.u32 %v3269, 7
        %v3271 = vsub.s32 %v3268, %v3270
        %v3272 = vrot.slane %v3264, %v3271
        %v3274 = vunpack.c.l.s4 1934713408
        %v3275 = vunpack.c.0.s8 %v3274
        %v3276 = vlaneseq
        %v3277 = vshrl.u32 %v3276, 7
        %v3278 = vsub.s32 %v3275, %v3277
        %v3279 = vrot.slane %v3265, %v3278
        %v3280 = vcombine.low %v3215, %v3231
        %v3281 = vcombine.high %v3215, %v3231
        %v3283 = vunpack.c.l.s4 1934713408
        %v3284 = vunpack.c.0.s8 %v3283
        %v3285 = vlaneseq
        %v3286 = vshrl.u32 %v3285, 7
        %v3287 = vsub.s32 %v3284, %v3286
        %v3288 = vrot.slane %v3280, %v3287
        %v3290 = vunpack.c.l.s4 1934713408
        %v3291 = vunpack.c.0.s8 %v3290
        %v3292 = vlaneseq
        %v3293 = vshrl.u32 %v3292, 7
        %v3294 = vsub.s32 %v3291, %v3293
        %v3295 = vrot.slane %v3281, %v3294
        %v3296 = vcombine.low %v3240, %v3256
        %v3297 = vcombine.high %v3240, %v3256
        %v3299 = vunpack.c.l.s4 1934713408
        %v3300 = vunpack.c.0.s8 %v3299
        %v3301 = vlaneseq
        %v3302 = vshrl.u32 %v3301, 7
        %v3303 = vsub.s32 %v3300, %v3302
        %v3304 = vrot.slane %v3296, %v3303
        %v3306 = vunpack.c.l.s4 1934713408
        %v3307 = vunpack.c.0.s8 %v3306
        %v3308 = vlaneseq
        %v3309 = vshrl.u32 %v3308, 7
        %v3310 = vsub.s32 %v3307, %v3309
        %v3311 = vrot.slane %v3297, %v3310
        %v3312 = vcombine.low %v3247, %v3263
        %v3313 = vcombine.high %v3247, %v3263
        %v3315 = vunpack.c.l.s4 1934713408
        %v3316 = vunpack.c.0.s8 %v3315
        %v3317 = vlaneseq
        %v3318 = vshrl.u32 %v3317, 7
        %v3319 = vsub.s32 %v3316, %v3318
        %v3320 = vrot.slane %v3312, %v3319
        %v3322 = vunpack.c.l.s4 1934713408
        %v3323 = vunpack.c.0.s8 %v3322
        %v3324 = vlaneseq
        %v3325 = vshrl.u32 %v3324, 7
        %v3326 = vsub.s32 %v3323, %v3325
        %v3327 = vrot.slane %v3313, %v3326
        %v3328 = vcombine.low %v3272, %v3304
        %v3329 = vcombine.high %v3272, %v3304
        %v3330 = vcombine.low %v3279, %v3311
        %v3331 = vcombine.high %v3279, %v3311
        %v3332 = vcombine.low %v3288, %v3320
        %v3333 = vcombine.high %v3288, %v3320
        %v3334 = vcombine.low %v3295, %v3327
        %v3335 = vcombine.high %v3295, %v3327
        %v3336 = vcombine.low %v3155, %v3163
        %v3337 = vcombine.high %v3155, %v3163
        %v3339 = vunpack.c.l.s4 1983009808
        %v3340 = vunpack.c.0.s8 %v3339
        %v3341 = vlaneseq
        %v3342 = vshrl.u32 %v3341, 7
        %v3343 = vsub.s32 %v3340, %v3342
        %v3344 = vrot.slane %v3336, %v3343
        %v3346 = vunpack.c.l.s4 1983009808
        %v3347 = vunpack.c.0.s8 %v3346
        %v3348 = vlaneseq
        %v3349 = vshrl.u32 %v3348, 7
        %v3350 = vsub.s32 %v3347, %v3349
        %v3351 = vrot.slane %v3337, %v3350
        %v3352 = vcombine.low %v3159, %v3167
        %v3353 = vcombine.high %v3159, %v3167
        %v3355 = vunpack.c.l.s4 1983009808
        %v3356 = vunpack.c.0.s8 %v3355
        %v3357 = vlaneseq
        %v3358 = vshrl.u32 %v3357, 7
        %v3359 = vsub.s32 %v3356, %v3358
        %v3360 = vrot.slane %v3352, %v3359
        %v3362 = vunpack.c.l.s4 1983009808
        %v3363 = vunpack.c.0.s8 %v3362
        %v3364 = vlaneseq
        %v3365 = vshrl.u32 %v3364, 7
        %v3366 = vsub.s32 %v3363, %v3365
        %v3367 = vrot.slane %v3353, %v3366
        %v3368 = vcombine.low %v3171, %v3179
        %v3369 = vcombine.high %v3171, %v3179
        %v3371 = vunpack.c.l.s4 1983009808
        %v3372 = vunpack.c.0.s8 %v3371
        %v3373 = vlaneseq
        %v3374 = vshrl.u32 %v3373, 7
        %v3375 = vsub.s32 %v3372, %v3374
        %v3376 = vrot.slane %v3368, %v3375
        %v3378 = vunpack.c.l.s4 1983009808
        %v3379 = vunpack.c.0.s8 %v3378
        %v3380 = vlaneseq
        %v3381 = vshrl.u32 %v3380, 7
        %v3382 = vsub.s32 %v3379, %v3381
        %v3383 = vrot.slane %v3369, %v3382
        %v3384 = vcombine.low %v3175, %v3183
        %v3385 = vcombine.high %v3175, %v3183
        %v3387 = vunpack.c.l.s4 1983009808
        %v3388 = vunpack.c.0.s8 %v3387
        %v3389 = vlaneseq
        %v3390 = vshrl.u32 %v3389, 7
        %v3391 = vsub.s32 %v3388, %v3390
        %v3392 = vrot.slane %v3384, %v3391
        %v3394 = vunpack.c.l.s4 1983009808
        %v3395 = vunpack.c.0.s8 %v3394
        %v3396 = vlaneseq
        %v3397 = vshrl.u32 %v3396, 7
        %v3398 = vsub.s32 %v3395, %v3397
        %v3399 = vrot.slane %v3385, %v3398
        %v3400 = vcombine.low %v3344, %v3360
        %v3401 = vcombine.high %v3344, %v3360
        %v3403 = vunpack.c.l.s4 1934713408
        %v3404 = vunpack.c.0.s8 %v3403
        %v3405 = vlaneseq
        %v3406 = vshrl.u32 %v3405, 7
        %v3407 = vsub.s32 %v3404, %v3406
        %v3408 = vrot.slane %v3400, %v3407
        %v3410 = vunpack.c.l.s4 1934713408
        %v3411 = vunpack.c.0.s8 %v3410
        %v3412 = vlaneseq
        %v3413 = vshrl.u32 %v3412, 7
        %v3414 = vsub.s32 %v3411, %v3413
        %v3415 = vrot.slane %v3401, %v3414
        %v3416 = vcombine.low %v3351, %v3367
        %v3417 = vcombine.high %v3351, %v3367
        %v3419 = vunpack.c.l.s4 1934713408
        %v3420 = vunpack.c.0.s8 %v3419
        %v3421 = vlaneseq
        %v3422 = vshrl.u32 %v3421, 7
        %v3423 = vsub.s32 %v3420, %v3422
        %v3424 = vrot.slane %v3416, %v3423
        %v3426 = vunpack.c.l.s4 1934713408
        %v3427 = vunpack.c.0.s8 %v3426
        %v3428 = vlaneseq
        %v3429 = vshrl.u32 %v3428, 7
        %v3430 = vsub.s32 %v3427, %v3429
        %v3431 = vrot.slane %v3417, %v3430
        %v3432 = vcombine.low %v3376, %v3392
        %v3433 = vcombine.high %v3376, %v3392
        %v3435 = vunpack.c.l.s4 1934713408
        %v3436 = vunpack.c.0.s8 %v3435
        %v3437 = vlaneseq
        %v3438 = vshrl.u32 %v3437, 7
        %v3439 = vsub.s32 %v3436, %v3438
        %v3440 = vrot.slane %v3432, %v3439
        %v3442 = vunpack.c.l.s4 1934713408
        %v3443 = vunpack.c.0.s8 %v3442
        %v3444 = vlaneseq
        %v3445 = vshrl.u32 %v3444, 7
        %v3446 = vsub.s32 %v3443, %v3445
        %v3447 = vrot.slane %v3433, %v3446
        %v3448 = vcombine.low %v3383, %v3399
        %v3449 = vcombine.high %v3383, %v3399
        %v3451 = vunpack.c.l.s4 1934713408
        %v3452 = vunpack.c.0.s8 %v3451
        %v3453 = vlaneseq
        %v3454 = vshrl.u32 %v3453, 7
        %v3455 = vsub.s32 %v3452, %v3454
        %v3456 = vrot.slane %v3448, %v3455
        %v3458 = vunpack.c.l.s4 1934713408
        %v3459 = vunpack.c.0.s8 %v3458
        %v3460 = vlaneseq
        %v3461 = vshrl.u32 %v3460, 7
        %v3462 = vsub.s32 %v3459, %v3461
        %v3463 = vrot.slane %v3449, %v3462
        %v3464 = vcombine.low %v3408, %v3440
        %v3465 = vcombine.high %v3408, %v3440
        %v3466 = vcombine.low %v3415, %v3447
        %v3467 = vcombine.high %v3415, %v3447
        %v3468 = vcombine.low %v3424, %v3456
        %v3469 = vcombine.high %v3424, %v3456
        %v3470 = vcombine.low %v3431, %v3463
        %v3471 = vcombine.high %v3431, %v3463
        %3473 = vrot.lane.b32.xlu0 %v3329, 16
        %v3474 = vpop.permute.xlu0 %3473
        %3477 = vrot.lane.b32.xlu0 %v3330, 32
        %v3478 = vpop.permute.xlu0 %3477
        %3481 = vrot.lane.b32.xlu0 %v3331, 48
        %v3482 = vpop.permute.xlu0 %3481
        %3485 = vrot.lane.b32.xlu0 %v3332, 64
        %v3486 = vpop.permute.xlu0 %3485
        %3489 = vrot.lane.b32.xlu0 %v3333, 80
        %v3490 = vpop.permute.xlu0 %3489
        %3493 = vrot.lane.b32.xlu0 %v3334, 96
        %v3494 = vpop.permute.xlu0 %3493
        %3497 = vrot.lane.b32.xlu0 %v3335, 112
        %v3498 = vpop.permute.xlu0 %3497
        %3501 = vrot.lane.b32.xlu0 %v3465, 16
        %v3502 = vpop.permute.xlu0 %3501
        %3505 = vrot.lane.b32.xlu0 %v3466, 32
        %v3506 = vpop.permute.xlu0 %3505
        %3509 = vrot.lane.b32.xlu0 %v3467, 48
        %v3510 = vpop.permute.xlu0 %3509
        %3513 = vrot.lane.b32.xlu0 %v3468, 64
        %v3514 = vpop.permute.xlu0 %3513
        %3517 = vrot.lane.b32.xlu0 %v3469, 80
        %v3518 = vpop.permute.xlu0 %3517
        %3521 = vrot.lane.b32.xlu0 %v3470, 96
        %v3522 = vpop.permute.xlu0 %3521
        %3525 = vrot.lane.b32.xlu0 %v3471, 112
        %v3526 = vpop.permute.xlu0 %3525
        %v3528 = vsel %vm681, %v3328, %v3474
        %v3529 = vsel %vm683, %v3528, %v3478
        %v3530 = vsel %vm685, %v3529, %v3482
        %v3531 = vsel %vm687, %v3530, %v3486
        %v3532 = vsel %vm689, %v3531, %v3490
        %v3533 = vsel %vm691, %v3532, %v3494
        %v3534 = vsel %vm693, %v3533, %v3498
        %v3535 = vsel %vm681, %v3464, %v3502
        %v3536 = vsel %vm683, %v3535, %v3506
        %v3537 = vsel %vm685, %v3536, %v3510
        %v3538 = vsel %vm687, %v3537, %v3514
        %v3539 = vsel %vm689, %v3538, %v3518
        %v3540 = vsel %vm691, %v3539, %v3522
        %v3541 = vsel %vm693, %v3540, %v3526
        %3542 = vst [vmem:[#allocation3 + $0x70] sm:$0xff] %v3534
        %3543 = vst [vmem:[#allocation3 + $0x78] sm:$0xff] %v3541
        %v3544 = vld [vmem:[#allocation2 + $0x2] sm:$0xff]
        %v3545 = vld [vmem:[#allocation2 + $0xa] sm:$0xff]
        %v3546 = vld [vmem:[#allocation2 + $0x1a] sm:$0xff]
        %v3547 = vld [vmem:[#allocation2 + $0x22] sm:$0xff]
        %v3548 = vld [vmem:[#allocation2 + $0x32] sm:$0xff]
        %v3549 = vld [vmem:[#allocation2 + $0x3a] sm:$0xff]
        %v3550 = vld [vmem:[#allocation2 + $0x4a] sm:$0xff]
        %v3551 = vld [vmem:[#allocation2 + $0x52] sm:$0xff]
        %v3552 = vld [vmem:[#allocation2 + $0x62] sm:$0xff]
        %v3553 = vld [vmem:[#allocation2 + $0x6a] sm:$0xff]
        %v3554 = vld [vmem:[#allocation2 + $0x7a] sm:$0xff]
        %v3555 = vld [vmem:[#allocation2 + $0x82] sm:$0xff]
        %v3556 = vld [vmem:[#allocation2 + $0x92] sm:$0xff]
        %v3557 = vld [vmem:[#allocation2 + $0x9a] sm:$0xff]
        %v3558 = vld [vmem:[#allocation2 + $0xaa] sm:$0xff]
        %v3559 = vld [vmem:[#allocation2 + $0xb2] sm:$0xff]
        %3576 = vrot.lane.b32.xlu0 %v3544, 126
        %v3577 = vpop.permute.xlu0 %3576
        %3578 = vrot.lane.b32.xlu0 %v3545, 126
        %v3579 = vpop.permute.xlu0 %3578
        %3580 = vrot.lane.b32.xlu0 %v3546, 126
        %v3581 = vpop.permute.xlu0 %3580
        %3582 = vrot.lane.b32.xlu0 %v3547, 126
        %v3583 = vpop.permute.xlu0 %3582
        %3584 = vrot.lane.b32.xlu0 %v3548, 126
        %v3585 = vpop.permute.xlu0 %3584
        %3586 = vrot.lane.b32.xlu0 %v3549, 126
        %v3587 = vpop.permute.xlu0 %3586
        %3588 = vrot.lane.b32.xlu0 %v3550, 126
        %v3589 = vpop.permute.xlu0 %3588
        %3590 = vrot.lane.b32.xlu0 %v3551, 126
        %v3591 = vpop.permute.xlu0 %3590
        %3592 = vrot.lane.b32.xlu0 %v3552, 126
        %v3593 = vpop.permute.xlu0 %3592
        %3594 = vrot.lane.b32.xlu0 %v3553, 126
        %v3595 = vpop.permute.xlu0 %3594
        %3596 = vrot.lane.b32.xlu0 %v3554, 126
        %v3597 = vpop.permute.xlu0 %3596
        %3598 = vrot.lane.b32.xlu0 %v3555, 126
        %v3599 = vpop.permute.xlu0 %3598
        %3600 = vrot.lane.b32.xlu0 %v3556, 126
        %v3601 = vpop.permute.xlu0 %3600
        %3602 = vrot.lane.b32.xlu0 %v3557, 126
        %v3603 = vpop.permute.xlu0 %3602
        %3604 = vrot.lane.b32.xlu0 %v3558, 126
        %v3605 = vpop.permute.xlu0 %3604
        %3606 = vrot.lane.b32.xlu0 %v3559, 126
        %v3607 = vpop.permute.xlu0 %3606
        %v3624 = vcombine.low %v3577, %v3585
        %v3625 = vcombine.high %v3577, %v3585
        %v3627 = vunpack.c.l.s4 1983009808
        %v3628 = vunpack.c.0.s8 %v3627
        %v3629 = vlaneseq
        %v3630 = vshrl.u32 %v3629, 7
        %v3631 = vsub.s32 %v3628, %v3630
        %v3632 = vrot.slane %v3624, %v3631
        %v3634 = vunpack.c.l.s4 1983009808
        %v3635 = vunpack.c.0.s8 %v3634
        %v3636 = vlaneseq
        %v3637 = vshrl.u32 %v3636, 7
        %v3638 = vsub.s32 %v3635, %v3637
        %v3639 = vrot.slane %v3625, %v3638
        %v3640 = vcombine.low %v3581, %v3589
        %v3641 = vcombine.high %v3581, %v3589
        %v3643 = vunpack.c.l.s4 1983009808
        %v3644 = vunpack.c.0.s8 %v3643
        %v3645 = vlaneseq
        %v3646 = vshrl.u32 %v3645, 7
        %v3647 = vsub.s32 %v3644, %v3646
        %v3648 = vrot.slane %v3640, %v3647
        %v3650 = vunpack.c.l.s4 1983009808
        %v3651 = vunpack.c.0.s8 %v3650
        %v3652 = vlaneseq
        %v3653 = vshrl.u32 %v3652, 7
        %v3654 = vsub.s32 %v3651, %v3653
        %v3655 = vrot.slane %v3641, %v3654
        %v3656 = vcombine.low %v3593, %v3601
        %v3657 = vcombine.high %v3593, %v3601
        %v3659 = vunpack.c.l.s4 1983009808
        %v3660 = vunpack.c.0.s8 %v3659
        %v3661 = vlaneseq
        %v3662 = vshrl.u32 %v3661, 7
        %v3663 = vsub.s32 %v3660, %v3662
        %v3664 = vrot.slane %v3656, %v3663
        %v3666 = vunpack.c.l.s4 1983009808
        %v3667 = vunpack.c.0.s8 %v3666
        %v3668 = vlaneseq
        %v3669 = vshrl.u32 %v3668, 7
        %v3670 = vsub.s32 %v3667, %v3669
        %v3671 = vrot.slane %v3657, %v3670
        %v3672 = vcombine.low %v3597, %v3605
        %v3673 = vcombine.high %v3597, %v3605
        %v3675 = vunpack.c.l.s4 1983009808
        %v3676 = vunpack.c.0.s8 %v3675
        %v3677 = vlaneseq
        %v3678 = vshrl.u32 %v3677, 7
        %v3679 = vsub.s32 %v3676, %v3678
        %v3680 = vrot.slane %v3672, %v3679
        %v3682 = vunpack.c.l.s4 1983009808
        %v3683 = vunpack.c.0.s8 %v3682
        %v3684 = vlaneseq
        %v3685 = vshrl.u32 %v3684, 7
        %v3686 = vsub.s32 %v3683, %v3685
        %v3687 = vrot.slane %v3673, %v3686
        %v3688 = vcombine.low %v3632, %v3648
        %v3689 = vcombine.high %v3632, %v3648
        %v3691 = vunpack.c.l.s4 1934713408
        %v3692 = vunpack.c.0.s8 %v3691
        %v3693 = vlaneseq
        %v3694 = vshrl.u32 %v3693, 7
        %v3695 = vsub.s32 %v3692, %v3694
        %v3696 = vrot.slane %v3688, %v3695
        %v3698 = vunpack.c.l.s4 1934713408
        %v3699 = vunpack.c.0.s8 %v3698
        %v3700 = vlaneseq
        %v3701 = vshrl.u32 %v3700, 7
        %v3702 = vsub.s32 %v3699, %v3701
        %v3703 = vrot.slane %v3689, %v3702
        %v3704 = vcombine.low %v3639, %v3655
        %v3705 = vcombine.high %v3639, %v3655
        %v3707 = vunpack.c.l.s4 1934713408
        %v3708 = vunpack.c.0.s8 %v3707
        %v3709 = vlaneseq
        %v3710 = vshrl.u32 %v3709, 7
        %v3711 = vsub.s32 %v3708, %v3710
        %v3712 = vrot.slane %v3704, %v3711
        %v3714 = vunpack.c.l.s4 1934713408
        %v3715 = vunpack.c.0.s8 %v3714
        %v3716 = vlaneseq
        %v3717 = vshrl.u32 %v3716, 7
        %v3718 = vsub.s32 %v3715, %v3717
        %v3719 = vrot.slane %v3705, %v3718
        %v3720 = vcombine.low %v3664, %v3680
        %v3721 = vcombine.high %v3664, %v3680
        %v3723 = vunpack.c.l.s4 1934713408
        %v3724 = vunpack.c.0.s8 %v3723
        %v3725 = vlaneseq
        %v3726 = vshrl.u32 %v3725, 7
        %v3727 = vsub.s32 %v3724, %v3726
        %v3728 = vrot.slane %v3720, %v3727
        %v3730 = vunpack.c.l.s4 1934713408
        %v3731 = vunpack.c.0.s8 %v3730
        %v3732 = vlaneseq
        %v3733 = vshrl.u32 %v3732, 7
        %v3734 = vsub.s32 %v3731, %v3733
        %v3735 = vrot.slane %v3721, %v3734
        %v3736 = vcombine.low %v3671, %v3687
        %v3737 = vcombine.high %v3671, %v3687
        %v3739 = vunpack.c.l.s4 1934713408
        %v3740 = vunpack.c.0.s8 %v3739
        %v3741 = vlaneseq
        %v3742 = vshrl.u32 %v3741, 7
        %v3743 = vsub.s32 %v3740, %v3742
        %v3744 = vrot.slane %v3736, %v3743
        %v3746 = vunpack.c.l.s4 1934713408
        %v3747 = vunpack.c.0.s8 %v3746
        %v3748 = vlaneseq
        %v3749 = vshrl.u32 %v3748, 7
        %v3750 = vsub.s32 %v3747, %v3749
        %v3751 = vrot.slane %v3737, %v3750
        %v3752 = vcombine.low %v3696, %v3728
        %v3753 = vcombine.high %v3696, %v3728
        %v3754 = vcombine.low %v3703, %v3735
        %v3755 = vcombine.high %v3703, %v3735
        %v3756 = vcombine.low %v3712, %v3744
        %v3757 = vcombine.high %v3712, %v3744
        %v3758 = vcombine.low %v3719, %v3751
        %v3759 = vcombine.high %v3719, %v3751
        %v3760 = vcombine.low %v3579, %v3587
        %v3761 = vcombine.high %v3579, %v3587
        %v3763 = vunpack.c.l.s4 1983009808
        %v3764 = vunpack.c.0.s8 %v3763
        %v3765 = vlaneseq
        %v3766 = vshrl.u32 %v3765, 7
        %v3767 = vsub.s32 %v3764, %v3766
        %v3768 = vrot.slane %v3760, %v3767
        %v3770 = vunpack.c.l.s4 1983009808
        %v3771 = vunpack.c.0.s8 %v3770
        %v3772 = vlaneseq
        %v3773 = vshrl.u32 %v3772, 7
        %v3774 = vsub.s32 %v3771, %v3773
        %v3775 = vrot.slane %v3761, %v3774
        %v3776 = vcombine.low %v3583, %v3591
        %v3777 = vcombine.high %v3583, %v3591
        %v3779 = vunpack.c.l.s4 1983009808
        %v3780 = vunpack.c.0.s8 %v3779
        %v3781 = vlaneseq
        %v3782 = vshrl.u32 %v3781, 7
        %v3783 = vsub.s32 %v3780, %v3782
        %v3784 = vrot.slane %v3776, %v3783
        %v3786 = vunpack.c.l.s4 1983009808
        %v3787 = vunpack.c.0.s8 %v3786
        %v3788 = vlaneseq
        %v3789 = vshrl.u32 %v3788, 7
        %v3790 = vsub.s32 %v3787, %v3789
        %v3791 = vrot.slane %v3777, %v3790
        %v3792 = vcombine.low %v3595, %v3603
        %v3793 = vcombine.high %v3595, %v3603
        %v3795 = vunpack.c.l.s4 1983009808
        %v3796 = vunpack.c.0.s8 %v3795
        %v3797 = vlaneseq
        %v3798 = vshrl.u32 %v3797, 7
        %v3799 = vsub.s32 %v3796, %v3798
        %v3800 = vrot.slane %v3792, %v3799
        %v3802 = vunpack.c.l.s4 1983009808
        %v3803 = vunpack.c.0.s8 %v3802
        %v3804 = vlaneseq
        %v3805 = vshrl.u32 %v3804, 7
        %v3806 = vsub.s32 %v3803, %v3805
        %v3807 = vrot.slane %v3793, %v3806
        %v3808 = vcombine.low %v3599, %v3607
        %v3809 = vcombine.high %v3599, %v3607
        %v3811 = vunpack.c.l.s4 1983009808
        %v3812 = vunpack.c.0.s8 %v3811
        %v3813 = vlaneseq
        %v3814 = vshrl.u32 %v3813, 7
        %v3815 = vsub.s32 %v3812, %v3814
        %v3816 = vrot.slane %v3808, %v3815
        %v3818 = vunpack.c.l.s4 1983009808
        %v3819 = vunpack.c.0.s8 %v3818
        %v3820 = vlaneseq
        %v3821 = vshrl.u32 %v3820, 7
        %v3822 = vsub.s32 %v3819, %v3821
        %v3823 = vrot.slane %v3809, %v3822
        %v3824 = vcombine.low %v3768, %v3784
        %v3825 = vcombine.high %v3768, %v3784
        %v3827 = vunpack.c.l.s4 1934713408
        %v3828 = vunpack.c.0.s8 %v3827
        %v3829 = vlaneseq
        %v3830 = vshrl.u32 %v3829, 7
        %v3831 = vsub.s32 %v3828, %v3830
        %v3832 = vrot.slane %v3824, %v3831
        %v3834 = vunpack.c.l.s4 1934713408
        %v3835 = vunpack.c.0.s8 %v3834
        %v3836 = vlaneseq
        %v3837 = vshrl.u32 %v3836, 7
        %v3838 = vsub.s32 %v3835, %v3837
        %v3839 = vrot.slane %v3825, %v3838
        %v3840 = vcombine.low %v3775, %v3791
        %v3841 = vcombine.high %v3775, %v3791
        %v3843 = vunpack.c.l.s4 1934713408
        %v3844 = vunpack.c.0.s8 %v3843
        %v3845 = vlaneseq
        %v3846 = vshrl.u32 %v3845, 7
        %v3847 = vsub.s32 %v3844, %v3846
        %v3848 = vrot.slane %v3840, %v3847
        %v3850 = vunpack.c.l.s4 1934713408
        %v3851 = vunpack.c.0.s8 %v3850
        %v3852 = vlaneseq
        %v3853 = vshrl.u32 %v3852, 7
        %v3854 = vsub.s32 %v3851, %v3853
        %v3855 = vrot.slane %v3841, %v3854
        %v3856 = vcombine.low %v3800, %v3816
        %v3857 = vcombine.high %v3800, %v3816
        %v3859 = vunpack.c.l.s4 1934713408
        %v3860 = vunpack.c.0.s8 %v3859
        %v3861 = vlaneseq
        %v3862 = vshrl.u32 %v3861, 7
        %v3863 = vsub.s32 %v3860, %v3862
        %v3864 = vrot.slane %v3856, %v3863
        %v3866 = vunpack.c.l.s4 1934713408
        %v3867 = vunpack.c.0.s8 %v3866
        %v3868 = vlaneseq
        %v3869 = vshrl.u32 %v3868, 7
        %v3870 = vsub.s32 %v3867, %v3869
        %v3871 = vrot.slane %v3857, %v3870
        %v3872 = vcombine.low %v3807, %v3823
        %v3873 = vcombine.high %v3807, %v3823
        %v3875 = vunpack.c.l.s4 1934713408
        %v3876 = vunpack.c.0.s8 %v3875
        %v3877 = vlaneseq
        %v3878 = vshrl.u32 %v3877, 7
        %v3879 = vsub.s32 %v3876, %v3878
        %v3880 = vrot.slane %v3872, %v3879
        %v3882 = vunpack.c.l.s4 1934713408
        %v3883 = vunpack.c.0.s8 %v3882
        %v3884 = vlaneseq
        %v3885 = vshrl.u32 %v3884, 7
        %v3886 = vsub.s32 %v3883, %v3885
        %v3887 = vrot.slane %v3873, %v3886
        %v3888 = vcombine.low %v3832, %v3864
        %v3889 = vcombine.high %v3832, %v3864
        %v3890 = vcombine.low %v3839, %v3871
        %v3891 = vcombine.high %v3839, %v3871
        %v3892 = vcombine.low %v3848, %v3880
        %v3893 = vcombine.high %v3848, %v3880
        %v3894 = vcombine.low %v3855, %v3887
        %v3895 = vcombine.high %v3855, %v3887
        %3897 = vrot.lane.b32.xlu0 %v3753, 16
        %v3898 = vpop.permute.xlu0 %3897
        %3901 = vrot.lane.b32.xlu0 %v3754, 32
        %v3902 = vpop.permute.xlu0 %3901
        %3905 = vrot.lane.b32.xlu0 %v3755, 48
        %v3906 = vpop.permute.xlu0 %3905
        %3909 = vrot.lane.b32.xlu0 %v3756, 64
        %v3910 = vpop.permute.xlu0 %3909
        %3913 = vrot.lane.b32.xlu0 %v3757, 80
        %v3914 = vpop.permute.xlu0 %3913
        %3917 = vrot.lane.b32.xlu0 %v3758, 96
        %v3918 = vpop.permute.xlu0 %3917
        %3921 = vrot.lane.b32.xlu0 %v3759, 112
        %v3922 = vpop.permute.xlu0 %3921
        %3925 = vrot.lane.b32.xlu0 %v3889, 16
        %v3926 = vpop.permute.xlu0 %3925
        %3929 = vrot.lane.b32.xlu0 %v3890, 32
        %v3930 = vpop.permute.xlu0 %3929
        %3933 = vrot.lane.b32.xlu0 %v3891, 48
        %v3934 = vpop.permute.xlu0 %3933
        %3937 = vrot.lane.b32.xlu0 %v3892, 64
        %v3938 = vpop.permute.xlu0 %3937
        %3941 = vrot.lane.b32.xlu0 %v3893, 80
        %v3942 = vpop.permute.xlu0 %3941
        %3945 = vrot.lane.b32.xlu0 %v3894, 96
        %v3946 = vpop.permute.xlu0 %3945
        %3949 = vrot.lane.b32.xlu0 %v3895, 112
        %v3950 = vpop.permute.xlu0 %3949
        %v3952 = vsel %vm681, %v3752, %v3898
        %v3953 = vsel %vm683, %v3952, %v3902
        %v3954 = vsel %vm685, %v3953, %v3906
        %v3955 = vsel %vm687, %v3954, %v3910
        %v3956 = vsel %vm689, %v3955, %v3914
        %v3957 = vsel %vm691, %v3956, %v3918
        %v3958 = vsel %vm693, %v3957, %v3922
        %v3959 = vsel %vm681, %v3888, %v3926
        %v3960 = vsel %vm683, %v3959, %v3930
        %v3961 = vsel %vm685, %v3960, %v3934
        %v3962 = vsel %vm687, %v3961, %v3938
        %v3963 = vsel %vm689, %v3962, %v3942
        %v3964 = vsel %vm691, %v3963, %v3946
        %v3965 = vsel %vm693, %v3964, %v3950
        %3966 = vst [vmem:[#allocation3 + $0x80] sm:$0xff] %v3958
        %3967 = vst [vmem:[#allocation3 + $0x88] sm:$0xff] %v3965
        %v3968 = vld [vmem:[#allocation3] sm:$0xff]
        %v3969 = vld [vmem:[#allocation3 + $0x8] sm:$0xff]
        %v3970 = vld [vmem:[#allocation3 + $0x10] sm:$0xff]
        %v3971 = vld [vmem:[#allocation3 + $0x18] sm:$0xff]
        %v3972 = vld [vmem:[#allocation3 + $0x20] sm:$0xff]
        %v3973 = vld [vmem:[#allocation3 + $0x28] sm:$0xff]
        %v3974 = vld [vmem:[#allocation3 + $0x30] sm:$0xff]
        %v3975 = vld [vmem:[#allocation3 + $0x38] sm:$0xff]
        %v3976 = vld [vmem:[#allocation3 + $0x40] sm:$0xff]
        %v3977 = vld [vmem:[#allocation3 + $0x48] sm:$0xff]
        %v3978 = vld [vmem:[#allocation3 + $0x50] sm:$0xff]
        %v3979 = vld [vmem:[#allocation3 + $0x58] sm:$0xff]
        %v3980 = vld [vmem:[#allocation3 + $0x60] sm:$0xff]
        %v3981 = vld [vmem:[#allocation3 + $0x68] sm:$0xff]
        %v3982 = vld [vmem:[#allocation3 + $0x70] sm:$0xff]
        %v3983 = vld [vmem:[#allocation3 + $0x78] sm:$0xff]
        %v3984 = vld [vmem:[#allocation3 + $0x80] sm:$0xff]
        %v3985 = vld [vmem:[#allocation3 + $0x88] sm:$0xff]
        %v3986 = vld [vmem:[%s1] sm:$0xff]
        %v3987 = vld [vmem:[%s1 + $0x8] sm:$0xff]
        %v3988 = vld [vmem:[%s2] sm:$0xff]
        %v3989 = vld [vmem:[%s2 + $0x8] sm:$0xff]
        %3991 = vset.pattern.permute.xlu0 0
        %3992 = vperm.xlu0 %3991, %v3988
        %v3993 = vpop.permute.xlu0 %3992
        %3996 = vset.pattern.permute.xlu0 0
        %3997 = vperm.xlu0 %3996, %v3989
        %v3998 = vpop.permute.xlu0 %3997
        %vm4000 = vcmask 588800
        %v4002 = vsel %vm4000, %v3986, 0
        %v4005 = vsel %vm4000, %v3987, 0
        %4007 = vmatprep.subr.mxu0 0.0
        %4008 = vmatpush1.msra.mxu0 0.0
        %4009 = vmatprep.subr.mxu0 0.0
        %4010 = vmatpush1.msra.mxu0 0.0
        %4011 = vmatprep.subr.mxu0 0.0
        %4012 = vmatpush1.msra.mxu0 0.0
        %4013 = vmatprep.subr.mxu0 0.0
        %4014 = vmatpush1.msra.mxu0 0.0
        %4015 = vmatprep.subr.mxu0 0.0
        %4016 = vmatpush1.msra.mxu0 0.0
        %4017 = vmatprep.subr.mxu0 0.0
        %4018 = vmatpush1.msra.mxu0 0.0
        %4019 = vmatprep.subr.mxu0 0.0
        %4020 = vmatpush1.msra.mxu0 0.0
        %4021 = vmatprep.subr.mxu0 %v3985
        %4022 = vmatpush1.msra.mxu0 %v3984
        %4023 = vmatprep.subr.mxu0 %v3983
        %4024 = vmatpush1.msra.mxu0 %v3982
        %4025 = vmatprep.subr.mxu0 %v3981
        %4026 = vmatpush1.msra.mxu0 %v3980
        %4027 = vmatprep.subr.mxu0 %v3979
        %4028 = vmatpush1.msra.mxu0 %v3978
        %4029 = vmatprep.subr.mxu0 %v3977
        %4030 = vmatpush1.msra.mxu0 %v3976
        %4031 = vmatprep.subr.mxu0 %v3975
        %4032 = vmatpush1.msra.mxu0 %v3974
        %4033 = vmatprep.subr.mxu0 %v3973
        %4034 = vmatpush1.msra.mxu0 %v3972
        %4035 = vmatprep.subr.mxu0 %v3971
        %4036 = vmatpush1.msra.mxu0 %v3970
        %4037 = vmatprep.subr.mxu0 %v3969
        %4038 = vmatpush1.msra.mxu0 %v3968
        %4039 = vmatprep.subr.mxu0 0.0
        %4040 = vmatpush2.msra.mxu0 0.0
        %4041 = vmatprep.subr.mxu0 0.0
        %4042 = vmatpush2.msra.mxu0 0.0
        %4043 = vmatprep.subr.mxu0 0.0
        %4044 = vmatpush2.msra.mxu0 0.0
        %4045 = vmatprep.subr.mxu0 0.0
        %4046 = vmatpush2.msra.mxu0 0.0
        %4047 = vmatprep.subr.mxu0 0.0
        %4048 = vmatpush2.msra.mxu0 0.0
        %4049 = vmatprep.subr.mxu0 0.0
        %4050 = vmatpush2.msra.mxu0 0.0
        %4051 = vmatprep.subr.mxu0 0.0
        %4052 = vmatpush2.msra.mxu0 0.0
        %4053 = vmatprep.subr.mxu0 0.0
        %4054 = vmatpush2.msra.mxu0 0.0
        %4055 = vmatprep.subr.mxu0 0.0
        %4056 = vmatpush2.msra.mxu0 0.0
        %4057 = vmatprep.subr.mxu0 0.0
        %4058 = vmatpush2.msra.mxu0 0.0
        %4059 = vmatprep.subr.mxu0 0.0
        %4060 = vmatpush2.msra.mxu0 0.0
        %4061 = vmatprep.subr.mxu0 0.0
        %4062 = vmatpush2.msra.mxu0 0.0
        %4063 = vmatprep.subr.mxu0 0.0
        %4064 = vmatpush2.msra.mxu0 0.0
        %4065 = vmatprep.subr.mxu0 0.0
        %4066 = vmatpush2.msra.mxu0 0.0
        %4067 = vmatprep.subr.mxu0 0.0
        %4068 = vmatpush2.msra.mxu0 0.0
        %4069 = vmatprep.subr.mxu0 0.0
        %4070 = vmatpush2.msra.mxu0 0.0
        %4071 = vmatprep.mubr.f32.mxu0 0.0
        %4072 = vmatmul.mubr.f32.gmra.mxu0 %v4002
        %v4073 = vpop.f32.mrf.mxu0
        %v4074 = vadd.f32 %v3993, %v4073
        %v4075 = vpop.f32.mrf.mxu0
        %v4076 = vadd.f32 %v3993, %v4075
        %4077 = vmatprep.mubr.f32.mxu0 0.0
        %4078 = vmatmul.mubr.f32.gmra.mxu0 %v4005
        %v4079 = vpop.f32.mrf.mxu0
        %v4080 = vadd.f32 %v3998, %v4079
        %v4081 = vpop.f32.mrf.mxu0
        %v4082 = vadd.f32 %v3998, %v4081
        %4083 = vdwg.mxu0
        %v4084 = vmax.f32 %v4074, 0.0
        %v4085 = vmax.f32 %v4076, 0.0
        %v4086 = vmax.f32 %v4080, 0.0
        %v4087 = vmax.f32 %v4082, 0.0
        %4088 = vst [vmem:[%s188] sm:$0xff] %v4084
        %4089 = vst [vmem:[%s188 + $0x8] sm:$0xff] %v4085
        %4090 = vst [vmem:[%s188 + $0x10] sm:$0xff] %v4086
        %4091 = vst [vmem:[%s188 + $0x18] sm:$0xff] %v4087
        %s4092 = sand.u32 %s96, 1
        %s4093 = scalar_lea.sflag [#allocation6], %s4092
        %s4094 = sand.u32 %s96, 1
        %s4095 = smul.addr %s4094, 32
        %s4096 = scalar_lea.vmem [#allocation7], %s4095
        // Predicated region
        $region37: #{tpu_custom_call.1} parent=31 // pred_check
          %p4097 = pneg %p106
        $region38: #{tpu_custom_call.1} parent=31 // pred_check_branch
          %4099 = sbr.rel (%p4097) target = $region40
        $region39: #{tpu_custom_call.1} parent=31 // pred_region
          %s4101 = ssub.s32 512, 512
          %4102 = vsyncadd %s4093, %s4101
          %s4103 = smul.addr %s20, 4
          %s4104 = smul.addr %s4103, 128
          %s4105 = scalar_lea.hbm %s3, %s4104
          %s4106 = sshll.u32 %s4096, 4
          %s4107 = int_to_ptr.vmem [resolvable:$true] %s4106
          %4112 = dma.vmem_to_hbm [thread:$0]  %s4107, 512, %s4105, %s4093, 256, 256, 16
        $region40: #{tpu_custom_call.1} parent=31 // pred_fallthru
          _
      $region32: #{tpu_custom_call.1} parent=5 // pred_fallthru
        _
      %p4113 = scmp.le.s32.totalorder 2, %s15
      // Predicated region
      $region41: #{tpu_custom_call.1} parent=5 // pred_check
        %p4114 = pneg %p4113
      $region42: #{tpu_custom_call.1} parent=5 // pred_check_branch
        %4116 = sbr.rel (%p4114) target = $region44
      $region43: #{tpu_custom_call.1} parent=5 // pred_region
        %s4117 = ssub.s32 %s15, 2
        // Predicated region
        $region45: #{tpu_custom_call.1} parent=43 // pred_check
          %p4118 = pneg %p112
        $region46: #{tpu_custom_call.1} parent=43 // pred_check_branch
          %4120 = sbr.rel (%p4118) target = $region48
        $region47: #{tpu_custom_call.1} parent=43 // pred_region
          %s4121 = sand.u32 %s97, 1
          %s4122 = scalar_lea.sflag [#allocation6], %s4121
          %s4123 = sand.u32 %s97, 1
          %s4124 = smul.addr %s4123, 32
          %s4125 = scalar_lea.vmem [#allocation7], %s4124
          %4126 = dma.done %s4122, 512
        $region48: #{tpu_custom_call.1} parent=43 // pred_fallthru
          _
      $region44: #{tpu_custom_call.1} parent=5 // pred_fallthru
        _
    $region6: #{tpu_custom_call.1} parent=1 // loop_footer
      %s19 = sadd.s32 1, %s15
    $region7: #{tpu_custom_call.1} parent=1 // loop_footer_branch
      %14 = sbr.rel target = $region3
    $region8: #{tpu_custom_call.1} parent=1 // loop_exit
      _
    %4127 = vsyncpa [#allocation5], 1
    %s4128 = scalar_lea.sflag [#allocation5], 1
    %4129 = vsyncpa %s4128, 1
    %4130 = vsyncpa [#allocation6], 1
    %s4131 = scalar_lea.sflag [#allocation6], 1
    %4132 = vsyncpa %s4131, 1

</llo_original>
